<compile_context>
chip_gen: v6e
topology: v6e:2x2x1
jax: 0.10.0
libtpu: 0.0.40
codegen_flags: <defaults>
</compile_context>

<pallas_src>
import functools

import jax
import jax.numpy as jnp
import numpy as np
from jax.experimental import pallas as pl
from jax.experimental.pallas import tpu as pltpu


# ---------------------------------------------------------------------------
# Fused 2-layer wavefront LSTM kernel (gridless, fully VMEM-resident)
# ---------------------------------------------------------------------------
def _fused_lstm2_wavefront_kernel(x_ref, wih0_ref, whh0_ref, b0_ref,
                                  wih1_ref, whh1_ref, b1_ref, y_ref,
                                  *, seq_len, batch_p):
    T, Bp = seq_len, batch_p
    H = whh0_ref.shape[0]

    # Hoist all weight loads / bias broadcast out of the unrolled recurrence.
    whh0 = whh0_ref[...]                                    # (H, 4H)
    wih1 = wih1_ref[...]                                    # (H, 4H)
    whh1 = whh1_ref[...]                                    # (H, 4H)
    b1 = jnp.broadcast_to(b1_ref[...], (Bp, 4 * H))         # (Bp, 4H)

    # Layer-0 input projection for the whole sequence in one batched matmul
    # (off the serial critical path), bias fused.
    pre0 = jnp.dot(x_ref[...], wih0_ref[...],
                   preferred_element_type=jnp.float32) + b0_ref[...]

    def cell(gates, c):
        # Full-gate-width activations: 2 EUP pushes on the (Bp,4H) tile instead
        # of 4 partial-width ones; slices are static.
        sig = jax.nn.sigmoid(gates)
        tan = jnp.tanh(gates)
        i = sig[:, 0 * H:1 * H]
        f = sig[:, 1 * H:2 * H]
        o = sig[:, 3 * H:4 * H]
        g = tan[:, 2 * H:3 * H]
        c_new = f * c + i * g
        h_new = o * jnp.tanh(c_new)
        return h_new, c_new

    def step0(t, h, c):
        gates = pre0[t * Bp:(t + 1) * Bp, :] + jnp.dot(
            h, whh0, preferred_element_type=jnp.float32)
        return cell(gates, c)

    def step1(h_below, h, c):
        # Per-step input projection on the layer-0 hidden state; the two dots
        # have no mutual dependence and overlap in the MXU pipeline.
        gates = (b1
                 + jnp.dot(h_below, wih1, preferred_element_type=jnp.float32)
                 + jnp.dot(h, whh1, preferred_element_type=jnp.float32))
        return cell(gates, c)

    # Initial state h0 = c0 = 0 (PyTorch default when no (h0, c0) is given).
    zeros = jnp.zeros((Bp, H), jnp.float32)
    h0, c0 = zeros, zeros
    h1, c1 = zeros, zeros
    outs = []

    # Wavefront schedule over the fully unrolled (static, T=16) time axis:
    # round t computes layer-0 step t and layer-1 step t-1.
    h0, c0 = step0(0, h0, c0)
    for t in range(1, T):
        h0_prev = h0
        h0, c0 = step0(t, h0, c0)           # needs h0_{t-1}
        h1, c1 = step1(h0_prev, h1, c1)     # needs h0_{t-1}, h1_{t-2}
        outs.append(h1)                     # h1_{t-1}
    h1, c1 = step1(h0, h1, c1)              # final layer-1 step (t = T-1)
    outs.append(h1)

    # TODO(synk): nn.LSTM inter-layer dropout (p=0.2) is train-time only; the
    # inference forward path has no dropout, so none is applied here.

    # Single lane-dense, batch-major store: y[b, t*H:(t+1)*H] = h1_t[b].
    y_ref[...] = jnp.concatenate(outs, axis=1).astype(y_ref.dtype)


def lstm2_fused_pallas(x2d, p0, p1, *, seq_len, batch_p):
    """Fused 2-layer LSTM.

    x2d: (T*Bp, D_in) time-major-flattened, batch padded to Bp (row = t*Bp + b)
    p*:  dicts with 'w_ih_t' (D_in/H, 4H), 'w_hh_t' (H, 4H), 'b' (1, 4H)
    returns (Bp, T*H) float32, batch-major (row b = [h_0[b], ..., h_{T-1}[b]]).
    """
    H = p0["w_hh_t"].shape[0]
    kernel = functools.partial(_fused_lstm2_wavefront_kernel,
                               seq_len=seq_len, batch_p=batch_p)
    vmem_spec = pl.BlockSpec(memory_space=pltpu.MemorySpace.VMEM)
    return pl.pallas_call(
        kernel,
        out_shape=jax.ShapeDtypeStruct((batch_p, seq_len * H), jnp.float32),
        in_specs=[vmem_spec] * 7,
        out_specs=vmem_spec,
    )(x2d, p0["w_ih_t"], p0["w_hh_t"], p0["b"],
      p1["w_ih_t"], p1["w_hh_t"], p1["b"])


# ---------------------------------------------------------------------------
# Module-level glue (matches recurrent_module.forward / get_states)
# ---------------------------------------------------------------------------
def get_states(output, num_states, states_type):
    if states_type == "last":
        return output[:, -num_states:, :]
    elif states_type == "first":
        return output[:, :num_states, :]
    elif states_type == "last_and_first":
        return jnp.concatenate(
            (output[:, : num_states // 2, :], output[:, -(num_states // 2):, :]), axis=1
        )
    elif states_type == "middle":
        N = output.shape[1]
        return output[:, N // 2 - num_states // 2: N // 2 + num_states // 2, :]
    elif states_type == "alternating":
        N = output.shape[1]
        return output[:, :: N // num_states, :]
    raise ValueError(states_type)


@functools.partial(jax.jit, static_argnames=("num_states", "states_type"))
def recurrent_module_forward(x, params, num_states=10, states_type="last"):
    """x: (B, T, input_size) batch-first, like the PyTorch module."""
    assert len(params) == 2, "fused kernel implements the module's num_layers=2"
    B, T, D = x.shape
    H = params[0]["w_hh_t"].shape[0]
    # Pad batch to a full sublane tile so every per-step slab is one (8,128)
    # aligned vreg tile inside the kernel (pad rows are zero and sliced off).
    Bp = max(8, ((B + 7) // 8) * 8)
    x_pad = jnp.pad(x.astype(jnp.float32), ((0, Bp - B), (0, 0), (0, 0)))
    # batch-first -> time-major, flattened to (T*Bp, D) (row = t*Bp + b).
    x2d = jnp.transpose(x_pad, (1, 0, 2)).reshape(T * Bp, D)
    y = lstm2_fused_pallas(x2d, params[0], params[1], seq_len=T, batch_p=Bp)
    # (Bp, T*H) batch-major -> drop padding, view as (B, T, H) batch-first.
    out = y[:B].reshape(B, T, H)
    states = get_states(out, num_states, states_type)
    return states.reshape(1, num_states, -1)


def init_lstm_params(key, input_size, hidden_size, num_layers):
    """PyTorch-style uniform(-1/sqrt(H), 1/sqrt(H)) init, deterministic."""
    k = 1.0 / np.sqrt(hidden_size)
    params = []
    for layer in range(num_layers):
        d_in = input_size if layer == 0 else hidden_size
        key, k1, k2, k3, k4 = jax.random.split(key, 5)
        w_ih = jax.random.uniform(k1, (4 * hidden_size, d_in), jnp.float32, -k, k)
        w_hh = jax.random.uniform(k2, (4 * hidden_size, hidden_size), jnp.float32, -k, k)
        b_ih = jax.random.uniform(k3, (4 * hidden_size,), jnp.float32, -k, k)
        b_hh = jax.random.uniform(k4, (4 * hidden_size,), jnp.float32, -k, k)
        params.append(
            dict(
                w_ih_t=w_ih.T,                      # (D_in, 4H)
                w_hh_t=w_hh.T,                      # (H, 4H)
                b=(b_ih + b_hh).reshape(1, -1),     # (1, 4H)
            )
        )
    return params


# ---------------------------------------------------------------------------
# Pure-JAX reference LSTM for correctness check
# ---------------------------------------------------------------------------
def lstm_layer_ref(x_tbd, w_ih_t, w_hh_t, bias):
    T, B, _ = x_tbd.shape
    H = w_hh_t.shape[0]

    def step(carry, x_t):
        h, c = carry
        gates = x_t @ w_ih_t + h @ w_hh_t + bias
        i = jax.nn.sigmoid(gates[:, 0 * H:1 * H])
        f = jax.nn.sigmoid(gates[:, 1 * H:2 * H])
        g = jnp.tanh(gates[:, 2 * H:3 * H])
        o = jax.nn.sigmoid(gates[:, 3 * H:4 * H])
        c = f * c + i * g
        h = o * jnp.tanh(c)
        return (h, c), h

    init = (jnp.zeros((B, H), jnp.float32), jnp.zeros((B, H), jnp.float32))
    _, ys = jax.lax.scan(step, init, x_tbd)
    return ys


def recurrent_module_forward_ref(x, params, num_states=10, states_type="last"):
    h = jnp.transpose(x, (1, 0, 2)).astype(jnp.float32)
    for layer in params:
        h = lstm_layer_ref(h, layer["w_ih_t"], layer["w_hh_t"], layer["b"])
    out = jnp.transpose(h, (1, 0, 2))
    states = get_states(out, num_states, states_type)
    return states.reshape(1, num_states, -1)


# ---------------------------------------------------------------------------
if __name__ == "__main__":
    # Small shapes consistent with the module: batch=2, seq=16, input=32, hidden=32.
    batch, seq, input_size, hidden_size = 2, 16, 32, 32
    num_layers, num_states, states_type = 2, 10, "last"

    key = jax.random.PRNGKey(0)
    key_x, key_p = jax.random.split(key)
    x = jax.random.normal(key_x, (batch, seq, input_size), dtype=jnp.float32)
    params = init_lstm_params(key_p, input_size, hidden_size, num_layers)

    out = recurrent_module_forward(
        x, params, num_states=num_states, states_type=states_type
    )
    out = jax.block_until_ready(out)

    assert out.shape == (1, num_states, batch * hidden_size), out.shape

    ref = recurrent_module_forward_ref(
        x, params, num_states=num_states, states_type=states_type
    )
    np.testing.assert_allclose(np.asarray(out), np.asarray(ref), rtol=1e-5, atol=1e-5)

    print("KERNEL_OK")
</pallas_src>

<mosaic_0001>
module attributes {stable_mosaic.version = 11 : i64} {
  func.func @_fused_lstm2_wavefront_kernel(%arg0: memref<128x32xf32, #tpu.memory_space<vmem>>, %arg1: memref<32x128xf32, #tpu.memory_space<vmem>>, %arg2: memref<32x128xf32, #tpu.memory_space<vmem>>, %arg3: memref<1x128xf32, #tpu.memory_space<vmem>>, %arg4: memref<32x128xf32, #tpu.memory_space<vmem>>, %arg5: memref<32x128xf32, #tpu.memory_space<vmem>>, %arg6: memref<1x128xf32, #tpu.memory_space<vmem>>, %arg7: memref<8x512xf32, #tpu.memory_space<vmem>>) attributes {dimension_semantics = [], scalar_prefetch = 0 : i64, scratch_operands = 0 : i64, tpu.core_type = #tpu.core_type<tc>} {
    %c0 = arith.constant 0 : index
    %c0_0 = arith.constant 0 : index
    %0 = vector.load %arg2[%c0, %c0_0] : memref<32x128xf32, #tpu.memory_space<vmem>>, vector<32x128xf32>
    %c0_1 = arith.constant 0 : index
    %c0_2 = arith.constant 0 : index
    %1 = vector.load %arg4[%c0_1, %c0_2] : memref<32x128xf32, #tpu.memory_space<vmem>>, vector<32x128xf32>
    %c0_3 = arith.constant 0 : index
    %c0_4 = arith.constant 0 : index
    %2 = vector.load %arg5[%c0_3, %c0_4] : memref<32x128xf32, #tpu.memory_space<vmem>>, vector<32x128xf32>
    %c0_5 = arith.constant 0 : index
    %c0_6 = arith.constant 0 : index
    %3 = vector.load %arg6[%c0_5, %c0_6] : memref<1x128xf32, #tpu.memory_space<vmem>>, vector<1x128xf32>
    %4 = vector.shape_cast %3 : vector<1x128xf32> to vector<1x128xf32>
    %5 = vector.broadcast %4 : vector<1x128xf32> to vector<8x128xf32>
    %c0_7 = arith.constant 0 : index
    %c0_8 = arith.constant 0 : index
    %6 = vector.load %arg0[%c0_7, %c0_8] : memref<128x32xf32, #tpu.memory_space<vmem>>, vector<128x32xf32>
    %c0_9 = arith.constant 0 : index
    %c0_10 = arith.constant 0 : index
    %7 = vector.load %arg1[%c0_9, %c0_10] : memref<32x128xf32, #tpu.memory_space<vmem>>, vector<32x128xf32>
    %cst = arith.constant dense<0.000000e+00> : vector<128x128xf32>
    %8 = tpu.matmul %6, %7, %cst {dimension_numbers = #tpu.dot_dimension_numbers<[1], [0], [0], [1], [0, 0, 1, 1], [], []>} : vector<128x32xf32>, vector<32x128xf32>, vector<128x128xf32> -> vector<128x128xf32>
    %c0_11 = arith.constant 0 : index
    %c0_12 = arith.constant 0 : index
    %9 = vector.load %arg3[%c0_11, %c0_12] : memref<1x128xf32, #tpu.memory_space<vmem>>, vector<1x128xf32>
    %10 = vector.broadcast %9 : vector<1x128xf32> to vector<128x128xf32>
    %11 = arith.addf %8, %10 : vector<128x128xf32>
    %cst_13 = arith.constant 0.000000e+00 : f32
    %12 = vector.broadcast %cst_13 : f32 to vector<8x32xf32>
    %13 = vector.extract_strided_slice %11 {offsets = [0, 0], sizes = [8, 128], strides = [1, 1]} : vector<128x128xf32> to vector<8x128xf32>
    %cst_14 = arith.constant dense<0.000000e+00> : vector<8x128xf32>
    %14 = tpu.matmul %12, %0, %cst_14 {dimension_numbers = #tpu.dot_dimension_numbers<[1], [0], [0], [1], [0, 0, 1, 1], [], []>} : vector<8x32xf32>, vector<32x128xf32>, vector<8x128xf32> -> vector<8x128xf32>
    %15 = arith.addf %13, %14 : vector<8x128xf32>
    %16 = arith.negf %15 : vector<8x128xf32>
    %17 = math.exp %16 : vector<8x128xf32>
    %cst_15 = arith.constant 1.000000e+00 : f32
    %18 = vector.broadcast %cst_15 : f32 to vector<8x128xf32>
    %19 = arith.addf %18, %17 : vector<8x128xf32>
    %20 = arith.divf %18, %19 : vector<8x128xf32>
    %21 = math.tanh %15 : vector<8x128xf32>
    %22 = vector.extract_strided_slice %20 {offsets = [0, 0], sizes = [8, 32], strides = [1, 1]} : vector<8x128xf32> to vector<8x32xf32>
    %23 = vector.extract_strided_slice %20 {offsets = [0, 32], sizes = [8, 32], strides = [1, 1]} : vector<8x128xf32> to vector<8x32xf32>
    %24 = vector.extract_strided_slice %20 {offsets = [0, 96], sizes = [8, 32], strides = [1, 1]} : vector<8x128xf32> to vector<8x32xf32>
    %25 = vector.extract_strided_slice %21 {offsets = [0, 64], sizes = [8, 32], strides = [1, 1]} : vector<8x128xf32> to vector<8x32xf32>
    %26 = arith.mulf %23, %12 : vector<8x32xf32>
    %27 = arith.mulf %22, %25 : vector<8x32xf32>
    %28 = arith.addf %26, %27 : vector<8x32xf32>
    %29 = math.tanh %28 : vector<8x32xf32>
    %30 = arith.mulf %24, %29 : vector<8x32xf32>
    %31 = vector.extract_strided_slice %11 {offsets = [8, 0], sizes = [8, 128], strides = [1, 1]} : vector<128x128xf32> to vector<8x128xf32>
    %cst_16 = arith.constant dense<0.000000e+00> : vector<8x128xf32>
    %32 = tpu.matmul %30, %0, %cst_16 {dimension_numbers = #tpu.dot_dimension_numbers<[1], [0], [0], [1], [0, 0, 1, 1], [], []>} : vector<8x32xf32>, vector<32x128xf32>, vector<8x128xf32> -> vector<8x128xf32>
    %33 = arith.addf %31, %32 : vector<8x128xf32>
    %34 = arith.negf %33 : vector<8x128xf32>
    %35 = math.exp %34 : vector<8x128xf32>
    %cst_17 = arith.constant 1.000000e+00 : f32
    %36 = vector.broadcast %cst_17 : f32 to vector<8x128xf32>
    %37 = arith.addf %36, %35 : vector<8x128xf32>
    %38 = arith.divf %36, %37 : vector<8x128xf32>
    %39 = math.tanh %33 : vector<8x128xf32>
    %40 = vector.extract_strided_slice %38 {offsets = [0, 0], sizes = [8, 32], strides = [1, 1]} : vector<8x128xf32> to vector<8x32xf32>
    %41 = vector.extract_strided_slice %38 {offsets = [0, 32], sizes = [8, 32], strides = [1, 1]} : vector<8x128xf32> to vector<8x32xf32>
    %42 = vector.extract_strided_slice %38 {offsets = [0, 96], sizes = [8, 32], strides = [1, 1]} : vector<8x128xf32> to vector<8x32xf32>
    %43 = vector.extract_strided_slice %39 {offsets = [0, 64], sizes = [8, 32], strides = [1, 1]} : vector<8x128xf32> to vector<8x32xf32>
    %44 = arith.mulf %41, %28 : vector<8x32xf32>
    %45 = arith.mulf %40, %43 : vector<8x32xf32>
    %46 = arith.addf %44, %45 : vector<8x32xf32>
    %47 = math.tanh %46 : vector<8x32xf32>
    %48 = arith.mulf %42, %47 : vector<8x32xf32>
    %cst_18 = arith.constant dense<0.000000e+00> : vector<8x128xf32>
    %49 = tpu.matmul %30, %1, %cst_18 {dimension_numbers = #tpu.dot_dimension_numbers<[1], [0], [0], [1], [0, 0, 1, 1], [], []>} : vector<8x32xf32>, vector<32x128xf32>, vector<8x128xf32> -> vector<8x128xf32>
    %50 = arith.addf %5, %49 : vector<8x128xf32>
    %cst_19 = arith.constant dense<0.000000e+00> : vector<8x128xf32>
    %51 = tpu.matmul %12, %2, %cst_19 {dimension_numbers = #tpu.dot_dimension_numbers<[1], [0], [0], [1], [0, 0, 1, 1], [], []>} : vector<8x32xf32>, vector<32x128xf32>, vector<8x128xf32> -> vector<8x128xf32>
    %52 = arith.addf %50, %51 : vector<8x128xf32>
    %53 = arith.negf %52 : vector<8x128xf32>
    %54 = math.exp %53 : vector<8x128xf32>
    %cst_20 = arith.constant 1.000000e+00 : f32
    %55 = vector.broadcast %cst_20 : f32 to vector<8x128xf32>
    %56 = arith.addf %55, %54 : vector<8x128xf32>
    %57 = arith.divf %55, %56 : vector<8x128xf32>
    %58 = math.tanh %52 : vector<8x128xf32>
    %59 = vector.extract_strided_slice %57 {offsets = [0, 0], sizes = [8, 32], strides = [1, 1]} : vector<8x128xf32> to vector<8x32xf32>
    %60 = vector.extract_strided_slice %57 {offsets = [0, 32], sizes = [8, 32], strides = [1, 1]} : vector<8x128xf32> to vector<8x32xf32>
    %61 = vector.extract_strided_slice %57 {offsets = [0, 96], sizes = [8, 32], strides = [1, 1]} : vector<8x128xf32> to vector<8x32xf32>
    %62 = vector.extract_strided_slice %58 {offsets = [0, 64], sizes = [8, 32], strides = [1, 1]} : vector<8x128xf32> to vector<8x32xf32>
    %63 = arith.mulf %60, %12 : vector<8x32xf32>
    %64 = arith.mulf %59, %62 : vector<8x32xf32>
    %65 = arith.addf %63, %64 : vector<8x32xf32>
    %66 = math.tanh %65 : vector<8x32xf32>
    %67 = arith.mulf %61, %66 : vector<8x32xf32>
    %68 = vector.extract_strided_slice %11 {offsets = [16, 0], sizes = [8, 128], strides = [1, 1]} : vector<128x128xf32> to vector<8x128xf32>
    %cst_21 = arith.constant dense<0.000000e+00> : vector<8x128xf32>
    %69 = tpu.matmul %48, %0, %cst_21 {dimension_numbers = #tpu.dot_dimension_numbers<[1], [0], [0], [1], [0, 0, 1, 1], [], []>} : vector<8x32xf32>, vector<32x128xf32>, vector<8x128xf32> -> vector<8x128xf32>
    %70 = arith.addf %68, %69 : vector<8x128xf32>
    %71 = arith.negf %70 : vector<8x128xf32>
    %72 = math.exp %71 : vector<8x128xf32>
    %cst_22 = arith.constant 1.000000e+00 : f32
    %73 = vector.broadcast %cst_22 : f32 to vector<8x128xf32>
    %74 = arith.addf %73, %72 : vector<8x128xf32>
    %75 = arith.divf %73, %74 : vector<8x128xf32>
    %76 = math.tanh %70 : vector<8x128xf32>
    %77 = vector.extract_strided_slice %75 {offsets = [0, 0], sizes = [8, 32], strides = [1, 1]} : vector<8x128xf32> to vector<8x32xf32>
    %78 = vector.extract_strided_slice %75 {offsets = [0, 32], sizes = [8, 32], strides = [1, 1]} : vector<8x128xf32> to vector<8x32xf32>
    %79 = vector.extract_strided_slice %75 {offsets = [0, 96], sizes = [8, 32], strides = [1, 1]} : vector<8x128xf32> to vector<8x32xf32>
    %80 = vector.extract_strided_slice %76 {offsets = [0, 64], sizes = [8, 32], strides = [1, 1]} : vector<8x128xf32> to vector<8x32xf32>
    %81 = arith.mulf %78, %46 : vector<8x32xf32>
    %82 = arith.mulf %77, %80 : vector<8x32xf32>
    %83 = arith.addf %81, %82 : vector<8x32xf32>
    %84 = math.tanh %83 : vector<8x32xf32>
    %85 = arith.mulf %79, %84 : vector<8x32xf32>
    %cst_23 = arith.constant dense<0.000000e+00> : vector<8x128xf32>
    %86 = tpu.matmul %48, %1, %cst_23 {dimension_numbers = #tpu.dot_dimension_numbers<[1], [0], [0], [1], [0, 0, 1, 1], [], []>} : vector<8x32xf32>, vector<32x128xf32>, vector<8x128xf32> -> vector<8x128xf32>
    %87 = arith.addf %5, %86 : vector<8x128xf32>
    %cst_24 = arith.constant dense<0.000000e+00> : vector<8x128xf32>
    %88 = tpu.matmul %67, %2, %cst_24 {dimension_numbers = #tpu.dot_dimension_numbers<[1], [0], [0], [1], [0, 0, 1, 1], [], []>} : vector<8x32xf32>, vector<32x128xf32>, vector<8x128xf32> -> vector<8x128xf32>
    %89 = arith.addf %87, %88 : vector<8x128xf32>
    %90 = arith.negf %89 : vector<8x128xf32>
    %91 = math.exp %90 : vector<8x128xf32>
    %cst_25 = arith.constant 1.000000e+00 : f32
    %92 = vector.broadcast %cst_25 : f32 to vector<8x128xf32>
    %93 = arith.addf %92, %91 : vector<8x128xf32>
    %94 = arith.divf %92, %93 : vector<8x128xf32>
    %95 = math.tanh %89 : vector<8x128xf32>
    %96 = vector.extract_strided_slice %94 {offsets = [0, 0], sizes = [8, 32], strides = [1, 1]} : vector<8x128xf32> to vector<8x32xf32>
    %97 = vector.extract_strided_slice %94 {offsets = [0, 32], sizes = [8, 32], strides = [1, 1]} : vector<8x128xf32> to vector<8x32xf32>
    %98 = vector.extract_strided_slice %94 {offsets = [0, 96], sizes = [8, 32], strides = [1, 1]} : vector<8x128xf32> to vector<8x32xf32>
    %99 = vector.extract_strided_slice %95 {offsets = [0, 64], sizes = [8, 32], strides = [1, 1]} : vector<8x128xf32> to vector<8x32xf32>
    %100 = arith.mulf %97, %65 : vector<8x32xf32>
    %101 = arith.mulf %96, %99 : vector<8x32xf32>
    %102 = arith.addf %100, %101 : vector<8x32xf32>
    %103 = math.tanh %102 : vector<8x32xf32>
    %104 = arith.mulf %98, %103 : vector<8x32xf32>
    %105 = vector.extract_strided_slice %11 {offsets = [24, 0], sizes = [8, 128], strides = [1, 1]} : vector<128x128xf32> to vector<8x128xf32>
    %cst_26 = arith.constant dense<0.000000e+00> : vector<8x128xf32>
    %106 = tpu.matmul %85, %0, %cst_26 {dimension_numbers = #tpu.dot_dimension_numbers<[1], [0], [0], [1], [0, 0, 1, 1], [], []>} : vector<8x32xf32>, vector<32x128xf32>, vector<8x128xf32> -> vector<8x128xf32>
    %107 = arith.addf %105, %106 : vector<8x128xf32>
    %108 = arith.negf %107 : vector<8x128xf32>
    %109 = math.exp %108 : vector<8x128xf32>
    %cst_27 = arith.constant 1.000000e+00 : f32
    %110 = vector.broadcast %cst_27 : f32 to vector<8x128xf32>
    %111 = arith.addf %110, %109 : vector<8x128xf32>
    %112 = arith.divf %110, %111 : vector<8x128xf32>
    %113 = math.tanh %107 : vector<8x128xf32>
    %114 = vector.extract_strided_slice %112 {offsets = [0, 0], sizes = [8, 32], strides = [1, 1]} : vector<8x128xf32> to vector<8x32xf32>
    %115 = vector.extract_strided_slice %112 {offsets = [0, 32], sizes = [8, 32], strides = [1, 1]} : vector<8x128xf32> to vector<8x32xf32>
    %116 = vector.extract_strided_slice %112 {offsets = [0, 96], sizes = [8, 32], strides = [1, 1]} : vector<8x128xf32> to vector<8x32xf32>
    %117 = vector.extract_strided_slice %113 {offsets = [0, 64], sizes = [8, 32], strides = [1, 1]} : vector<8x128xf32> to vector<8x32xf32>
    %118 = arith.mulf %115, %83 : vector<8x32xf32>
    %119 = arith.mulf %114, %117 : vector<8x32xf32>
    %120 = arith.addf %118, %119 : vector<8x32xf32>
    %121 = math.tanh %120 : vector<8x32xf32>
    %122 = arith.mulf %116, %121 : vector<8x32xf32>
    %cst_28 = arith.constant dense<0.000000e+00> : vector<8x128xf32>
    %123 = tpu.matmul %85, %1, %cst_28 {dimension_numbers = #tpu.dot_dimension_numbers<[1], [0], [0], [1], [0, 0, 1, 1], [], []>} : vector<8x32xf32>, vector<32x128xf32>, vector<8x128xf32> -> vector<8x128xf32>
    %124 = arith.addf %5, %123 : vector<8x128xf32>
    %cst_29 = arith.constant dense<0.000000e+00> : vector<8x128xf32>
    %125 = tpu.matmul %104, %2, %cst_29 {dimension_numbers = #tpu.dot_dimension_numbers<[1], [0], [0], [1], [0, 0, 1, 1], [], []>} : vector<8x32xf32>, vector<32x128xf32>, vector<8x128xf32> -> vector<8x128xf32>
    %126 = arith.addf %124, %125 : vector<8x128xf32>
    %127 = arith.negf %126 : vector<8x128xf32>
    %128 = math.exp %127 : vector<8x128xf32>
    %cst_30 = arith.constant 1.000000e+00 : f32
    %129 = vector.broadcast %cst_30 : f32 to vector<8x128xf32>
    %130 = arith.addf %129, %128 : vector<8x128xf32>
    %131 = arith.divf %129, %130 : vector<8x128xf32>
    %132 = math.tanh %126 : vector<8x128xf32>
    %133 = vector.extract_strided_slice %131 {offsets = [0, 0], sizes = [8, 32], strides = [1, 1]} : vector<8x128xf32> to vector<8x32xf32>
    %134 = vector.extract_strided_slice %131 {offsets = [0, 32], sizes = [8, 32], strides = [1, 1]} : vector<8x128xf32> to vector<8x32xf32>
    %135 = vector.extract_strided_slice %131 {offsets = [0, 96], sizes = [8, 32], strides = [1, 1]} : vector<8x128xf32> to vector<8x32xf32>
    %136 = vector.extract_strided_slice %132 {offsets = [0, 64], sizes = [8, 32], strides = [1, 1]} : vector<8x128xf32> to vector<8x32xf32>
    %137 = arith.mulf %134, %102 : vector<8x32xf32>
    %138 = arith.mulf %133, %136 : vector<8x32xf32>
    %139 = arith.addf %137, %138 : vector<8x32xf32>
    %140 = math.tanh %139 : vector<8x32xf32>
    %141 = arith.mulf %135, %140 : vector<8x32xf32>
    %142 = vector.extract_strided_slice %11 {offsets = [32, 0], sizes = [8, 128], strides = [1, 1]} : vector<128x128xf32> to vector<8x128xf32>
    %cst_31 = arith.constant dense<0.000000e+00> : vector<8x128xf32>
    %143 = tpu.matmul %122, %0, %cst_31 {dimension_numbers = #tpu.dot_dimension_numbers<[1], [0], [0], [1], [0, 0, 1, 1], [], []>} : vector<8x32xf32>, vector<32x128xf32>, vector<8x128xf32> -> vector<8x128xf32>
    %144 = arith.addf %142, %143 : vector<8x128xf32>
    %145 = arith.negf %144 : vector<8x128xf32>
    %146 = math.exp %145 : vector<8x128xf32>
    %cst_32 = arith.constant 1.000000e+00 : f32
    %147 = vector.broadcast %cst_32 : f32 to vector<8x128xf32>
    %148 = arith.addf %147, %146 : vector<8x128xf32>
    %149 = arith.divf %147, %148 : vector<8x128xf32>
    %150 = math.tanh %144 : vector<8x128xf32>
    %151 = vector.extract_strided_slice %149 {offsets = [0, 0], sizes = [8, 32], strides = [1, 1]} : vector<8x128xf32> to vector<8x32xf32>
    %152 = vector.extract_strided_slice %149 {offsets = [0, 32], sizes = [8, 32], strides = [1, 1]} : vector<8x128xf32> to vector<8x32xf32>
    %153 = vector.extract_strided_slice %149 {offsets = [0, 96], sizes = [8, 32], strides = [1, 1]} : vector<8x128xf32> to vector<8x32xf32>
    %154 = vector.extract_strided_slice %150 {offsets = [0, 64], sizes = [8, 32], strides = [1, 1]} : vector<8x128xf32> to vector<8x32xf32>
    %155 = arith.mulf %152, %120 : vector<8x32xf32>
    %156 = arith.mulf %151, %154 : vector<8x32xf32>
    %157 = arith.addf %155, %156 : vector<8x32xf32>
    %158 = math.tanh %157 : vector<8x32xf32>
    %159 = arith.mulf %153, %158 : vector<8x32xf32>
    %cst_33 = arith.constant dense<0.000000e+00> : vector<8x128xf32>
    %160 = tpu.matmul %122, %1, %cst_33 {dimension_numbers = #tpu.dot_dimension_numbers<[1], [0], [0], [1], [0, 0, 1, 1], [], []>} : vector<8x32xf32>, vector<32x128xf32>, vector<8x128xf32> -> vector<8x128xf32>
    %161 = arith.addf %5, %160 : vector<8x128xf32>
    %cst_34 = arith.constant dense<0.000000e+00> : vector<8x128xf32>
    %162 = tpu.matmul %141, %2, %cst_34 {dimension_numbers = #tpu.dot_dimension_numbers<[1], [0], [0], [1], [0, 0, 1, 1], [], []>} : vector<8x32xf32>, vector<32x128xf32>, vector<8x128xf32> -> vector<8x128xf32>
    %163 = arith.addf %161, %162 : vector<8x128xf32>
    %164 = arith.negf %163 : vector<8x128xf32>
    %165 = math.exp %164 : vector<8x128xf32>
    %cst_35 = arith.constant 1.000000e+00 : f32
    %166 = vector.broadcast %cst_35 : f32 to vector<8x128xf32>
    %167 = arith.addf %166, %165 : vector<8x128xf32>
    %168 = arith.divf %166, %167 : vector<8x128xf32>
    %169 = math.tanh %163 : vector<8x128xf32>
    %170 = vector.extract_strided_slice %168 {offsets = [0, 0], sizes = [8, 32], strides = [1, 1]} : vector<8x128xf32> to vector<8x32xf32>
    %171 = vector.extract_strided_slice %168 {offsets = [0, 32], sizes = [8, 32], strides = [1, 1]} : vector<8x128xf32> to vector<8x32xf32>
    %172 = vector.extract_strided_slice %168 {offsets = [0, 96], sizes = [8, 32], strides = [1, 1]} : vector<8x128xf32> to vector<8x32xf32>
    %173 = vector.extract_strided_slice %169 {offsets = [0, 64], sizes = [8, 32], strides = [1, 1]} : vector<8x128xf32> to vector<8x32xf32>
    %174 = arith.mulf %171, %139 : vector<8x32xf32>
    %175 = arith.mulf %170, %173 : vector<8x32xf32>
    %176 = arith.addf %174, %175 : vector<8x32xf32>
    %177 = math.tanh %176 : vector<8x32xf32>
    %178 = arith.mulf %172, %177 : vector<8x32xf32>
    %179 = vector.extract_strided_slice %11 {offsets = [40, 0], sizes = [8, 128], strides = [1, 1]} : vector<128x128xf32> to vector<8x128xf32>
    %cst_36 = arith.constant dense<0.000000e+00> : vector<8x128xf32>
    %180 = tpu.matmul %159, %0, %cst_36 {dimension_numbers = #tpu.dot_dimension_numbers<[1], [0], [0], [1], [0, 0, 1, 1], [], []>} : vector<8x32xf32>, vector<32x128xf32>, vector<8x128xf32> -> vector<8x128xf32>
    %181 = arith.addf %179, %180 : vector<8x128xf32>
    %182 = arith.negf %181 : vector<8x128xf32>
    %183 = math.exp %182 : vector<8x128xf32>
    %cst_37 = arith.constant 1.000000e+00 : f32
    %184 = vector.broadcast %cst_37 : f32 to vector<8x128xf32>
    %185 = arith.addf %184, %183 : vector<8x128xf32>
    %186 = arith.divf %184, %185 : vector<8x128xf32>
    %187 = math.tanh %181 : vector<8x128xf32>
    %188 = vector.extract_strided_slice %186 {offsets = [0, 0], sizes = [8, 32], strides = [1, 1]} : vector<8x128xf32> to vector<8x32xf32>
    %189 = vector.extract_strided_slice %186 {offsets = [0, 32], sizes = [8, 32], strides = [1, 1]} : vector<8x128xf32> to vector<8x32xf32>
    %190 = vector.extract_strided_slice %186 {offsets = [0, 96], sizes = [8, 32], strides = [1, 1]} : vector<8x128xf32> to vector<8x32xf32>
    %191 = vector.extract_strided_slice %187 {offsets = [0, 64], sizes = [8, 32], strides = [1, 1]} : vector<8x128xf32> to vector<8x32xf32>
    %192 = arith.mulf %189, %157 : vector<8x32xf32>
    %193 = arith.mulf %188, %191 : vector<8x32xf32>
    %194 = arith.addf %192, %193 : vector<8x32xf32>
    %195 = math.tanh %194 : vector<8x32xf32>
    %196 = arith.mulf %190, %195 : vector<8x32xf32>
    %cst_38 = arith.constant dense<0.000000e+00> : vector<8x128xf32>
    %197 = tpu.matmul %159, %1, %cst_38 {dimension_numbers = #tpu.dot_dimension_numbers<[1], [0], [0], [1], [0, 0, 1, 1], [], []>} : vector<8x32xf32>, vector<32x128xf32>, vector<8x128xf32> -> vector<8x128xf32>
    %198 = arith.addf %5, %197 : vector<8x128xf32>
    %cst_39 = arith.constant dense<0.000000e+00> : vector<8x128xf32>
    %199 = tpu.matmul %178, %2, %cst_39 {dimension_numbers = #tpu.dot_dimension_numbers<[1], [0], [0], [1], [0, 0, 1, 1], [], []>} : vector<8x32xf32>, vector<32x128xf32>, vector<8x128xf32> -> vector<8x128xf32>
    %200 = arith.addf %198, %199 : vector<8x128xf32>
    %201 = arith.negf %200 : vector<8x128xf32>
    %202 = math.exp %201 : vector<8x128xf32>
    %cst_40 = arith.constant 1.000000e+00 : f32
    %203 = vector.broadcast %cst_40 : f32 to vector<8x128xf32>
    %204 = arith.addf %203, %202 : vector<8x128xf32>
    %205 = arith.divf %203, %204 : vector<8x128xf32>
    %206 = math.tanh %200 : vector<8x128xf32>
    %207 = vector.extract_strided_slice %205 {offsets = [0, 0], sizes = [8, 32], strides = [1, 1]} : vector<8x128xf32> to vector<8x32xf32>
    %208 = vector.extract_strided_slice %205 {offsets = [0, 32], sizes = [8, 32], strides = [1, 1]} : vector<8x128xf32> to vector<8x32xf32>
    %209 = vector.extract_strided_slice %205 {offsets = [0, 96], sizes = [8, 32], strides = [1, 1]} : vector<8x128xf32> to vector<8x32xf32>
    %210 = vector.extract_strided_slice %206 {offsets = [0, 64], sizes = [8, 32], strides = [1, 1]} : vector<8x128xf32> to vector<8x32xf32>
    %211 = arith.mulf %208, %176 : vector<8x32xf32>
    %212 = arith.mulf %207, %210 : vector<8x32xf32>
    %213 = arith.addf %211, %212 : vector<8x32xf32>
    %214 = math.tanh %213 : vector<8x32xf32>
    %215 = arith.mulf %209, %214 : vector<8x32xf32>
    %216 = vector.extract_strided_slice %11 {offsets = [48, 0], sizes = [8, 128], strides = [1, 1]} : vector<128x128xf32> to vector<8x128xf32>
    %cst_41 = arith.constant dense<0.000000e+00> : vector<8x128xf32>
    %217 = tpu.matmul %196, %0, %cst_41 {dimension_numbers = #tpu.dot_dimension_numbers<[1], [0], [0], [1], [0, 0, 1, 1], [], []>} : vector<8x32xf32>, vector<32x128xf32>, vector<8x128xf32> -> vector<8x128xf32>
    %218 = arith.addf %216, %217 : vector<8x128xf32>
    %219 = arith.negf %218 : vector<8x128xf32>
    %220 = math.exp %219 : vector<8x128xf32>
    %cst_42 = arith.constant 1.000000e+00 : f32
    %221 = vector.broadcast %cst_42 : f32 to vector<8x128xf32>
    %222 = arith.addf %221, %220 : vector<8x128xf32>
    %223 = arith.divf %221, %222 : vector<8x128xf32>
    %224 = math.tanh %218 : vector<8x128xf32>
    %225 = vector.extract_strided_slice %223 {offsets = [0, 0], sizes = [8, 32], strides = [1, 1]} : vector<8x128xf32> to vector<8x32xf32>
    %226 = vector.extract_strided_slice %223 {offsets = [0, 32], sizes = [8, 32], strides = [1, 1]} : vector<8x128xf32> to vector<8x32xf32>
    %227 = vector.extract_strided_slice %223 {offsets = [0, 96], sizes = [8, 32], strides = [1, 1]} : vector<8x128xf32> to vector<8x32xf32>
    %228 = vector.extract_strided_slice %224 {offsets = [0, 64], sizes = [8, 32], strides = [1, 1]} : vector<8x128xf32> to vector<8x32xf32>
    %229 = arith.mulf %226, %194 : vector<8x32xf32>
    %230 = arith.mulf %225, %228 : vector<8x32xf32>
    %231 = arith.addf %229, %230 : vector<8x32xf32>
    %232 = math.tanh %231 : vector<8x32xf32>
    %233 = arith.mulf %227, %232 : vector<8x32xf32>
    %cst_43 = arith.constant dense<0.000000e+00> : vector<8x128xf32>
    %234 = tpu.matmul %196, %1, %cst_43 {dimension_numbers = #tpu.dot_dimension_numbers<[1], [0], [0], [1], [0, 0, 1, 1], [], []>} : vector<8x32xf32>, vector<32x128xf32>, vector<8x128xf32> -> vector<8x128xf32>
    %235 = arith.addf %5, %234 : vector<8x128xf32>
    %cst_44 = arith.constant dense<0.000000e+00> : vector<8x128xf32>
    %236 = tpu.matmul %215, %2, %cst_44 {dimension_numbers = #tpu.dot_dimension_numbers<[1], [0], [0], [1], [0, 0, 1, 1], [], []>} : vector<8x32xf32>, vector<32x128xf32>, vector<8x128xf32> -> vector<8x128xf32>
    %237 = arith.addf %235, %236 : vector<8x128xf32>
    %238 = arith.negf %237 : vector<8x128xf32>
    %239 = math.exp %238 : vector<8x128xf32>
    %cst_45 = arith.constant 1.000000e+00 : f32
    %240 = vector.broadcast %cst_45 : f32 to vector<8x128xf32>
    %241 = arith.addf %240, %239 : vector<8x128xf32>
    %242 = arith.divf %240, %241 : vector<8x128xf32>
    %243 = math.tanh %237 : vector<8x128xf32>
    %244 = vector.extract_strided_slice %242 {offsets = [0, 0], sizes = [8, 32], strides = [1, 1]} : vector<8x128xf32> to vector<8x32xf32>
    %245 = vector.extract_strided_slice %242 {offsets = [0, 32], sizes = [8, 32], strides = [1, 1]} : vector<8x128xf32> to vector<8x32xf32>
    %246 = vector.extract_strided_slice %242 {offsets = [0, 96], sizes = [8, 32], strides = [1, 1]} : vector<8x128xf32> to vector<8x32xf32>
    %247 = vector.extract_strided_slice %243 {offsets = [0, 64], sizes = [8, 32], strides = [1, 1]} : vector<8x128xf32> to vector<8x32xf32>
    %248 = arith.mulf %245, %213 : vector<8x32xf32>
    %249 = arith.mulf %244, %247 : vector<8x32xf32>
    %250 = arith.addf %248, %249 : vector<8x32xf32>
    %251 = math.tanh %250 : vector<8x32xf32>
    %252 = arith.mulf %246, %251 : vector<8x32xf32>
    %253 = vector.extract_strided_slice %11 {offsets = [56, 0], sizes = [8, 128], strides = [1, 1]} : vector<128x128xf32> to vector<8x128xf32>
    %cst_46 = arith.constant dense<0.000000e+00> : vector<8x128xf32>
    %254 = tpu.matmul %233, %0, %cst_46 {dimension_numbers = #tpu.dot_dimension_numbers<[1], [0], [0], [1], [0, 0, 1, 1], [], []>} : vector<8x32xf32>, vector<32x128xf32>, vector<8x128xf32> -> vector<8x128xf32>
    %255 = arith.addf %253, %254 : vector<8x128xf32>
    %256 = arith.negf %255 : vector<8x128xf32>
    %257 = math.exp %256 : vector<8x128xf32>
    %cst_47 = arith.constant 1.000000e+00 : f32
    %258 = vector.broadcast %cst_47 : f32 to vector<8x128xf32>
    %259 = arith.addf %258, %257 : vector<8x128xf32>
    %260 = arith.divf %258, %259 : vector<8x128xf32>
    %261 = math.tanh %255 : vector<8x128xf32>
    %262 = vector.extract_strided_slice %260 {offsets = [0, 0], sizes = [8, 32], strides = [1, 1]} : vector<8x128xf32> to vector<8x32xf32>
    %263 = vector.extract_strided_slice %260 {offsets = [0, 32], sizes = [8, 32], strides = [1, 1]} : vector<8x128xf32> to vector<8x32xf32>
    %264 = vector.extract_strided_slice %260 {offsets = [0, 96], sizes = [8, 32], strides = [1, 1]} : vector<8x128xf32> to vector<8x32xf32>
    %265 = vector.extract_strided_slice %261 {offsets = [0, 64], sizes = [8, 32], strides = [1, 1]} : vector<8x128xf32> to vector<8x32xf32>
    %266 = arith.mulf %263, %231 : vector<8x32xf32>
    %267 = arith.mulf %262, %265 : vector<8x32xf32>
    %268 = arith.addf %266, %267 : vector<8x32xf32>
    %269 = math.tanh %268 : vector<8x32xf32>
    %270 = arith.mulf %264, %269 : vector<8x32xf32>
    %cst_48 = arith.constant dense<0.000000e+00> : vector<8x128xf32>
    %271 = tpu.matmul %233, %1, %cst_48 {dimension_numbers = #tpu.dot_dimension_numbers<[1], [0], [0], [1], [0, 0, 1, 1], [], []>} : vector<8x32xf32>, vector<32x128xf32>, vector<8x128xf32> -> vector<8x128xf32>
    %272 = arith.addf %5, %271 : vector<8x128xf32>
    %cst_49 = arith.constant dense<0.000000e+00> : vector<8x128xf32>
    %273 = tpu.matmul %252, %2, %cst_49 {dimension_numbers = #tpu.dot_dimension_numbers<[1], [0], [0], [1], [0, 0, 1, 1], [], []>} : vector<8x32xf32>, vector<32x128xf32>, vector<8x128xf32> -> vector<8x128xf32>
    %274 = arith.addf %272, %273 : vector<8x128xf32>
    %275 = arith.negf %274 : vector<8x128xf32>
    %276 = math.exp %275 : vector<8x128xf32>
    %cst_50 = arith.constant 1.000000e+00 : f32
    %277 = vector.broadcast %cst_50 : f32 to vector<8x128xf32>
    %278 = arith.addf %277, %276 : vector<8x128xf32>
    %279 = arith.divf %277, %278 : vector<8x128xf32>
    %280 = math.tanh %274 : vector<8x128xf32>
    %281 = vector.extract_strided_slice %279 {offsets = [0, 0], sizes = [8, 32], strides = [1, 1]} : vector<8x128xf32> to vector<8x32xf32>
    %282 = vector.extract_strided_slice %279 {offsets = [0, 32], sizes = [8, 32], strides = [1, 1]} : vector<8x128xf32> to vector<8x32xf32>
    %283 = vector.extract_strided_slice %279 {offsets = [0, 96], sizes = [8, 32], strides = [1, 1]} : vector<8x128xf32> to vector<8x32xf32>
    %284 = vector.extract_strided_slice %280 {offsets = [0, 64], sizes = [8, 32], strides = [1, 1]} : vector<8x128xf32> to vector<8x32xf32>
    %285 = arith.mulf %282, %250 : vector<8x32xf32>
    %286 = arith.mulf %281, %284 : vector<8x32xf32>
    %287 = arith.addf %285, %286 : vector<8x32xf32>
    %288 = math.tanh %287 : vector<8x32xf32>
    %289 = arith.mulf %283, %288 : vector<8x32xf32>
    %290 = vector.extract_strided_slice %11 {offsets = [64, 0], sizes = [8, 128], strides = [1, 1]} : vector<128x128xf32> to vector<8x128xf32>
    %cst_51 = arith.constant dense<0.000000e+00> : vector<8x128xf32>
    %291 = tpu.matmul %270, %0, %cst_51 {dimension_numbers = #tpu.dot_dimension_numbers<[1], [0], [0], [1], [0, 0, 1, 1], [], []>} : vector<8x32xf32>, vector<32x128xf32>, vector<8x128xf32> -> vector<8x128xf32>
    %292 = arith.addf %290, %291 : vector<8x128xf32>
    %293 = arith.negf %292 : vector<8x128xf32>
    %294 = math.exp %293 : vector<8x128xf32>
    %cst_52 = arith.constant 1.000000e+00 : f32
    %295 = vector.broadcast %cst_52 : f32 to vector<8x128xf32>
    %296 = arith.addf %295, %294 : vector<8x128xf32>
    %297 = arith.divf %295, %296 : vector<8x128xf32>
    %298 = math.tanh %292 : vector<8x128xf32>
    %299 = vector.extract_strided_slice %297 {offsets = [0, 0], sizes = [8, 32], strides = [1, 1]} : vector<8x128xf32> to vector<8x32xf32>
    %300 = vector.extract_strided_slice %297 {offsets = [0, 32], sizes = [8, 32], strides = [1, 1]} : vector<8x128xf32> to vector<8x32xf32>
    %301 = vector.extract_strided_slice %297 {offsets = [0, 96], sizes = [8, 32], strides = [1, 1]} : vector<8x128xf32> to vector<8x32xf32>
    %302 = vector.extract_strided_slice %298 {offsets = [0, 64], sizes = [8, 32], strides = [1, 1]} : vector<8x128xf32> to vector<8x32xf32>
    %303 = arith.mulf %300, %268 : vector<8x32xf32>
    %304 = arith.mulf %299, %302 : vector<8x32xf32>
    %305 = arith.addf %303, %304 : vector<8x32xf32>
    %306 = math.tanh %305 : vector<8x32xf32>
    %307 = arith.mulf %301, %306 : vector<8x32xf32>
    %cst_53 = arith.constant dense<0.000000e+00> : vector<8x128xf32>
    %308 = tpu.matmul %270, %1, %cst_53 {dimension_numbers = #tpu.dot_dimension_numbers<[1], [0], [0], [1], [0, 0, 1, 1], [], []>} : vector<8x32xf32>, vector<32x128xf32>, vector<8x128xf32> -> vector<8x128xf32>
    %309 = arith.addf %5, %308 : vector<8x128xf32>
    %cst_54 = arith.constant dense<0.000000e+00> : vector<8x128xf32>
    %310 = tpu.matmul %289, %2, %cst_54 {dimension_numbers = #tpu.dot_dimension_numbers<[1], [0], [0], [1], [0, 0, 1, 1], [], []>} : vector<8x32xf32>, vector<32x128xf32>, vector<8x128xf32> -> vector<8x128xf32>
    %311 = arith.addf %309, %310 : vector<8x128xf32>
    %312 = arith.negf %311 : vector<8x128xf32>
    %313 = math.exp %312 : vector<8x128xf32>
    %cst_55 = arith.constant 1.000000e+00 : f32
    %314 = vector.broadcast %cst_55 : f32 to vector<8x128xf32>
    %315 = arith.addf %314, %313 : vector<8x128xf32>
    %316 = arith.divf %314, %315 : vector<8x128xf32>
    %317 = math.tanh %311 : vector<8x128xf32>
    %318 = vector.extract_strided_slice %316 {offsets = [0, 0], sizes = [8, 32], strides = [1, 1]} : vector<8x128xf32> to vector<8x32xf32>
    %319 = vector.extract_strided_slice %316 {offsets = [0, 32], sizes = [8, 32], strides = [1, 1]} : vector<8x128xf32> to vector<8x32xf32>
    %320 = vector.extract_strided_slice %316 {offsets = [0, 96], sizes = [8, 32], strides = [1, 1]} : vector<8x128xf32> to vector<8x32xf32>
    %321 = vector.extract_strided_slice %317 {offsets = [0, 64], sizes = [8, 32], strides = [1, 1]} : vector<8x128xf32> to vector<8x32xf32>
    %322 = arith.mulf %319, %287 : vector<8x32xf32>
    %323 = arith.mulf %318, %321 : vector<8x32xf32>
    %324 = arith.addf %322, %323 : vector<8x32xf32>
    %325 = math.tanh %324 : vector<8x32xf32>
    %326 = arith.mulf %320, %325 : vector<8x32xf32>
    %327 = vector.extract_strided_slice %11 {offsets = [72, 0], sizes = [8, 128], strides = [1, 1]} : vector<128x128xf32> to vector<8x128xf32>
    %cst_56 = arith.constant dense<0.000000e+00> : vector<8x128xf32>
    %328 = tpu.matmul %307, %0, %cst_56 {dimension_numbers = #tpu.dot_dimension_numbers<[1], [0], [0], [1], [0, 0, 1, 1], [], []>} : vector<8x32xf32>, vector<32x128xf32>, vector<8x128xf32> -> vector<8x128xf32>
    %329 = arith.addf %327, %328 : vector<8x128xf32>
    %330 = arith.negf %329 : vector<8x128xf32>
    %331 = math.exp %330 : vector<8x128xf32>
    %cst_57 = arith.constant 1.000000e+00 : f32
    %332 = vector.broadcast %cst_57 : f32 to vector<8x128xf32>
    %333 = arith.addf %332, %331 : vector<8x128xf32>
    %334 = arith.divf %332, %333 : vector<8x128xf32>
    %335 = math.tanh %329 : vector<8x128xf32>
    %336 = vector.extract_strided_slice %334 {offsets = [0, 0], sizes = [8, 32], strides = [1, 1]} : vector<8x128xf32> to vector<8x32xf32>
    %337 = vector.extract_strided_slice %334 {offsets = [0, 32], sizes = [8, 32], strides = [1, 1]} : vector<8x128xf32> to vector<8x32xf32>
    %338 = vector.extract_strided_slice %334 {offsets = [0, 96], sizes = [8, 32], strides = [1, 1]} : vector<8x128xf32> to vector<8x32xf32>
    %339 = vector.extract_strided_slice %335 {offsets = [0, 64], sizes = [8, 32], strides = [1, 1]} : vector<8x128xf32> to vector<8x32xf32>
    %340 = arith.mulf %337, %305 : vector<8x32xf32>
    %341 = arith.mulf %336, %339 : vector<8x32xf32>
    %342 = arith.addf %340, %341 : vector<8x32xf32>
    %343 = math.tanh %342 : vector<8x32xf32>
    %344 = arith.mulf %338, %343 : vector<8x32xf32>
    %cst_58 = arith.constant dense<0.000000e+00> : vector<8x128xf32>
    %345 = tpu.matmul %307, %1, %cst_58 {dimension_numbers = #tpu.dot_dimension_numbers<[1], [0], [0], [1], [0, 0, 1, 1], [], []>} : vector<8x32xf32>, vector<32x128xf32>, vector<8x128xf32> -> vector<8x128xf32>
    %346 = arith.addf %5, %345 : vector<8x128xf32>
    %cst_59 = arith.constant dense<0.000000e+00> : vector<8x128xf32>
    %347 = tpu.matmul %326, %2, %cst_59 {dimension_numbers = #tpu.dot_dimension_numbers<[1], [0], [0], [1], [0, 0, 1, 1], [], []>} : vector<8x32xf32>, vector<32x128xf32>, vector<8x128xf32> -> vector<8x128xf32>
    %348 = arith.addf %346, %347 : vector<8x128xf32>
    %349 = arith.negf %348 : vector<8x128xf32>
    %350 = math.exp %349 : vector<8x128xf32>
    %cst_60 = arith.constant 1.000000e+00 : f32
    %351 = vector.broadcast %cst_60 : f32 to vector<8x128xf32>
    %352 = arith.addf %351, %350 : vector<8x128xf32>
    %353 = arith.divf %351, %352 : vector<8x128xf32>
    %354 = math.tanh %348 : vector<8x128xf32>
    %355 = vector.extract_strided_slice %353 {offsets = [0, 0], sizes = [8, 32], strides = [1, 1]} : vector<8x128xf32> to vector<8x32xf32>
    %356 = vector.extract_strided_slice %353 {offsets = [0, 32], sizes = [8, 32], strides = [1, 1]} : vector<8x128xf32> to vector<8x32xf32>
    %357 = vector.extract_strided_slice %353 {offsets = [0, 96], sizes = [8, 32], strides = [1, 1]} : vector<8x128xf32> to vector<8x32xf32>
    %358 = vector.extract_strided_slice %354 {offsets = [0, 64], sizes = [8, 32], strides = [1, 1]} : vector<8x128xf32> to vector<8x32xf32>
    %359 = arith.mulf %356, %324 : vector<8x32xf32>
    %360 = arith.mulf %355, %358 : vector<8x32xf32>
    %361 = arith.addf %359, %360 : vector<8x32xf32>
    %362 = math.tanh %361 : vector<8x32xf32>
    %363 = arith.mulf %357, %362 : vector<8x32xf32>
    %364 = vector.extract_strided_slice %11 {offsets = [80, 0], sizes = [8, 128], strides = [1, 1]} : vector<128x128xf32> to vector<8x128xf32>
    %cst_61 = arith.constant dense<0.000000e+00> : vector<8x128xf32>
    %365 = tpu.matmul %344, %0, %cst_61 {dimension_numbers = #tpu.dot_dimension_numbers<[1], [0], [0], [1], [0, 0, 1, 1], [], []>} : vector<8x32xf32>, vector<32x128xf32>, vector<8x128xf32> -> vector<8x128xf32>
    %366 = arith.addf %364, %365 : vector<8x128xf32>
    %367 = arith.negf %366 : vector<8x128xf32>
    %368 = math.exp %367 : vector<8x128xf32>
    %cst_62 = arith.constant 1.000000e+00 : f32
    %369 = vector.broadcast %cst_62 : f32 to vector<8x128xf32>
    %370 = arith.addf %369, %368 : vector<8x128xf32>
    %371 = arith.divf %369, %370 : vector<8x128xf32>
    %372 = math.tanh %366 : vector<8x128xf32>
    %373 = vector.extract_strided_slice %371 {offsets = [0, 0], sizes = [8, 32], strides = [1, 1]} : vector<8x128xf32> to vector<8x32xf32>
    %374 = vector.extract_strided_slice %371 {offsets = [0, 32], sizes = [8, 32], strides = [1, 1]} : vector<8x128xf32> to vector<8x32xf32>
    %375 = vector.extract_strided_slice %371 {offsets = [0, 96], sizes = [8, 32], strides = [1, 1]} : vector<8x128xf32> to vector<8x32xf32>
    %376 = vector.extract_strided_slice %372 {offsets = [0, 64], sizes = [8, 32], strides = [1, 1]} : vector<8x128xf32> to vector<8x32xf32>
    %377 = arith.mulf %374, %342 : vector<8x32xf32>
    %378 = arith.mulf %373, %376 : vector<8x32xf32>
    %379 = arith.addf %377, %378 : vector<8x32xf32>
    %380 = math.tanh %379 : vector<8x32xf32>
    %381 = arith.mulf %375, %380 : vector<8x32xf32>
    %cst_63 = arith.constant dense<0.000000e+00> : vector<8x128xf32>
    %382 = tpu.matmul %344, %1, %cst_63 {dimension_numbers = #tpu.dot_dimension_numbers<[1], [0], [0], [1], [0, 0, 1, 1], [], []>} : vector<8x32xf32>, vector<32x128xf32>, vector<8x128xf32> -> vector<8x128xf32>
    %383 = arith.addf %5, %382 : vector<8x128xf32>
    %cst_64 = arith.constant dense<0.000000e+00> : vector<8x128xf32>
    %384 = tpu.matmul %363, %2, %cst_64 {dimension_numbers = #tpu.dot_dimension_numbers<[1], [0], [0], [1], [0, 0, 1, 1], [], []>} : vector<8x32xf32>, vector<32x128xf32>, vector<8x128xf32> -> vector<8x128xf32>
    %385 = arith.addf %383, %384 : vector<8x128xf32>
    %386 = arith.negf %385 : vector<8x128xf32>
    %387 = math.exp %386 : vector<8x128xf32>
    %cst_65 = arith.constant 1.000000e+00 : f32
    %388 = vector.broadcast %cst_65 : f32 to vector<8x128xf32>
    %389 = arith.addf %388, %387 : vector<8x128xf32>
    %390 = arith.divf %388, %389 : vector<8x128xf32>
    %391 = math.tanh %385 : vector<8x128xf32>
    %392 = vector.extract_strided_slice %390 {offsets = [0, 0], sizes = [8, 32], strides = [1, 1]} : vector<8x128xf32> to vector<8x32xf32>
    %393 = vector.extract_strided_slice %390 {offsets = [0, 32], sizes = [8, 32], strides = [1, 1]} : vector<8x128xf32> to vector<8x32xf32>
    %394 = vector.extract_strided_slice %390 {offsets = [0, 96], sizes = [8, 32], strides = [1, 1]} : vector<8x128xf32> to vector<8x32xf32>
    %395 = vector.extract_strided_slice %391 {offsets = [0, 64], sizes = [8, 32], strides = [1, 1]} : vector<8x128xf32> to vector<8x32xf32>
    %396 = arith.mulf %393, %361 : vector<8x32xf32>
    %397 = arith.mulf %392, %395 : vector<8x32xf32>
    %398 = arith.addf %396, %397 : vector<8x32xf32>
    %399 = math.tanh %398 : vector<8x32xf32>
    %400 = arith.mulf %394, %399 : vector<8x32xf32>
    %401 = vector.extract_strided_slice %11 {offsets = [88, 0], sizes = [8, 128], strides = [1, 1]} : vector<128x128xf32> to vector<8x128xf32>
    %cst_66 = arith.constant dense<0.000000e+00> : vector<8x128xf32>
    %402 = tpu.matmul %381, %0, %cst_66 {dimension_numbers = #tpu.dot_dimension_numbers<[1], [0], [0], [1], [0, 0, 1, 1], [], []>} : vector<8x32xf32>, vector<32x128xf32>, vector<8x128xf32> -> vector<8x128xf32>
    %403 = arith.addf %401, %402 : vector<8x128xf32>
    %404 = arith.negf %403 : vector<8x128xf32>
    %405 = math.exp %404 : vector<8x128xf32>
    %cst_67 = arith.constant 1.000000e+00 : f32
    %406 = vector.broadcast %cst_67 : f32 to vector<8x128xf32>
    %407 = arith.addf %406, %405 : vector<8x128xf32>
    %408 = arith.divf %406, %407 : vector<8x128xf32>
    %409 = math.tanh %403 : vector<8x128xf32>
    %410 = vector.extract_strided_slice %408 {offsets = [0, 0], sizes = [8, 32], strides = [1, 1]} : vector<8x128xf32> to vector<8x32xf32>
    %411 = vector.extract_strided_slice %408 {offsets = [0, 32], sizes = [8, 32], strides = [1, 1]} : vector<8x128xf32> to vector<8x32xf32>
    %412 = vector.extract_strided_slice %408 {offsets = [0, 96], sizes = [8, 32], strides = [1, 1]} : vector<8x128xf32> to vector<8x32xf32>
    %413 = vector.extract_strided_slice %409 {offsets = [0, 64], sizes = [8, 32], strides = [1, 1]} : vector<8x128xf32> to vector<8x32xf32>
    %414 = arith.mulf %411, %379 : vector<8x32xf32>
    %415 = arith.mulf %410, %413 : vector<8x32xf32>
    %416 = arith.addf %414, %415 : vector<8x32xf32>
    %417 = math.tanh %416 : vector<8x32xf32>
    %418 = arith.mulf %412, %417 : vector<8x32xf32>
    %cst_68 = arith.constant dense<0.000000e+00> : vector<8x128xf32>
    %419 = tpu.matmul %381, %1, %cst_68 {dimension_numbers = #tpu.dot_dimension_numbers<[1], [0], [0], [1], [0, 0, 1, 1], [], []>} : vector<8x32xf32>, vector<32x128xf32>, vector<8x128xf32> -> vector<8x128xf32>
    %420 = arith.addf %5, %419 : vector<8x128xf32>
    %cst_69 = arith.constant dense<0.000000e+00> : vector<8x128xf32>
    %421 = tpu.matmul %400, %2, %cst_69 {dimension_numbers = #tpu.dot_dimension_numbers<[1], [0], [0], [1], [0, 0, 1, 1], [], []>} : vector<8x32xf32>, vector<32x128xf32>, vector<8x128xf32> -> vector<8x128xf32>
    %422 = arith.addf %420, %421 : vector<8x128xf32>
    %423 = arith.negf %422 : vector<8x128xf32>
    %424 = math.exp %423 : vector<8x128xf32>
    %cst_70 = arith.constant 1.000000e+00 : f32
    %425 = vector.broadcast %cst_70 : f32 to vector<8x128xf32>
    %426 = arith.addf %425, %424 : vector<8x128xf32>
    %427 = arith.divf %425, %426 : vector<8x128xf32>
    %428 = math.tanh %422 : vector<8x128xf32>
    %429 = vector.extract_strided_slice %427 {offsets = [0, 0], sizes = [8, 32], strides = [1, 1]} : vector<8x128xf32> to vector<8x32xf32>
    %430 = vector.extract_strided_slice %427 {offsets = [0, 32], sizes = [8, 32], strides = [1, 1]} : vector<8x128xf32> to vector<8x32xf32>
    %431 = vector.extract_strided_slice %427 {offsets = [0, 96], sizes = [8, 32], strides = [1, 1]} : vector<8x128xf32> to vector<8x32xf32>
    %432 = vector.extract_strided_slice %428 {offsets = [0, 64], sizes = [8, 32], strides = [1, 1]} : vector<8x128xf32> to vector<8x32xf32>
    %433 = arith.mulf %430, %398 : vector<8x32xf32>
    %434 = arith.mulf %429, %432 : vector<8x32xf32>
    %435 = arith.addf %433, %434 : vector<8x32xf32>
    %436 = math.tanh %435 : vector<8x32xf32>
    %437 = arith.mulf %431, %436 : vector<8x32xf32>
    %438 = vector.extract_strided_slice %11 {offsets = [96, 0], sizes = [8, 128], strides = [1, 1]} : vector<128x128xf32> to vector<8x128xf32>
    %cst_71 = arith.constant dense<0.000000e+00> : vector<8x128xf32>
    %439 = tpu.matmul %418, %0, %cst_71 {dimension_numbers = #tpu.dot_dimension_numbers<[1], [0], [0], [1], [0, 0, 1, 1], [], []>} : vector<8x32xf32>, vector<32x128xf32>, vector<8x128xf32> -> vector<8x128xf32>
    %440 = arith.addf %438, %439 : vector<8x128xf32>
    %441 = arith.negf %440 : vector<8x128xf32>
    %442 = math.exp %441 : vector<8x128xf32>
    %cst_72 = arith.constant 1.000000e+00 : f32
    %443 = vector.broadcast %cst_72 : f32 to vector<8x128xf32>
    %444 = arith.addf %443, %442 : vector<8x128xf32>
    %445 = arith.divf %443, %444 : vector<8x128xf32>
    %446 = math.tanh %440 : vector<8x128xf32>
    %447 = vector.extract_strided_slice %445 {offsets = [0, 0], sizes = [8, 32], strides = [1, 1]} : vector<8x128xf32> to vector<8x32xf32>
    %448 = vector.extract_strided_slice %445 {offsets = [0, 32], sizes = [8, 32], strides = [1, 1]} : vector<8x128xf32> to vector<8x32xf32>
    %449 = vector.extract_strided_slice %445 {offsets = [0, 96], sizes = [8, 32], strides = [1, 1]} : vector<8x128xf32> to vector<8x32xf32>
    %450 = vector.extract_strided_slice %446 {offsets = [0, 64], sizes = [8, 32], strides = [1, 1]} : vector<8x128xf32> to vector<8x32xf32>
    %451 = arith.mulf %448, %416 : vector<8x32xf32>
    %452 = arith.mulf %447, %450 : vector<8x32xf32>
    %453 = arith.addf %451, %452 : vector<8x32xf32>
    %454 = math.tanh %453 : vector<8x32xf32>
    %455 = arith.mulf %449, %454 : vector<8x32xf32>
    %cst_73 = arith.constant dense<0.000000e+00> : vector<8x128xf32>
    %456 = tpu.matmul %418, %1, %cst_73 {dimension_numbers = #tpu.dot_dimension_numbers<[1], [0], [0], [1], [0, 0, 1, 1], [], []>} : vector<8x32xf32>, vector<32x128xf32>, vector<8x128xf32> -> vector<8x128xf32>
    %457 = arith.addf %5, %456 : vector<8x128xf32>
    %cst_74 = arith.constant dense<0.000000e+00> : vector<8x128xf32>
    %458 = tpu.matmul %437, %2, %cst_74 {dimension_numbers = #tpu.dot_dimension_numbers<[1], [0], [0], [1], [0, 0, 1, 1], [], []>} : vector<8x32xf32>, vector<32x128xf32>, vector<8x128xf32> -> vector<8x128xf32>
    %459 = arith.addf %457, %458 : vector<8x128xf32>
    %460 = arith.negf %459 : vector<8x128xf32>
    %461 = math.exp %460 : vector<8x128xf32>
    %cst_75 = arith.constant 1.000000e+00 : f32
    %462 = vector.broadcast %cst_75 : f32 to vector<8x128xf32>
    %463 = arith.addf %462, %461 : vector<8x128xf32>
    %464 = arith.divf %462, %463 : vector<8x128xf32>
    %465 = math.tanh %459 : vector<8x128xf32>
    %466 = vector.extract_strided_slice %464 {offsets = [0, 0], sizes = [8, 32], strides = [1, 1]} : vector<8x128xf32> to vector<8x32xf32>
    %467 = vector.extract_strided_slice %464 {offsets = [0, 32], sizes = [8, 32], strides = [1, 1]} : vector<8x128xf32> to vector<8x32xf32>
    %468 = vector.extract_strided_slice %464 {offsets = [0, 96], sizes = [8, 32], strides = [1, 1]} : vector<8x128xf32> to vector<8x32xf32>
    %469 = vector.extract_strided_slice %465 {offsets = [0, 64], sizes = [8, 32], strides = [1, 1]} : vector<8x128xf32> to vector<8x32xf32>
    %470 = arith.mulf %467, %435 : vector<8x32xf32>
    %471 = arith.mulf %466, %469 : vector<8x32xf32>
    %472 = arith.addf %470, %471 : vector<8x32xf32>
    %473 = math.tanh %472 : vector<8x32xf32>
    %474 = arith.mulf %468, %473 : vector<8x32xf32>
    %475 = vector.extract_strided_slice %11 {offsets = [104, 0], sizes = [8, 128], strides = [1, 1]} : vector<128x128xf32> to vector<8x128xf32>
    %cst_76 = arith.constant dense<0.000000e+00> : vector<8x128xf32>
    %476 = tpu.matmul %455, %0, %cst_76 {dimension_numbers = #tpu.dot_dimension_numbers<[1], [0], [0], [1], [0, 0, 1, 1], [], []>} : vector<8x32xf32>, vector<32x128xf32>, vector<8x128xf32> -> vector<8x128xf32>
    %477 = arith.addf %475, %476 : vector<8x128xf32>
    %478 = arith.negf %477 : vector<8x128xf32>
    %479 = math.exp %478 : vector<8x128xf32>
    %cst_77 = arith.constant 1.000000e+00 : f32
    %480 = vector.broadcast %cst_77 : f32 to vector<8x128xf32>
    %481 = arith.addf %480, %479 : vector<8x128xf32>
    %482 = arith.divf %480, %481 : vector<8x128xf32>
    %483 = math.tanh %477 : vector<8x128xf32>
    %484 = vector.extract_strided_slice %482 {offsets = [0, 0], sizes = [8, 32], strides = [1, 1]} : vector<8x128xf32> to vector<8x32xf32>
    %485 = vector.extract_strided_slice %482 {offsets = [0, 32], sizes = [8, 32], strides = [1, 1]} : vector<8x128xf32> to vector<8x32xf32>
    %486 = vector.extract_strided_slice %482 {offsets = [0, 96], sizes = [8, 32], strides = [1, 1]} : vector<8x128xf32> to vector<8x32xf32>
    %487 = vector.extract_strided_slice %483 {offsets = [0, 64], sizes = [8, 32], strides = [1, 1]} : vector<8x128xf32> to vector<8x32xf32>
    %488 = arith.mulf %485, %453 : vector<8x32xf32>
    %489 = arith.mulf %484, %487 : vector<8x32xf32>
    %490 = arith.addf %488, %489 : vector<8x32xf32>
    %491 = math.tanh %490 : vector<8x32xf32>
    %492 = arith.mulf %486, %491 : vector<8x32xf32>
    %cst_78 = arith.constant dense<0.000000e+00> : vector<8x128xf32>
    %493 = tpu.matmul %455, %1, %cst_78 {dimension_numbers = #tpu.dot_dimension_numbers<[1], [0], [0], [1], [0, 0, 1, 1], [], []>} : vector<8x32xf32>, vector<32x128xf32>, vector<8x128xf32> -> vector<8x128xf32>
    %494 = arith.addf %5, %493 : vector<8x128xf32>
    %cst_79 = arith.constant dense<0.000000e+00> : vector<8x128xf32>
    %495 = tpu.matmul %474, %2, %cst_79 {dimension_numbers = #tpu.dot_dimension_numbers<[1], [0], [0], [1], [0, 0, 1, 1], [], []>} : vector<8x32xf32>, vector<32x128xf32>, vector<8x128xf32> -> vector<8x128xf32>
    %496 = arith.addf %494, %495 : vector<8x128xf32>
    %497 = arith.negf %496 : vector<8x128xf32>
    %498 = math.exp %497 : vector<8x128xf32>
    %cst_80 = arith.constant 1.000000e+00 : f32
    %499 = vector.broadcast %cst_80 : f32 to vector<8x128xf32>
    %500 = arith.addf %499, %498 : vector<8x128xf32>
    %501 = arith.divf %499, %500 : vector<8x128xf32>
    %502 = math.tanh %496 : vector<8x128xf32>
    %503 = vector.extract_strided_slice %501 {offsets = [0, 0], sizes = [8, 32], strides = [1, 1]} : vector<8x128xf32> to vector<8x32xf32>
    %504 = vector.extract_strided_slice %501 {offsets = [0, 32], sizes = [8, 32], strides = [1, 1]} : vector<8x128xf32> to vector<8x32xf32>
    %505 = vector.extract_strided_slice %501 {offsets = [0, 96], sizes = [8, 32], strides = [1, 1]} : vector<8x128xf32> to vector<8x32xf32>
    %506 = vector.extract_strided_slice %502 {offsets = [0, 64], sizes = [8, 32], strides = [1, 1]} : vector<8x128xf32> to vector<8x32xf32>
    %507 = arith.mulf %504, %472 : vector<8x32xf32>
    %508 = arith.mulf %503, %506 : vector<8x32xf32>
    %509 = arith.addf %507, %508 : vector<8x32xf32>
    %510 = math.tanh %509 : vector<8x32xf32>
    %511 = arith.mulf %505, %510 : vector<8x32xf32>
    %512 = vector.extract_strided_slice %11 {offsets = [112, 0], sizes = [8, 128], strides = [1, 1]} : vector<128x128xf32> to vector<8x128xf32>
    %cst_81 = arith.constant dense<0.000000e+00> : vector<8x128xf32>
    %513 = tpu.matmul %492, %0, %cst_81 {dimension_numbers = #tpu.dot_dimension_numbers<[1], [0], [0], [1], [0, 0, 1, 1], [], []>} : vector<8x32xf32>, vector<32x128xf32>, vector<8x128xf32> -> vector<8x128xf32>
    %514 = arith.addf %512, %513 : vector<8x128xf32>
    %515 = arith.negf %514 : vector<8x128xf32>
    %516 = math.exp %515 : vector<8x128xf32>
    %cst_82 = arith.constant 1.000000e+00 : f32
    %517 = vector.broadcast %cst_82 : f32 to vector<8x128xf32>
    %518 = arith.addf %517, %516 : vector<8x128xf32>
    %519 = arith.divf %517, %518 : vector<8x128xf32>
    %520 = math.tanh %514 : vector<8x128xf32>
    %521 = vector.extract_strided_slice %519 {offsets = [0, 0], sizes = [8, 32], strides = [1, 1]} : vector<8x128xf32> to vector<8x32xf32>
    %522 = vector.extract_strided_slice %519 {offsets = [0, 32], sizes = [8, 32], strides = [1, 1]} : vector<8x128xf32> to vector<8x32xf32>
    %523 = vector.extract_strided_slice %519 {offsets = [0, 96], sizes = [8, 32], strides = [1, 1]} : vector<8x128xf32> to vector<8x32xf32>
    %524 = vector.extract_strided_slice %520 {offsets = [0, 64], sizes = [8, 32], strides = [1, 1]} : vector<8x128xf32> to vector<8x32xf32>
    %525 = arith.mulf %522, %490 : vector<8x32xf32>
    %526 = arith.mulf %521, %524 : vector<8x32xf32>
    %527 = arith.addf %525, %526 : vector<8x32xf32>
    %528 = math.tanh %527 : vector<8x32xf32>
    %529 = arith.mulf %523, %528 : vector<8x32xf32>
    %cst_83 = arith.constant dense<0.000000e+00> : vector<8x128xf32>
    %530 = tpu.matmul %492, %1, %cst_83 {dimension_numbers = #tpu.dot_dimension_numbers<[1], [0], [0], [1], [0, 0, 1, 1], [], []>} : vector<8x32xf32>, vector<32x128xf32>, vector<8x128xf32> -> vector<8x128xf32>
    %531 = arith.addf %5, %530 : vector<8x128xf32>
    %cst_84 = arith.constant dense<0.000000e+00> : vector<8x128xf32>
    %532 = tpu.matmul %511, %2, %cst_84 {dimension_numbers = #tpu.dot_dimension_numbers<[1], [0], [0], [1], [0, 0, 1, 1], [], []>} : vector<8x32xf32>, vector<32x128xf32>, vector<8x128xf32> -> vector<8x128xf32>
    %533 = arith.addf %531, %532 : vector<8x128xf32>
    %534 = arith.negf %533 : vector<8x128xf32>
    %535 = math.exp %534 : vector<8x128xf32>
    %cst_85 = arith.constant 1.000000e+00 : f32
    %536 = vector.broadcast %cst_85 : f32 to vector<8x128xf32>
    %537 = arith.addf %536, %535 : vector<8x128xf32>
    %538 = arith.divf %536, %537 : vector<8x128xf32>
    %539 = math.tanh %533 : vector<8x128xf32>
    %540 = vector.extract_strided_slice %538 {offsets = [0, 0], sizes = [8, 32], strides = [1, 1]} : vector<8x128xf32> to vector<8x32xf32>
    %541 = vector.extract_strided_slice %538 {offsets = [0, 32], sizes = [8, 32], strides = [1, 1]} : vector<8x128xf32> to vector<8x32xf32>
    %542 = vector.extract_strided_slice %538 {offsets = [0, 96], sizes = [8, 32], strides = [1, 1]} : vector<8x128xf32> to vector<8x32xf32>
    %543 = vector.extract_strided_slice %539 {offsets = [0, 64], sizes = [8, 32], strides = [1, 1]} : vector<8x128xf32> to vector<8x32xf32>
    %544 = arith.mulf %541, %509 : vector<8x32xf32>
    %545 = arith.mulf %540, %543 : vector<8x32xf32>
    %546 = arith.addf %544, %545 : vector<8x32xf32>
    %547 = math.tanh %546 : vector<8x32xf32>
    %548 = arith.mulf %542, %547 : vector<8x32xf32>
    %549 = vector.extract_strided_slice %11 {offsets = [120, 0], sizes = [8, 128], strides = [1, 1]} : vector<128x128xf32> to vector<8x128xf32>
    %cst_86 = arith.constant dense<0.000000e+00> : vector<8x128xf32>
    %550 = tpu.matmul %529, %0, %cst_86 {dimension_numbers = #tpu.dot_dimension_numbers<[1], [0], [0], [1], [0, 0, 1, 1], [], []>} : vector<8x32xf32>, vector<32x128xf32>, vector<8x128xf32> -> vector<8x128xf32>
    %551 = arith.addf %549, %550 : vector<8x128xf32>
    %552 = arith.negf %551 : vector<8x128xf32>
    %553 = math.exp %552 : vector<8x128xf32>
    %cst_87 = arith.constant 1.000000e+00 : f32
    %554 = vector.broadcast %cst_87 : f32 to vector<8x128xf32>
    %555 = arith.addf %554, %553 : vector<8x128xf32>
    %556 = arith.divf %554, %555 : vector<8x128xf32>
    %557 = math.tanh %551 : vector<8x128xf32>
    %558 = vector.extract_strided_slice %556 {offsets = [0, 0], sizes = [8, 32], strides = [1, 1]} : vector<8x128xf32> to vector<8x32xf32>
    %559 = vector.extract_strided_slice %556 {offsets = [0, 32], sizes = [8, 32], strides = [1, 1]} : vector<8x128xf32> to vector<8x32xf32>
    %560 = vector.extract_strided_slice %556 {offsets = [0, 96], sizes = [8, 32], strides = [1, 1]} : vector<8x128xf32> to vector<8x32xf32>
    %561 = vector.extract_strided_slice %557 {offsets = [0, 64], sizes = [8, 32], strides = [1, 1]} : vector<8x128xf32> to vector<8x32xf32>
    %562 = arith.mulf %559, %527 : vector<8x32xf32>
    %563 = arith.mulf %558, %561 : vector<8x32xf32>
    %564 = arith.addf %562, %563 : vector<8x32xf32>
    %565 = math.tanh %564 : vector<8x32xf32>
    %566 = arith.mulf %560, %565 : vector<8x32xf32>
    %cst_88 = arith.constant dense<0.000000e+00> : vector<8x128xf32>
    %567 = tpu.matmul %529, %1, %cst_88 {dimension_numbers = #tpu.dot_dimension_numbers<[1], [0], [0], [1], [0, 0, 1, 1], [], []>} : vector<8x32xf32>, vector<32x128xf32>, vector<8x128xf32> -> vector<8x128xf32>
    %568 = arith.addf %5, %567 : vector<8x128xf32>
    %cst_89 = arith.constant dense<0.000000e+00> : vector<8x128xf32>
    %569 = tpu.matmul %548, %2, %cst_89 {dimension_numbers = #tpu.dot_dimension_numbers<[1], [0], [0], [1], [0, 0, 1, 1], [], []>} : vector<8x32xf32>, vector<32x128xf32>, vector<8x128xf32> -> vector<8x128xf32>
    %570 = arith.addf %568, %569 : vector<8x128xf32>
    %571 = arith.negf %570 : vector<8x128xf32>
    %572 = math.exp %571 : vector<8x128xf32>
    %cst_90 = arith.constant 1.000000e+00 : f32
    %573 = vector.broadcast %cst_90 : f32 to vector<8x128xf32>
    %574 = arith.addf %573, %572 : vector<8x128xf32>
    %575 = arith.divf %573, %574 : vector<8x128xf32>
    %576 = math.tanh %570 : vector<8x128xf32>
    %577 = vector.extract_strided_slice %575 {offsets = [0, 0], sizes = [8, 32], strides = [1, 1]} : vector<8x128xf32> to vector<8x32xf32>
    %578 = vector.extract_strided_slice %575 {offsets = [0, 32], sizes = [8, 32], strides = [1, 1]} : vector<8x128xf32> to vector<8x32xf32>
    %579 = vector.extract_strided_slice %575 {offsets = [0, 96], sizes = [8, 32], strides = [1, 1]} : vector<8x128xf32> to vector<8x32xf32>
    %580 = vector.extract_strided_slice %576 {offsets = [0, 64], sizes = [8, 32], strides = [1, 1]} : vector<8x128xf32> to vector<8x32xf32>
    %581 = arith.mulf %578, %546 : vector<8x32xf32>
    %582 = arith.mulf %577, %580 : vector<8x32xf32>
    %583 = arith.addf %581, %582 : vector<8x32xf32>
    %584 = math.tanh %583 : vector<8x32xf32>
    %585 = arith.mulf %579, %584 : vector<8x32xf32>
    %cst_91 = arith.constant dense<0.000000e+00> : vector<8x128xf32>
    %586 = tpu.matmul %566, %1, %cst_91 {dimension_numbers = #tpu.dot_dimension_numbers<[1], [0], [0], [1], [0, 0, 1, 1], [], []>} : vector<8x32xf32>, vector<32x128xf32>, vector<8x128xf32> -> vector<8x128xf32>
    %587 = arith.addf %5, %586 : vector<8x128xf32>
    %cst_92 = arith.constant dense<0.000000e+00> : vector<8x128xf32>
    %588 = tpu.matmul %585, %2, %cst_92 {dimension_numbers = #tpu.dot_dimension_numbers<[1], [0], [0], [1], [0, 0, 1, 1], [], []>} : vector<8x32xf32>, vector<32x128xf32>, vector<8x128xf32> -> vector<8x128xf32>
    %589 = arith.addf %587, %588 : vector<8x128xf32>
    %590 = arith.negf %589 : vector<8x128xf32>
    %591 = math.exp %590 : vector<8x128xf32>
    %cst_93 = arith.constant 1.000000e+00 : f32
    %592 = vector.broadcast %cst_93 : f32 to vector<8x128xf32>
    %593 = arith.addf %592, %591 : vector<8x128xf32>
    %594 = arith.divf %592, %593 : vector<8x128xf32>
    %595 = math.tanh %589 : vector<8x128xf32>
    %596 = vector.extract_strided_slice %594 {offsets = [0, 0], sizes = [8, 32], strides = [1, 1]} : vector<8x128xf32> to vector<8x32xf32>
    %597 = vector.extract_strided_slice %594 {offsets = [0, 32], sizes = [8, 32], strides = [1, 1]} : vector<8x128xf32> to vector<8x32xf32>
    %598 = vector.extract_strided_slice %594 {offsets = [0, 96], sizes = [8, 32], strides = [1, 1]} : vector<8x128xf32> to vector<8x32xf32>
    %599 = vector.extract_strided_slice %595 {offsets = [0, 64], sizes = [8, 32], strides = [1, 1]} : vector<8x128xf32> to vector<8x32xf32>
    %600 = arith.mulf %597, %583 : vector<8x32xf32>
    %601 = arith.mulf %596, %599 : vector<8x32xf32>
    %602 = arith.addf %600, %601 : vector<8x32xf32>
    %603 = math.tanh %602 : vector<8x32xf32>
    %604 = arith.mulf %598, %603 : vector<8x32xf32>
    %605 = tpu.concatenate %67, %104, %141, %178, %215, %252, %289, %326, %363, %400, %437, %474, %511, %548, %585, %604 in 1 : vector<8x32xf32>, vector<8x32xf32>, vector<8x32xf32>, vector<8x32xf32>, vector<8x32xf32>, vector<8x32xf32>, vector<8x32xf32>, vector<8x32xf32>, vector<8x32xf32>, vector<8x32xf32>, vector<8x32xf32>, vector<8x32xf32>, vector<8x32xf32>, vector<8x32xf32>, vector<8x32xf32>, vector<8x32xf32> -> vector<8x512xf32>
    %c0_94 = arith.constant 0 : index
    %c0_95 = arith.constant 0 : index
    %606 = vector.load %arg7[%c0_94, %c0_95] : memref<8x512xf32, #tpu.memory_space<vmem>>, vector<8x512xf32>
    tpu.vector_store %arg7[%c0_94, %c0_95], %605 {strides = array<i32>} : memref<8x512xf32, #tpu.memory_space<vmem>>, vector<8x512xf32>,
    return
  }
}

</mosaic_0001>

<llo_original>
// kernel: recurrent_module_forward.1
$region0: #{recurrent_module_forward.1}
  #allocation0 [shape = 'u32[]', space=smem, size = 0x4, offset = 0x4, fixed_abs, tag = 'smem constant byte address 0x4 - core index']
  #allocation1 [shape = 'u32[144,128]{1,0:T(1,128)}', space=vmem, size = 0x12000, scoped, tag = 'internal scratch']
  %s0 = inlined_call_operand.vmem [shape: f32[128,32], index: 0, kind: input, shape index: {}]
  %s1 = inlined_call_operand.vmem [shape: f32[32,128], index: 1, kind: input, shape index: {}]
  %s2 = inlined_call_operand.vmem [shape: f32[32,128], index: 2, kind: input, shape index: {}]
  %s3 = inlined_call_operand.vmem [shape: f32[1,128], index: 3, kind: input, shape index: {}]
  %s4 = inlined_call_operand.vmem [shape: f32[32,128], index: 4, kind: input, shape index: {}]
  %s5 = inlined_call_operand.vmem [shape: f32[32,128], index: 5, kind: input, shape index: {}]
  %s6 = inlined_call_operand.vmem [shape: f32[1,128], index: 6, kind: input, shape index: {}]
  %s7 = inlined_call_operand.vmem [shape: f32[8,512], index: 7, kind: output, shape index: {}]
  %s8 = sld [smem:[#allocation0]]
  $region38: #{recurrent_module_forward.1} parent=0
    _
  %s10 = ssub.s32 1, %s8
  %s11 = scalar_select 0, %s10, %s8
  // Predicated region
  $region2: #{recurrent_module_forward.1} parent=0 // pred_check
    _
  $region3: #{recurrent_module_forward.1} parent=0 // pred_check_branch
    %13 = sbr.rel (0) target = $region5
  $region4: #{recurrent_module_forward.1} parent=0 // pred_region
    _
  $region5: #{recurrent_module_forward.1} parent=0 // pred_fallthru
    _
  // Predicated region
  $region6: #{recurrent_module_forward.1} parent=0 // pred_check
    _
  $region7: #{recurrent_module_forward.1} parent=0 // pred_check_branch
    %15 = sbr.rel (0) target = $region9
  $region8: #{recurrent_module_forward.1} parent=0 // pred_region
    _
  $region9: #{recurrent_module_forward.1} parent=0 // pred_fallthru
    _
  // Predicated region
  $region10: #{recurrent_module_forward.1} parent=0 // pred_check
    _
  $region11: #{recurrent_module_forward.1} parent=0 // pred_check_branch
    %17 = sbr.rel (0) target = $region13
  $region12: #{recurrent_module_forward.1} parent=0 // pred_region
    _
  $region13: #{recurrent_module_forward.1} parent=0 // pred_fallthru
    _
  // Predicated region
  $region14: #{recurrent_module_forward.1} parent=0 // pred_check
    _
  $region15: #{recurrent_module_forward.1} parent=0 // pred_check_branch
    %19 = sbr.rel (0) target = $region17
  $region16: #{recurrent_module_forward.1} parent=0 // pred_region
    _
  $region17: #{recurrent_module_forward.1} parent=0 // pred_fallthru
    _
  // Predicated region
  $region18: #{recurrent_module_forward.1} parent=0 // pred_check
    _
  $region19: #{recurrent_module_forward.1} parent=0 // pred_check_branch
    %21 = sbr.rel (0) target = $region21
  $region20: #{recurrent_module_forward.1} parent=0 // pred_region
    _
  $region21: #{recurrent_module_forward.1} parent=0 // pred_fallthru
    _
  // Predicated region
  $region22: #{recurrent_module_forward.1} parent=0 // pred_check
    _
  $region23: #{recurrent_module_forward.1} parent=0 // pred_check_branch
    %23 = sbr.rel (0) target = $region25
  $region24: #{recurrent_module_forward.1} parent=0 // pred_region
    _
  $region25: #{recurrent_module_forward.1} parent=0 // pred_fallthru
    _
  // Predicated region
  $region26: #{recurrent_module_forward.1} parent=0 // pred_check
    _
  $region27: #{recurrent_module_forward.1} parent=0 // pred_check_branch
    %25 = sbr.rel (0) target = $region29
  $region28: #{recurrent_module_forward.1} parent=0 // pred_region
    _
  $region29: #{recurrent_module_forward.1} parent=0 // pred_fallthru
    _
  %v26 = vld [vmem:[%s2] sm:$0xff]
  %v27 = vld [vmem:[%s2 + $0x8] sm:$0xff]
  %v28 = vld [vmem:[%s2 + $0x10] sm:$0xff]
  %v29 = vld [vmem:[%s2 + $0x18] sm:$0xff]
  %v30 = vld [vmem:[%s4] sm:$0xff]
  %v31 = vld [vmem:[%s4 + $0x8] sm:$0xff]
  %v32 = vld [vmem:[%s4 + $0x10] sm:$0xff]
  %v33 = vld [vmem:[%s4 + $0x18] sm:$0xff]
  %v34 = vld [vmem:[%s5] sm:$0xff]
  %v35 = vld [vmem:[%s5 + $0x8] sm:$0xff]
  %v36 = vld [vmem:[%s5 + $0x10] sm:$0xff]
  %v37 = vld [vmem:[%s5 + $0x18] sm:$0xff]
  %v38 = vld [vmem:[%s6] sm:$0x1]
  %v40 = vlaneseq
  %v41 = vshrl.u32 %v40, 7
  %v42 = vsub.s32 0, %v41
  %v43 = vrot.slane %v38, %v42
  %v45 = vld [vmem:[%s0] sm:$0xff]
  %v46 = vld [vmem:[%s0 + $0x8] sm:$0xff]
  %v47 = vld [vmem:[%s0 + $0x10] sm:$0xff]
  %v48 = vld [vmem:[%s0 + $0x18] sm:$0xff]
  %v49 = vld [vmem:[%s0 + $0x20] sm:$0xff]
  %v50 = vld [vmem:[%s0 + $0x28] sm:$0xff]
  %v51 = vld [vmem:[%s0 + $0x30] sm:$0xff]
  %v52 = vld [vmem:[%s0 + $0x38] sm:$0xff]
  %v53 = vld [vmem:[%s0 + $0x40] sm:$0xff]
  %v54 = vld [vmem:[%s0 + $0x48] sm:$0xff]
  %v55 = vld [vmem:[%s0 + $0x50] sm:$0xff]
  %v56 = vld [vmem:[%s0 + $0x58] sm:$0xff]
  %v57 = vld [vmem:[%s0 + $0x60] sm:$0xff]
  %v58 = vld [vmem:[%s0 + $0x68] sm:$0xff]
  %v59 = vld [vmem:[%s0 + $0x70] sm:$0xff]
  %v60 = vld [vmem:[%s0 + $0x78] sm:$0xff]
  %v61 = vld [vmem:[%s1] sm:$0xff]
  %v62 = vld [vmem:[%s1 + $0x8] sm:$0xff]
  %v63 = vld [vmem:[%s1 + $0x10] sm:$0xff]
  %v64 = vld [vmem:[%s1 + $0x18] sm:$0xff]
  %v65 = vld [vmem:[%s3] sm:$0x1]
  %v67 = vlaneseq
  %v68 = vshrl.u32 %v67, 7
  %v69 = vsub.s32 0, %v68
  %v70 = vrot.slane %v65, %v69
  %vm72 = vcmask 261120
  %v74 = vsel %vm72, %v45, 0
  %v77 = vsel %vm72, %v46, 0
  %v80 = vsel %vm72, %v47, 0
  %v83 = vsel %vm72, %v48, 0
  %v86 = vsel %vm72, %v49, 0
  %v89 = vsel %vm72, %v50, 0
  %v92 = vsel %vm72, %v51, 0
  %v95 = vsel %vm72, %v52, 0
  %v98 = vsel %vm72, %v53, 0
  %v101 = vsel %vm72, %v54, 0
  %v104 = vsel %vm72, %v55, 0
  %v107 = vsel %vm72, %v56, 0
  %v110 = vsel %vm72, %v57, 0
  %v113 = vsel %vm72, %v58, 0
  %v116 = vsel %vm72, %v59, 0
  %v119 = vsel %vm72, %v60, 0
  %121 = vmatprep.subr.mxu0 0.0
  %122 = vmatpush1.msra.mxu0 0.0
  %123 = vmatprep.subr.mxu0 0.0
  %124 = vmatpush1.msra.mxu0 0.0
  %125 = vmatprep.subr.mxu0 0.0
  %126 = vmatpush1.msra.mxu0 0.0
  %127 = vmatprep.subr.mxu0 0.0
  %128 = vmatpush1.msra.mxu0 0.0
  %129 = vmatprep.subr.mxu0 0.0
  %130 = vmatpush1.msra.mxu0 0.0
  %131 = vmatprep.subr.mxu0 0.0
  %132 = vmatpush1.msra.mxu0 0.0
  %133 = vmatprep.subr.mxu0 0.0
  %134 = vmatpush1.msra.mxu0 0.0
  %135 = vmatprep.subr.mxu0 0.0
  %136 = vmatpush1.msra.mxu0 0.0
  %137 = vmatprep.subr.mxu0 0.0
  %138 = vmatpush1.msra.mxu0 0.0
  %139 = vmatprep.subr.mxu0 0.0
  %140 = vmatpush1.msra.mxu0 0.0
  %141 = vmatprep.subr.mxu0 0.0
  %142 = vmatpush1.msra.mxu0 0.0
  %143 = vmatprep.subr.mxu0 0.0
  %144 = vmatpush1.msra.mxu0 0.0
  %145 = vmatprep.subr.mxu0 0.0
  %146 = vmatpush1.msra.mxu0 %v64
  %147 = vmatprep.subr.mxu0 0.0
  %148 = vmatpush1.msra.mxu0 %v63
  %149 = vmatprep.subr.mxu0 0.0
  %150 = vmatpush1.msra.mxu0 %v62
  %151 = vmatprep.subr.mxu0 0.0
  %152 = vmatpush1.msra.mxu0 %v61
  %153 = vmatprep.subr.mxu0 0.0
  %154 = vmatpush2.msra.mxu0 0.0
  %155 = vmatprep.subr.mxu0 0.0
  %156 = vmatpush2.msra.mxu0 0.0
  %157 = vmatprep.subr.mxu0 0.0
  %158 = vmatpush2.msra.mxu0 0.0
  %159 = vmatprep.subr.mxu0 0.0
  %160 = vmatpush2.msra.mxu0 0.0
  %161 = vmatprep.subr.mxu0 0.0
  %162 = vmatpush2.msra.mxu0 0.0
  %163 = vmatprep.subr.mxu0 0.0
  %164 = vmatpush2.msra.mxu0 0.0
  %165 = vmatprep.subr.mxu0 0.0
  %166 = vmatpush2.msra.mxu0 0.0
  %167 = vmatprep.subr.mxu0 0.0
  %168 = vmatpush2.msra.mxu0 0.0
  %169 = vmatprep.subr.mxu0 0.0
  %170 = vmatpush2.msra.mxu0 0.0
  %171 = vmatprep.subr.mxu0 0.0
  %172 = vmatpush2.msra.mxu0 0.0
  %173 = vmatprep.subr.mxu0 0.0
  %174 = vmatpush2.msra.mxu0 0.0
  %175 = vmatprep.subr.mxu0 0.0
  %176 = vmatpush2.msra.mxu0 0.0
  %177 = vmatprep.subr.mxu0 0.0
  %178 = vmatpush2.msra.mxu0 0.0
  %179 = vmatprep.subr.mxu0 0.0
  %180 = vmatpush2.msra.mxu0 0.0
  %181 = vmatprep.subr.mxu0 0.0
  %182 = vmatpush2.msra.mxu0 0.0
  %183 = vmatprep.subr.mxu0 0.0
  %184 = vmatpush2.msra.mxu0 0.0
  %185 = vmatprep.mubr.f32.mxu0 0.0
  %186 = vmatmul.mubr.f32.gmra.mxu0 %v74
  %v187 = vpop.f32.mrf.mxu0
  %v188 = vadd.f32 %v70, %v187
  %v189 = vpop.f32.mrf.mxu0
  %190 = vmatprep.mubr.f32.mxu0 0.0
  %191 = vmatmul.mubr.f32.gmra.mxu0 %v77
  %v192 = vpop.f32.mrf.mxu0
  %v193 = vadd.f32 %v70, %v192
  %v194 = vpop.f32.mrf.mxu0
  %195 = vmatprep.mubr.f32.mxu0 0.0
  %196 = vmatmul.mubr.f32.gmra.mxu0 %v80
  %v197 = vpop.f32.mrf.mxu0
  %v198 = vadd.f32 %v70, %v197
  %v199 = vpop.f32.mrf.mxu0
  %200 = vmatprep.mubr.f32.mxu0 0.0
  %201 = vmatmul.mubr.f32.gmra.mxu0 %v83
  %v202 = vpop.f32.mrf.mxu0
  %v203 = vadd.f32 %v70, %v202
  %v204 = vpop.f32.mrf.mxu0
  %205 = vmatprep.mubr.f32.mxu0 0.0
  %206 = vmatmul.mubr.f32.gmra.mxu0 %v86
  %v207 = vpop.f32.mrf.mxu0
  %v208 = vadd.f32 %v70, %v207
  %v209 = vpop.f32.mrf.mxu0
  %210 = vmatprep.mubr.f32.mxu0 0.0
  %211 = vmatmul.mubr.f32.gmra.mxu0 %v89
  %v212 = vpop.f32.mrf.mxu0
  %v213 = vadd.f32 %v70, %v212
  %v214 = vpop.f32.mrf.mxu0
  %215 = vmatprep.mubr.f32.mxu0 0.0
  %216 = vmatmul.mubr.f32.gmra.mxu0 %v92
  %v217 = vpop.f32.mrf.mxu0
  %v218 = vadd.f32 %v70, %v217
  %v219 = vpop.f32.mrf.mxu0
  %220 = vmatprep.mubr.f32.mxu0 0.0
  %221 = vmatmul.mubr.f32.gmra.mxu0 %v95
  %v222 = vpop.f32.mrf.mxu0
  %v223 = vadd.f32 %v70, %v222
  %v224 = vpop.f32.mrf.mxu0
  %225 = vmatprep.mubr.f32.mxu0 0.0
  %226 = vmatmul.mubr.f32.gmra.mxu0 %v98
  %v227 = vpop.f32.mrf.mxu0
  %v228 = vadd.f32 %v70, %v227
  %v229 = vpop.f32.mrf.mxu0
  %230 = vmatprep.mubr.f32.mxu0 0.0
  %231 = vmatmul.mubr.f32.gmra.mxu0 %v101
  %v232 = vpop.f32.mrf.mxu0
  %v233 = vadd.f32 %v70, %v232
  %v234 = vpop.f32.mrf.mxu0
  %235 = vmatprep.mubr.f32.mxu0 0.0
  %236 = vmatmul.mubr.f32.gmra.mxu0 %v104
  %v237 = vpop.f32.mrf.mxu0
  %v238 = vadd.f32 %v70, %v237
  %v239 = vpop.f32.mrf.mxu0
  %240 = vmatprep.mubr.f32.mxu0 0.0
  %241 = vmatmul.mubr.f32.gmra.mxu0 %v107
  %v242 = vpop.f32.mrf.mxu0
  %v243 = vadd.f32 %v70, %v242
  %v244 = vpop.f32.mrf.mxu0
  %245 = vmatprep.mubr.f32.mxu0 0.0
  %246 = vmatmul.mubr.f32.gmra.mxu0 %v110
  %v247 = vpop.f32.mrf.mxu0
  %v248 = vadd.f32 %v70, %v247
  %v249 = vpop.f32.mrf.mxu0
  %250 = vmatprep.mubr.f32.mxu0 0.0
  %251 = vmatmul.mubr.f32.gmra.mxu0 %v113
  %v252 = vpop.f32.mrf.mxu0
  %v253 = vadd.f32 %v70, %v252
  %v254 = vpop.f32.mrf.mxu0
  %255 = vmatprep.mubr.f32.mxu0 0.0
  %256 = vmatmul.mubr.f32.gmra.mxu0 %v116
  %v257 = vpop.f32.mrf.mxu0
  %v258 = vadd.f32 %v70, %v257
  %v259 = vpop.f32.mrf.mxu0
  %260 = vmatprep.mubr.f32.mxu0 0.0
  %261 = vmatmul.mubr.f32.gmra.mxu0 %v119
  %v262 = vpop.f32.mrf.mxu0
  %v263 = vadd.f32 %v70, %v262
  %v264 = vpop.f32.mrf.mxu0
  %265 = vdwg.mxu0
  %v267 = vsel %vm72, 0.0, 0
  %269 = vmatprep.subr.mxu0 0.0
  %270 = vmatpush1.msra.mxu0 0.0
  %271 = vmatprep.subr.mxu0 0.0
  %272 = vmatpush1.msra.mxu0 0.0
  %273 = vmatprep.subr.mxu0 0.0
  %274 = vmatpush1.msra.mxu0 0.0
  %275 = vmatprep.subr.mxu0 0.0
  %276 = vmatpush1.msra.mxu0 0.0
  %277 = vmatprep.subr.mxu0 0.0
  %278 = vmatpush1.msra.mxu0 0.0
  %279 = vmatprep.subr.mxu0 0.0
  %280 = vmatpush1.msra.mxu0 0.0
  %281 = vmatprep.subr.mxu0 0.0
  %282 = vmatpush1.msra.mxu0 0.0
  %283 = vmatprep.subr.mxu0 0.0
  %284 = vmatpush1.msra.mxu0 0.0
  %285 = vmatprep.subr.mxu0 0.0
  %286 = vmatpush1.msra.mxu0 0.0
  %287 = vmatprep.subr.mxu0 0.0
  %288 = vmatpush1.msra.mxu0 0.0
  %289 = vmatprep.subr.mxu0 0.0
  %290 = vmatpush1.msra.mxu0 0.0
  %291 = vmatprep.subr.mxu0 0.0
  %292 = vmatpush1.msra.mxu0 0.0
  %293 = vmatprep.subr.mxu0 0.0
  %294 = vmatpush1.msra.mxu0 %v29
  %295 = vmatprep.subr.mxu0 0.0
  %296 = vmatpush1.msra.mxu0 %v28
  %297 = vmatprep.subr.mxu0 0.0
  %298 = vmatpush1.msra.mxu0 %v27
  %299 = vmatprep.subr.mxu0 0.0
  %300 = vmatpush1.msra.mxu0 %v26
  %301 = vmatprep.subr.mxu0 0.0
  %302 = vmatpush2.msra.mxu0 0.0
  %303 = vmatprep.subr.mxu0 0.0
  %304 = vmatpush2.msra.mxu0 0.0
  %305 = vmatprep.subr.mxu0 0.0
  %306 = vmatpush2.msra.mxu0 0.0
  %307 = vmatprep.subr.mxu0 0.0
  %308 = vmatpush2.msra.mxu0 0.0
  %309 = vmatprep.subr.mxu0 0.0
  %310 = vmatpush2.msra.mxu0 0.0
  %311 = vmatprep.subr.mxu0 0.0
  %312 = vmatpush2.msra.mxu0 0.0
  %313 = vmatprep.subr.mxu0 0.0
  %314 = vmatpush2.msra.mxu0 0.0
  %315 = vmatprep.subr.mxu0 0.0
  %316 = vmatpush2.msra.mxu0 0.0
  %317 = vmatprep.subr.mxu0 0.0
  %318 = vmatpush2.msra.mxu0 0.0
  %319 = vmatprep.subr.mxu0 0.0
  %320 = vmatpush2.msra.mxu0 0.0
  %321 = vmatprep.subr.mxu0 0.0
  %322 = vmatpush2.msra.mxu0 0.0
  %323 = vmatprep.subr.mxu0 0.0
  %324 = vmatpush2.msra.mxu0 0.0
  %325 = vmatprep.subr.mxu0 0.0
  %326 = vmatpush2.msra.mxu0 0.0
  %327 = vmatprep.subr.mxu0 0.0
  %328 = vmatpush2.msra.mxu0 0.0
  %329 = vmatprep.subr.mxu0 0.0
  %330 = vmatpush2.msra.mxu0 0.0
  %331 = vmatprep.subr.mxu0 0.0
  %332 = vmatpush2.msra.mxu0 0.0
  %333 = vmatprep.mubr.f32.mxu0 0.0
  %334 = vmatmul.mubr.f32.gmra.mxu0 %v267
  %v335 = vpop.f32.mrf.mxu0
  %v336 = vadd.f32 0.0, %v335
  %v337 = vpop.f32.mrf.mxu0
  %338 = vdwg.mxu0
  %v339 = vadd.f32 %v188, %v336
  %v340 = vxor.u32 %v339, 2147483648
  %v341 = vmul.f32 %v340, 1.442695
  %v342 = vpow.pop %v341
  %v343 = vadd.f32 %v342, 1.0
  %v344 = vrcp.pop %v343
  %v345 = vmul.f32 1.0, %v344
  %v346 = vtanh.pop %v339
  %v347 = vmul.f32 %v345, 0.0
  %349 = vrot.lane.b32.xlu0 %v346, 64
  %v350 = vpop.permute.xlu0 %349
  %v352 = vmul.f32 %v345, %v350
  %354 = vrot.lane.b32.xlu0 %v352, 32
  %v355 = vpop.permute.xlu0 %354
  %v357 = vadd.f32 %v347, %v355
  %v358 = vtanh.pop %v357
  %360 = vrot.lane.b32.xlu0 %v358, 64
  %v361 = vpop.permute.xlu0 %360
  %v363 = vmul.f32 %v345, %v361
  %365 = vrot.lane.b32.xlu0 %v363, 32
  %v366 = vpop.permute.xlu0 %365
  %v367 = vsel %vm72, %v366, 0
  %369 = vmatprep.subr.mxu0 0.0
  %370 = vmatpush1.msra.mxu0 0.0
  %371 = vmatprep.subr.mxu0 0.0
  %372 = vmatpush1.msra.mxu0 0.0
  %373 = vmatprep.subr.mxu0 0.0
  %374 = vmatpush1.msra.mxu0 0.0
  %375 = vmatprep.subr.mxu0 0.0
  %376 = vmatpush1.msra.mxu0 0.0
  %377 = vmatprep.subr.mxu0 0.0
  %378 = vmatpush1.msra.mxu0 0.0
  %379 = vmatprep.subr.mxu0 0.0
  %380 = vmatpush1.msra.mxu0 0.0
  %381 = vmatprep.subr.mxu0 0.0
  %382 = vmatpush1.msra.mxu0 0.0
  %383 = vmatprep.subr.mxu0 0.0
  %384 = vmatpush1.msra.mxu0 0.0
  %385 = vmatprep.subr.mxu0 0.0
  %386 = vmatpush1.msra.mxu0 0.0
  %387 = vmatprep.subr.mxu0 0.0
  %388 = vmatpush1.msra.mxu0 0.0
  %389 = vmatprep.subr.mxu0 0.0
  %390 = vmatpush1.msra.mxu0 0.0
  %391 = vmatprep.subr.mxu0 0.0
  %392 = vmatpush1.msra.mxu0 0.0
  %393 = vmatprep.subr.mxu0 0.0
  %394 = vmatpush1.msra.mxu0 %v29
  %395 = vmatprep.subr.mxu0 0.0
  %396 = vmatpush1.msra.mxu0 %v28
  %397 = vmatprep.subr.mxu0 0.0
  %398 = vmatpush1.msra.mxu0 %v27
  %399 = vmatprep.subr.mxu0 0.0
  %400 = vmatpush1.msra.mxu0 %v26
  %401 = vmatprep.subr.mxu0 0.0
  %402 = vmatpush2.msra.mxu0 0.0
  %403 = vmatprep.subr.mxu0 0.0
  %404 = vmatpush2.msra.mxu0 0.0
  %405 = vmatprep.subr.mxu0 0.0
  %406 = vmatpush2.msra.mxu0 0.0
  %407 = vmatprep.subr.mxu0 0.0
  %408 = vmatpush2.msra.mxu0 0.0
  %409 = vmatprep.subr.mxu0 0.0
  %410 = vmatpush2.msra.mxu0 0.0
  %411 = vmatprep.subr.mxu0 0.0
  %412 = vmatpush2.msra.mxu0 0.0
  %413 = vmatprep.subr.mxu0 0.0
  %414 = vmatpush2.msra.mxu0 0.0
  %415 = vmatprep.subr.mxu0 0.0
  %416 = vmatpush2.msra.mxu0 0.0
  %417 = vmatprep.subr.mxu0 0.0
  %418 = vmatpush2.msra.mxu0 0.0
  %419 = vmatprep.subr.mxu0 0.0
  %420 = vmatpush2.msra.mxu0 0.0
  %421 = vmatprep.subr.mxu0 0.0
  %422 = vmatpush2.msra.mxu0 0.0
  %423 = vmatprep.subr.mxu0 0.0
  %424 = vmatpush2.msra.mxu0 0.0
  %425 = vmatprep.subr.mxu0 0.0
  %426 = vmatpush2.msra.mxu0 0.0
  %427 = vmatprep.subr.mxu0 0.0
  %428 = vmatpush2.msra.mxu0 0.0
  %429 = vmatprep.subr.mxu0 0.0
  %430 = vmatpush2.msra.mxu0 0.0
  %431 = vmatprep.subr.mxu0 0.0
  %432 = vmatpush2.msra.mxu0 0.0
  %433 = vmatprep.mubr.f32.mxu0 0.0
  %434 = vmatmul.mubr.f32.gmra.mxu0 %v367
  %v435 = vpop.f32.mrf.mxu0
  %v436 = vadd.f32 0.0, %v435
  %v437 = vpop.f32.mrf.mxu0
  %438 = vdwg.mxu0
  %v439 = vadd.f32 %v193, %v436
  %v440 = vxor.u32 %v439, 2147483648
  %v441 = vmul.f32 %v440, 1.442695
  %v442 = vpow.pop %v441
  %v443 = vadd.f32 %v442, 1.0
  %v444 = vrcp.pop %v443
  %v445 = vmul.f32 1.0, %v444
  %v446 = vtanh.pop %v439
  %v447 = vmul.f32 %v445, %v357
  %449 = vrot.lane.b32.xlu0 %v446, 64
  %v450 = vpop.permute.xlu0 %449
  %v452 = vmul.f32 %v445, %v450
  %454 = vrot.lane.b32.xlu0 %v452, 32
  %v455 = vpop.permute.xlu0 %454
  %v457 = vadd.f32 %v447, %v455
  %v458 = vtanh.pop %v457
  %460 = vrot.lane.b32.xlu0 %v458, 64
  %v461 = vpop.permute.xlu0 %460
  %v463 = vmul.f32 %v445, %v461
  %464 = vmatprep.subr.mxu0 0.0
  %465 = vmatpush1.msra.mxu0 0.0
  %466 = vmatprep.subr.mxu0 0.0
  %467 = vmatpush1.msra.mxu0 0.0
  %468 = vmatprep.subr.mxu0 0.0
  %469 = vmatpush1.msra.mxu0 0.0
  %470 = vmatprep.subr.mxu0 0.0
  %471 = vmatpush1.msra.mxu0 0.0
  %472 = vmatprep.subr.mxu0 0.0
  %473 = vmatpush1.msra.mxu0 0.0
  %474 = vmatprep.subr.mxu0 0.0
  %475 = vmatpush1.msra.mxu0 0.0
  %476 = vmatprep.subr.mxu0 0.0
  %477 = vmatpush1.msra.mxu0 0.0
  %478 = vmatprep.subr.mxu0 0.0
  %479 = vmatpush1.msra.mxu0 0.0
  %480 = vmatprep.subr.mxu0 0.0
  %481 = vmatpush1.msra.mxu0 0.0
  %482 = vmatprep.subr.mxu0 0.0
  %483 = vmatpush1.msra.mxu0 0.0
  %484 = vmatprep.subr.mxu0 0.0
  %485 = vmatpush1.msra.mxu0 0.0
  %486 = vmatprep.subr.mxu0 0.0
  %487 = vmatpush1.msra.mxu0 0.0
  %488 = vmatprep.subr.mxu0 0.0
  %489 = vmatpush1.msra.mxu0 %v33
  %490 = vmatprep.subr.mxu0 0.0
  %491 = vmatpush1.msra.mxu0 %v32
  %492 = vmatprep.subr.mxu0 0.0
  %493 = vmatpush1.msra.mxu0 %v31
  %494 = vmatprep.subr.mxu0 0.0
  %495 = vmatpush1.msra.mxu0 %v30
  %496 = vmatprep.subr.mxu0 0.0
  %497 = vmatpush2.msra.mxu0 0.0
  %498 = vmatprep.subr.mxu0 0.0
  %499 = vmatpush2.msra.mxu0 0.0
  %500 = vmatprep.subr.mxu0 0.0
  %501 = vmatpush2.msra.mxu0 0.0
  %502 = vmatprep.subr.mxu0 0.0
  %503 = vmatpush2.msra.mxu0 0.0
  %504 = vmatprep.subr.mxu0 0.0
  %505 = vmatpush2.msra.mxu0 0.0
  %506 = vmatprep.subr.mxu0 0.0
  %507 = vmatpush2.msra.mxu0 0.0
  %508 = vmatprep.subr.mxu0 0.0
  %509 = vmatpush2.msra.mxu0 0.0
  %510 = vmatprep.subr.mxu0 0.0
  %511 = vmatpush2.msra.mxu0 0.0
  %512 = vmatprep.subr.mxu0 0.0
  %513 = vmatpush2.msra.mxu0 0.0
  %514 = vmatprep.subr.mxu0 0.0
  %515 = vmatpush2.msra.mxu0 0.0
  %516 = vmatprep.subr.mxu0 0.0
  %517 = vmatpush2.msra.mxu0 0.0
  %518 = vmatprep.subr.mxu0 0.0
  %519 = vmatpush2.msra.mxu0 0.0
  %520 = vmatprep.subr.mxu0 0.0
  %521 = vmatpush2.msra.mxu0 0.0
  %522 = vmatprep.subr.mxu0 0.0
  %523 = vmatpush2.msra.mxu0 0.0
  %524 = vmatprep.subr.mxu0 0.0
  %525 = vmatpush2.msra.mxu0 0.0
  %526 = vmatprep.subr.mxu0 0.0
  %527 = vmatpush2.msra.mxu0 0.0
  %528 = vmatprep.mubr.f32.mxu0 0.0
  %529 = vmatmul.mubr.f32.gmra.mxu0 %v367
  %v530 = vpop.f32.mrf.mxu0
  %v531 = vadd.f32 0.0, %v530
  %v532 = vpop.f32.mrf.mxu0
  %533 = vdwg.mxu0
  %v534 = vadd.f32 %v43, %v531
  %535 = vmatprep.subr.mxu0 0.0
  %536 = vmatpush1.msra.mxu0 0.0
  %537 = vmatprep.subr.mxu0 0.0
  %538 = vmatpush1.msra.mxu0 0.0
  %539 = vmatprep.subr.mxu0 0.0
  %540 = vmatpush1.msra.mxu0 0.0
  %541 = vmatprep.subr.mxu0 0.0
  %542 = vmatpush1.msra.mxu0 0.0
  %543 = vmatprep.subr.mxu0 0.0
  %544 = vmatpush1.msra.mxu0 0.0
  %545 = vmatprep.subr.mxu0 0.0
  %546 = vmatpush1.msra.mxu0 0.0
  %547 = vmatprep.subr.mxu0 0.0
  %548 = vmatpush1.msra.mxu0 0.0
  %549 = vmatprep.subr.mxu0 0.0
  %550 = vmatpush1.msra.mxu0 0.0
  %551 = vmatprep.subr.mxu0 0.0
  %552 = vmatpush1.msra.mxu0 0.0
  %553 = vmatprep.subr.mxu0 0.0
  %554 = vmatpush1.msra.mxu0 0.0
  %555 = vmatprep.subr.mxu0 0.0
  %556 = vmatpush1.msra.mxu0 0.0
  %557 = vmatprep.subr.mxu0 0.0
  %558 = vmatpush1.msra.mxu0 0.0
  %559 = vmatprep.subr.mxu0 0.0
  %560 = vmatpush1.msra.mxu0 %v37
  %561 = vmatprep.subr.mxu0 0.0
  %562 = vmatpush1.msra.mxu0 %v36
  %563 = vmatprep.subr.mxu0 0.0
  %564 = vmatpush1.msra.mxu0 %v35
  %565 = vmatprep.subr.mxu0 0.0
  %566 = vmatpush1.msra.mxu0 %v34
  %567 = vmatprep.subr.mxu0 0.0
  %568 = vmatpush2.msra.mxu0 0.0
  %569 = vmatprep.subr.mxu0 0.0
  %570 = vmatpush2.msra.mxu0 0.0
  %571 = vmatprep.subr.mxu0 0.0
  %572 = vmatpush2.msra.mxu0 0.0
  %573 = vmatprep.subr.mxu0 0.0
  %574 = vmatpush2.msra.mxu0 0.0
  %575 = vmatprep.subr.mxu0 0.0
  %576 = vmatpush2.msra.mxu0 0.0
  %577 = vmatprep.subr.mxu0 0.0
  %578 = vmatpush2.msra.mxu0 0.0
  %579 = vmatprep.subr.mxu0 0.0
  %580 = vmatpush2.msra.mxu0 0.0
  %581 = vmatprep.subr.mxu0 0.0
  %582 = vmatpush2.msra.mxu0 0.0
  %583 = vmatprep.subr.mxu0 0.0
  %584 = vmatpush2.msra.mxu0 0.0
  %585 = vmatprep.subr.mxu0 0.0
  %586 = vmatpush2.msra.mxu0 0.0
  %587 = vmatprep.subr.mxu0 0.0
  %588 = vmatpush2.msra.mxu0 0.0
  %589 = vmatprep.subr.mxu0 0.0
  %590 = vmatpush2.msra.mxu0 0.0
  %591 = vmatprep.subr.mxu0 0.0
  %592 = vmatpush2.msra.mxu0 0.0
  %593 = vmatprep.subr.mxu0 0.0
  %594 = vmatpush2.msra.mxu0 0.0
  %595 = vmatprep.subr.mxu0 0.0
  %596 = vmatpush2.msra.mxu0 0.0
  %597 = vmatprep.subr.mxu0 0.0
  %598 = vmatpush2.msra.mxu0 0.0
  %599 = vmatprep.mubr.f32.mxu0 0.0
  %600 = vmatmul.mubr.f32.gmra.mxu0 %v267
  %v601 = vpop.f32.mrf.mxu0
  %v602 = vadd.f32 0.0, %v601
  %v603 = vpop.f32.mrf.mxu0
  %604 = vdwg.mxu0
  %v605 = vadd.f32 %v534, %v602
  %v606 = vxor.u32 %v605, 2147483648
  %v607 = vmul.f32 %v606, 1.442695
  %v608 = vpow.pop %v607
  %v609 = vadd.f32 %v608, 1.0
  %v610 = vrcp.pop %v609
  %v611 = vmul.f32 1.0, %v610
  %v612 = vtanh.pop %v605
  %v613 = vmul.f32 %v611, 0.0
  %615 = vrot.lane.b32.xlu0 %v612, 64
  %v616 = vpop.permute.xlu0 %615
  %v618 = vmul.f32 %v611, %v616
  %620 = vrot.lane.b32.xlu0 %v618, 32
  %v621 = vpop.permute.xlu0 %620
  %v623 = vadd.f32 %v613, %v621
  %v624 = vtanh.pop %v623
  %626 = vrot.lane.b32.xlu0 %v624, 64
  %v627 = vpop.permute.xlu0 %626
  %v629 = vmul.f32 %v611, %v627
  %631 = vrot.lane.b32.xlu0 %v463, 32
  %v632 = vpop.permute.xlu0 %631
  %v633 = vsel %vm72, %v632, 0
  %635 = vmatprep.subr.mxu0 0.0
  %636 = vmatpush1.msra.mxu0 0.0
  %637 = vmatprep.subr.mxu0 0.0
  %638 = vmatpush1.msra.mxu0 0.0
  %639 = vmatprep.subr.mxu0 0.0
  %640 = vmatpush1.msra.mxu0 0.0
  %641 = vmatprep.subr.mxu0 0.0
  %642 = vmatpush1.msra.mxu0 0.0
  %643 = vmatprep.subr.mxu0 0.0
  %644 = vmatpush1.msra.mxu0 0.0
  %645 = vmatprep.subr.mxu0 0.0
  %646 = vmatpush1.msra.mxu0 0.0
  %647 = vmatprep.subr.mxu0 0.0
  %648 = vmatpush1.msra.mxu0 0.0
  %649 = vmatprep.subr.mxu0 0.0
  %650 = vmatpush1.msra.mxu0 0.0
  %651 = vmatprep.subr.mxu0 0.0
  %652 = vmatpush1.msra.mxu0 0.0
  %653 = vmatprep.subr.mxu0 0.0
  %654 = vmatpush1.msra.mxu0 0.0
  %655 = vmatprep.subr.mxu0 0.0
  %656 = vmatpush1.msra.mxu0 0.0
  %657 = vmatprep.subr.mxu0 0.0
  %658 = vmatpush1.msra.mxu0 0.0
  %659 = vmatprep.subr.mxu0 0.0
  %660 = vmatpush1.msra.mxu0 %v29
  %661 = vmatprep.subr.mxu0 0.0
  %662 = vmatpush1.msra.mxu0 %v28
  %663 = vmatprep.subr.mxu0 0.0
  %664 = vmatpush1.msra.mxu0 %v27
  %665 = vmatprep.subr.mxu0 0.0
  %666 = vmatpush1.msra.mxu0 %v26
  %667 = vmatprep.subr.mxu0 0.0
  %668 = vmatpush2.msra.mxu0 0.0
  %669 = vmatprep.subr.mxu0 0.0
  %670 = vmatpush2.msra.mxu0 0.0
  %671 = vmatprep.subr.mxu0 0.0
  %672 = vmatpush2.msra.mxu0 0.0
  %673 = vmatprep.subr.mxu0 0.0
  %674 = vmatpush2.msra.mxu0 0.0
  %675 = vmatprep.subr.mxu0 0.0
  %676 = vmatpush2.msra.mxu0 0.0
  %677 = vmatprep.subr.mxu0 0.0
  %678 = vmatpush2.msra.mxu0 0.0
  %679 = vmatprep.subr.mxu0 0.0
  %680 = vmatpush2.msra.mxu0 0.0
  %681 = vmatprep.subr.mxu0 0.0
  %682 = vmatpush2.msra.mxu0 0.0
  %683 = vmatprep.subr.mxu0 0.0
  %684 = vmatpush2.msra.mxu0 0.0
  %685 = vmatprep.subr.mxu0 0.0
  %686 = vmatpush2.msra.mxu0 0.0
  %687 = vmatprep.subr.mxu0 0.0
  %688 = vmatpush2.msra.mxu0 0.0
  %689 = vmatprep.subr.mxu0 0.0
  %690 = vmatpush2.msra.mxu0 0.0
  %691 = vmatprep.subr.mxu0 0.0
  %692 = vmatpush2.msra.mxu0 0.0
  %693 = vmatprep.subr.mxu0 0.0
  %694 = vmatpush2.msra.mxu0 0.0
  %695 = vmatprep.subr.mxu0 0.0
  %696 = vmatpush2.msra.mxu0 0.0
  %697 = vmatprep.subr.mxu0 0.0
  %698 = vmatpush2.msra.mxu0 0.0
  %699 = vmatprep.mubr.f32.mxu0 0.0
  %700 = vmatmul.mubr.f32.gmra.mxu0 %v633
  %v701 = vpop.f32.mrf.mxu0
  %v702 = vadd.f32 0.0, %v701
  %v703 = vpop.f32.mrf.mxu0
  %704 = vdwg.mxu0
  %v705 = vadd.f32 %v198, %v702
  %v706 = vxor.u32 %v705, 2147483648
  %v707 = vmul.f32 %v706, 1.442695
  %v708 = vpow.pop %v707
  %v709 = vadd.f32 %v708, 1.0
  %v710 = vrcp.pop %v709
  %v711 = vmul.f32 1.0, %v710
  %v712 = vtanh.pop %v705
  %v713 = vmul.f32 %v711, %v457
  %715 = vrot.lane.b32.xlu0 %v712, 64
  %v716 = vpop.permute.xlu0 %715
  %v718 = vmul.f32 %v711, %v716
  %720 = vrot.lane.b32.xlu0 %v718, 32
  %v721 = vpop.permute.xlu0 %720
  %v723 = vadd.f32 %v713, %v721
  %v724 = vtanh.pop %v723
  %726 = vrot.lane.b32.xlu0 %v724, 64
  %v727 = vpop.permute.xlu0 %726
  %v729 = vmul.f32 %v711, %v727
  %730 = vmatprep.subr.mxu0 0.0
  %731 = vmatpush1.msra.mxu0 0.0
  %732 = vmatprep.subr.mxu0 0.0
  %733 = vmatpush1.msra.mxu0 0.0
  %734 = vmatprep.subr.mxu0 0.0
  %735 = vmatpush1.msra.mxu0 0.0
  %736 = vmatprep.subr.mxu0 0.0
  %737 = vmatpush1.msra.mxu0 0.0
  %738 = vmatprep.subr.mxu0 0.0
  %739 = vmatpush1.msra.mxu0 0.0
  %740 = vmatprep.subr.mxu0 0.0
  %741 = vmatpush1.msra.mxu0 0.0
  %742 = vmatprep.subr.mxu0 0.0
  %743 = vmatpush1.msra.mxu0 0.0
  %744 = vmatprep.subr.mxu0 0.0
  %745 = vmatpush1.msra.mxu0 0.0
  %746 = vmatprep.subr.mxu0 0.0
  %747 = vmatpush1.msra.mxu0 0.0
  %748 = vmatprep.subr.mxu0 0.0
  %749 = vmatpush1.msra.mxu0 0.0
  %750 = vmatprep.subr.mxu0 0.0
  %751 = vmatpush1.msra.mxu0 0.0
  %752 = vmatprep.subr.mxu0 0.0
  %753 = vmatpush1.msra.mxu0 0.0
  %754 = vmatprep.subr.mxu0 0.0
  %755 = vmatpush1.msra.mxu0 %v33
  %756 = vmatprep.subr.mxu0 0.0
  %757 = vmatpush1.msra.mxu0 %v32
  %758 = vmatprep.subr.mxu0 0.0
  %759 = vmatpush1.msra.mxu0 %v31
  %760 = vmatprep.subr.mxu0 0.0
  %761 = vmatpush1.msra.mxu0 %v30
  %762 = vmatprep.subr.mxu0 0.0
  %763 = vmatpush2.msra.mxu0 0.0
  %764 = vmatprep.subr.mxu0 0.0
  %765 = vmatpush2.msra.mxu0 0.0
  %766 = vmatprep.subr.mxu0 0.0
  %767 = vmatpush2.msra.mxu0 0.0
  %768 = vmatprep.subr.mxu0 0.0
  %769 = vmatpush2.msra.mxu0 0.0
  %770 = vmatprep.subr.mxu0 0.0
  %771 = vmatpush2.msra.mxu0 0.0
  %772 = vmatprep.subr.mxu0 0.0
  %773 = vmatpush2.msra.mxu0 0.0
  %774 = vmatprep.subr.mxu0 0.0
  %775 = vmatpush2.msra.mxu0 0.0
  %776 = vmatprep.subr.mxu0 0.0
  %777 = vmatpush2.msra.mxu0 0.0
  %778 = vmatprep.subr.mxu0 0.0
  %779 = vmatpush2.msra.mxu0 0.0
  %780 = vmatprep.subr.mxu0 0.0
  %781 = vmatpush2.msra.mxu0 0.0
  %782 = vmatprep.subr.mxu0 0.0
  %783 = vmatpush2.msra.mxu0 0.0
  %784 = vmatprep.subr.mxu0 0.0
  %785 = vmatpush2.msra.mxu0 0.0
  %786 = vmatprep.subr.mxu0 0.0
  %787 = vmatpush2.msra.mxu0 0.0
  %788 = vmatprep.subr.mxu0 0.0
  %789 = vmatpush2.msra.mxu0 0.0
  %790 = vmatprep.subr.mxu0 0.0
  %791 = vmatpush2.msra.mxu0 0.0
  %792 = vmatprep.subr.mxu0 0.0
  %793 = vmatpush2.msra.mxu0 0.0
  %794 = vmatprep.mubr.f32.mxu0 0.0
  %795 = vmatmul.mubr.f32.gmra.mxu0 %v633
  %v796 = vpop.f32.mrf.mxu0
  %v797 = vadd.f32 0.0, %v796
  %v798 = vpop.f32.mrf.mxu0
  %799 = vdwg.mxu0
  %v800 = vadd.f32 %v43, %v797
  %802 = vrot.lane.b32.xlu0 %v629, 32
  %v803 = vpop.permute.xlu0 %802
  %v804 = vsel %vm72, %v803, 0
  %806 = vmatprep.subr.mxu0 0.0
  %807 = vmatpush1.msra.mxu0 0.0
  %808 = vmatprep.subr.mxu0 0.0
  %809 = vmatpush1.msra.mxu0 0.0
  %810 = vmatprep.subr.mxu0 0.0
  %811 = vmatpush1.msra.mxu0 0.0
  %812 = vmatprep.subr.mxu0 0.0
  %813 = vmatpush1.msra.mxu0 0.0
  %814 = vmatprep.subr.mxu0 0.0
  %815 = vmatpush1.msra.mxu0 0.0
  %816 = vmatprep.subr.mxu0 0.0
  %817 = vmatpush1.msra.mxu0 0.0
  %818 = vmatprep.subr.mxu0 0.0
  %819 = vmatpush1.msra.mxu0 0.0
  %820 = vmatprep.subr.mxu0 0.0
  %821 = vmatpush1.msra.mxu0 0.0
  %822 = vmatprep.subr.mxu0 0.0
  %823 = vmatpush1.msra.mxu0 0.0
  %824 = vmatprep.subr.mxu0 0.0
  %825 = vmatpush1.msra.mxu0 0.0
  %826 = vmatprep.subr.mxu0 0.0
  %827 = vmatpush1.msra.mxu0 0.0
  %828 = vmatprep.subr.mxu0 0.0
  %829 = vmatpush1.msra.mxu0 0.0
  %830 = vmatprep.subr.mxu0 0.0
  %831 = vmatpush1.msra.mxu0 %v37
  %832 = vmatprep.subr.mxu0 0.0
  %833 = vmatpush1.msra.mxu0 %v36
  %834 = vmatprep.subr.mxu0 0.0
  %835 = vmatpush1.msra.mxu0 %v35
  %836 = vmatprep.subr.mxu0 0.0
  %837 = vmatpush1.msra.mxu0 %v34
  %838 = vmatprep.subr.mxu0 0.0
  %839 = vmatpush2.msra.mxu0 0.0
  %840 = vmatprep.subr.mxu0 0.0
  %841 = vmatpush2.msra.mxu0 0.0
  %842 = vmatprep.subr.mxu0 0.0
  %843 = vmatpush2.msra.mxu0 0.0
  %844 = vmatprep.subr.mxu0 0.0
  %845 = vmatpush2.msra.mxu0 0.0
  %846 = vmatprep.subr.mxu0 0.0
  %847 = vmatpush2.msra.mxu0 0.0
  %848 = vmatprep.subr.mxu0 0.0
  %849 = vmatpush2.msra.mxu0 0.0
  %850 = vmatprep.subr.mxu0 0.0
  %851 = vmatpush2.msra.mxu0 0.0
  %852 = vmatprep.subr.mxu0 0.0
  %853 = vmatpush2.msra.mxu0 0.0
  %854 = vmatprep.subr.mxu0 0.0
  %855 = vmatpush2.msra.mxu0 0.0
  %856 = vmatprep.subr.mxu0 0.0
  %857 = vmatpush2.msra.mxu0 0.0
  %858 = vmatprep.subr.mxu0 0.0
  %859 = vmatpush2.msra.mxu0 0.0
  %860 = vmatprep.subr.mxu0 0.0
  %861 = vmatpush2.msra.mxu0 0.0
  %862 = vmatprep.subr.mxu0 0.0
  %863 = vmatpush2.msra.mxu0 0.0
  %864 = vmatprep.subr.mxu0 0.0
  %865 = vmatpush2.msra.mxu0 0.0
  %866 = vmatprep.subr.mxu0 0.0
  %867 = vmatpush2.msra.mxu0 0.0
  %868 = vmatprep.subr.mxu0 0.0
  %869 = vmatpush2.msra.mxu0 0.0
  %870 = vmatprep.mubr.f32.mxu0 0.0
  %871 = vmatmul.mubr.f32.gmra.mxu0 %v804
  %v872 = vpop.f32.mrf.mxu0
  %v873 = vadd.f32 0.0, %v872
  %v874 = vpop.f32.mrf.mxu0
  %875 = vdwg.mxu0
  %v876 = vadd.f32 %v800, %v873
  %v877 = vxor.u32 %v876, 2147483648
  %v878 = vmul.f32 %v877, 1.442695
  %v879 = vpow.pop %v878
  %v880 = vadd.f32 %v879, 1.0
  %v881 = vrcp.pop %v880
  %v882 = vmul.f32 1.0, %v881
  %v883 = vtanh.pop %v876
  %v884 = vmul.f32 %v882, %v623
  %886 = vrot.lane.b32.xlu0 %v883, 64
  %v887 = vpop.permute.xlu0 %886
  %v889 = vmul.f32 %v882, %v887
  %891 = vrot.lane.b32.xlu0 %v889, 32
  %v892 = vpop.permute.xlu0 %891
  %v894 = vadd.f32 %v884, %v892
  %v895 = vtanh.pop %v894
  %897 = vrot.lane.b32.xlu0 %v895, 64
  %v898 = vpop.permute.xlu0 %897
  %v900 = vmul.f32 %v882, %v898
  %902 = vrot.lane.b32.xlu0 %v729, 32
  %v903 = vpop.permute.xlu0 %902
  %v904 = vsel %vm72, %v903, 0
  %906 = vmatprep.subr.mxu0 0.0
  %907 = vmatpush1.msra.mxu0 0.0
  %908 = vmatprep.subr.mxu0 0.0
  %909 = vmatpush1.msra.mxu0 0.0
  %910 = vmatprep.subr.mxu0 0.0
  %911 = vmatpush1.msra.mxu0 0.0
  %912 = vmatprep.subr.mxu0 0.0
  %913 = vmatpush1.msra.mxu0 0.0
  %914 = vmatprep.subr.mxu0 0.0
  %915 = vmatpush1.msra.mxu0 0.0
  %916 = vmatprep.subr.mxu0 0.0
  %917 = vmatpush1.msra.mxu0 0.0
  %918 = vmatprep.subr.mxu0 0.0
  %919 = vmatpush1.msra.mxu0 0.0
  %920 = vmatprep.subr.mxu0 0.0
  %921 = vmatpush1.msra.mxu0 0.0
  %922 = vmatprep.subr.mxu0 0.0
  %923 = vmatpush1.msra.mxu0 0.0
  %924 = vmatprep.subr.mxu0 0.0
  %925 = vmatpush1.msra.mxu0 0.0
  %926 = vmatprep.subr.mxu0 0.0
  %927 = vmatpush1.msra.mxu0 0.0
  %928 = vmatprep.subr.mxu0 0.0
  %929 = vmatpush1.msra.mxu0 0.0
  %930 = vmatprep.subr.mxu0 0.0
  %931 = vmatpush1.msra.mxu0 %v29
  %932 = vmatprep.subr.mxu0 0.0
  %933 = vmatpush1.msra.mxu0 %v28
  %934 = vmatprep.subr.mxu0 0.0
  %935 = vmatpush1.msra.mxu0 %v27
  %936 = vmatprep.subr.mxu0 0.0
  %937 = vmatpush1.msra.mxu0 %v26
  %938 = vmatprep.subr.mxu0 0.0
  %939 = vmatpush2.msra.mxu0 0.0
  %940 = vmatprep.subr.mxu0 0.0
  %941 = vmatpush2.msra.mxu0 0.0
  %942 = vmatprep.subr.mxu0 0.0
  %943 = vmatpush2.msra.mxu0 0.0
  %944 = vmatprep.subr.mxu0 0.0
  %945 = vmatpush2.msra.mxu0 0.0
  %946 = vmatprep.subr.mxu0 0.0
  %947 = vmatpush2.msra.mxu0 0.0
  %948 = vmatprep.subr.mxu0 0.0
  %949 = vmatpush2.msra.mxu0 0.0
  %950 = vmatprep.subr.mxu0 0.0
  %951 = vmatpush2.msra.mxu0 0.0
  %952 = vmatprep.subr.mxu0 0.0
  %953 = vmatpush2.msra.mxu0 0.0
  %954 = vmatprep.subr.mxu0 0.0
  %955 = vmatpush2.msra.mxu0 0.0
  %956 = vmatprep.subr.mxu0 0.0
  %957 = vmatpush2.msra.mxu0 0.0
  %958 = vmatprep.subr.mxu0 0.0
  %959 = vmatpush2.msra.mxu0 0.0
  %960 = vmatprep.subr.mxu0 0.0
  %961 = vmatpush2.msra.mxu0 0.0
  %962 = vmatprep.subr.mxu0 0.0
  %963 = vmatpush2.msra.mxu0 0.0
  %964 = vmatprep.subr.mxu0 0.0
  %965 = vmatpush2.msra.mxu0 0.0
  %966 = vmatprep.subr.mxu0 0.0
  %967 = vmatpush2.msra.mxu0 0.0
  %968 = vmatprep.subr.mxu0 0.0
  %969 = vmatpush2.msra.mxu0 0.0
  %970 = vmatprep.mubr.f32.mxu0 0.0
  %971 = vmatmul.mubr.f32.gmra.mxu0 %v904
  %v972 = vpop.f32.mrf.mxu0
  %v973 = vadd.f32 0.0, %v972
  %v974 = vpop.f32.mrf.mxu0
  %975 = vdwg.mxu0
  %v976 = vadd.f32 %v203, %v973
  %v977 = vxor.u32 %v976, 2147483648
  %v978 = vmul.f32 %v977, 1.442695
  %v979 = vpow.pop %v978
  %v980 = vadd.f32 %v979, 1.0
  %v981 = vrcp.pop %v980
  %v982 = vmul.f32 1.0, %v981
  %v983 = vtanh.pop %v976
  %v984 = vmul.f32 %v982, %v723
  %986 = vrot.lane.b32.xlu0 %v983, 64
  %v987 = vpop.permute.xlu0 %986
  %v989 = vmul.f32 %v982, %v987
  %991 = vrot.lane.b32.xlu0 %v989, 32
  %v992 = vpop.permute.xlu0 %991
  %v994 = vadd.f32 %v984, %v992
  %v995 = vtanh.pop %v994
  %997 = vrot.lane.b32.xlu0 %v995, 64
  %v998 = vpop.permute.xlu0 %997
  %v1000 = vmul.f32 %v982, %v998
  %1001 = vmatprep.subr.mxu0 0.0
  %1002 = vmatpush1.msra.mxu0 0.0
  %1003 = vmatprep.subr.mxu0 0.0
  %1004 = vmatpush1.msra.mxu0 0.0
  %1005 = vmatprep.subr.mxu0 0.0
  %1006 = vmatpush1.msra.mxu0 0.0
  %1007 = vmatprep.subr.mxu0 0.0
  %1008 = vmatpush1.msra.mxu0 0.0
  %1009 = vmatprep.subr.mxu0 0.0
  %1010 = vmatpush1.msra.mxu0 0.0
  %1011 = vmatprep.subr.mxu0 0.0
  %1012 = vmatpush1.msra.mxu0 0.0
  %1013 = vmatprep.subr.mxu0 0.0
  %1014 = vmatpush1.msra.mxu0 0.0
  %1015 = vmatprep.subr.mxu0 0.0
  %1016 = vmatpush1.msra.mxu0 0.0
  %1017 = vmatprep.subr.mxu0 0.0
  %1018 = vmatpush1.msra.mxu0 0.0
  %1019 = vmatprep.subr.mxu0 0.0
  %1020 = vmatpush1.msra.mxu0 0.0
  %1021 = vmatprep.subr.mxu0 0.0
  %1022 = vmatpush1.msra.mxu0 0.0
  %1023 = vmatprep.subr.mxu0 0.0
  %1024 = vmatpush1.msra.mxu0 0.0
  %1025 = vmatprep.subr.mxu0 0.0
  %1026 = vmatpush1.msra.mxu0 %v33
  %1027 = vmatprep.subr.mxu0 0.0
  %1028 = vmatpush1.msra.mxu0 %v32
  %1029 = vmatprep.subr.mxu0 0.0
  %1030 = vmatpush1.msra.mxu0 %v31
  %1031 = vmatprep.subr.mxu0 0.0
  %1032 = vmatpush1.msra.mxu0 %v30
  %1033 = vmatprep.subr.mxu0 0.0
  %1034 = vmatpush2.msra.mxu0 0.0
  %1035 = vmatprep.subr.mxu0 0.0
  %1036 = vmatpush2.msra.mxu0 0.0
  %1037 = vmatprep.subr.mxu0 0.0
  %1038 = vmatpush2.msra.mxu0 0.0
  %1039 = vmatprep.subr.mxu0 0.0
  %1040 = vmatpush2.msra.mxu0 0.0
  %1041 = vmatprep.subr.mxu0 0.0
  %1042 = vmatpush2.msra.mxu0 0.0
  %1043 = vmatprep.subr.mxu0 0.0
  %1044 = vmatpush2.msra.mxu0 0.0
  %1045 = vmatprep.subr.mxu0 0.0
  %1046 = vmatpush2.msra.mxu0 0.0
  %1047 = vmatprep.subr.mxu0 0.0
  %1048 = vmatpush2.msra.mxu0 0.0
  %1049 = vmatprep.subr.mxu0 0.0
  %1050 = vmatpush2.msra.mxu0 0.0
  %1051 = vmatprep.subr.mxu0 0.0
  %1052 = vmatpush2.msra.mxu0 0.0
  %1053 = vmatprep.subr.mxu0 0.0
  %1054 = vmatpush2.msra.mxu0 0.0
  %1055 = vmatprep.subr.mxu0 0.0
  %1056 = vmatpush2.msra.mxu0 0.0
  %1057 = vmatprep.subr.mxu0 0.0
  %1058 = vmatpush2.msra.mxu0 0.0
  %1059 = vmatprep.subr.mxu0 0.0
  %1060 = vmatpush2.msra.mxu0 0.0
  %1061 = vmatprep.subr.mxu0 0.0
  %1062 = vmatpush2.msra.mxu0 0.0
  %1063 = vmatprep.subr.mxu0 0.0
  %1064 = vmatpush2.msra.mxu0 0.0
  %1065 = vmatprep.mubr.f32.mxu0 0.0
  %1066 = vmatmul.mubr.f32.gmra.mxu0 %v904
  %v1067 = vpop.f32.mrf.mxu0
  %v1068 = vadd.f32 0.0, %v1067
  %v1069 = vpop.f32.mrf.mxu0
  %1070 = vdwg.mxu0
  %v1071 = vadd.f32 %v43, %v1068
  %1073 = vrot.lane.b32.xlu0 %v900, 32
  %v1074 = vpop.permute.xlu0 %1073
  %v1075 = vsel %vm72, %v1074, 0
  %1077 = vmatprep.subr.mxu0 0.0
  %1078 = vmatpush1.msra.mxu0 0.0
  %1079 = vmatprep.subr.mxu0 0.0
  %1080 = vmatpush1.msra.mxu0 0.0
  %1081 = vmatprep.subr.mxu0 0.0
  %1082 = vmatpush1.msra.mxu0 0.0
  %1083 = vmatprep.subr.mxu0 0.0
  %1084 = vmatpush1.msra.mxu0 0.0
  %1085 = vmatprep.subr.mxu0 0.0
  %1086 = vmatpush1.msra.mxu0 0.0
  %1087 = vmatprep.subr.mxu0 0.0
  %1088 = vmatpush1.msra.mxu0 0.0
  %1089 = vmatprep.subr.mxu0 0.0
  %1090 = vmatpush1.msra.mxu0 0.0
  %1091 = vmatprep.subr.mxu0 0.0
  %1092 = vmatpush1.msra.mxu0 0.0
  %1093 = vmatprep.subr.mxu0 0.0
  %1094 = vmatpush1.msra.mxu0 0.0
  %1095 = vmatprep.subr.mxu0 0.0
  %1096 = vmatpush1.msra.mxu0 0.0
  %1097 = vmatprep.subr.mxu0 0.0
  %1098 = vmatpush1.msra.mxu0 0.0
  %1099 = vmatprep.subr.mxu0 0.0
  %1100 = vmatpush1.msra.mxu0 0.0
  %1101 = vmatprep.subr.mxu0 0.0
  %1102 = vmatpush1.msra.mxu0 %v37
  %1103 = vmatprep.subr.mxu0 0.0
  %1104 = vmatpush1.msra.mxu0 %v36
  %1105 = vmatprep.subr.mxu0 0.0
  %1106 = vmatpush1.msra.mxu0 %v35
  %1107 = vmatprep.subr.mxu0 0.0
  %1108 = vmatpush1.msra.mxu0 %v34
  %1109 = vmatprep.subr.mxu0 0.0
  %1110 = vmatpush2.msra.mxu0 0.0
  %1111 = vmatprep.subr.mxu0 0.0
  %1112 = vmatpush2.msra.mxu0 0.0
  %1113 = vmatprep.subr.mxu0 0.0
  %1114 = vmatpush2.msra.mxu0 0.0
  %1115 = vmatprep.subr.mxu0 0.0
  %1116 = vmatpush2.msra.mxu0 0.0
  %1117 = vmatprep.subr.mxu0 0.0
  %1118 = vmatpush2.msra.mxu0 0.0
  %1119 = vmatprep.subr.mxu0 0.0
  %1120 = vmatpush2.msra.mxu0 0.0
  %1121 = vmatprep.subr.mxu0 0.0
  %1122 = vmatpush2.msra.mxu0 0.0
  %1123 = vmatprep.subr.mxu0 0.0
  %1124 = vmatpush2.msra.mxu0 0.0
  %1125 = vmatprep.subr.mxu0 0.0
  %1126 = vmatpush2.msra.mxu0 0.0
  %1127 = vmatprep.subr.mxu0 0.0
  %1128 = vmatpush2.msra.mxu0 0.0
  %1129 = vmatprep.subr.mxu0 0.0
  %1130 = vmatpush2.msra.mxu0 0.0
  %1131 = vmatprep.subr.mxu0 0.0
  %1132 = vmatpush2.msra.mxu0 0.0
  %1133 = vmatprep.subr.mxu0 0.0
  %1134 = vmatpush2.msra.mxu0 0.0
  %1135 = vmatprep.subr.mxu0 0.0
  %1136 = vmatpush2.msra.mxu0 0.0
  %1137 = vmatprep.subr.mxu0 0.0
  %1138 = vmatpush2.msra.mxu0 0.0
  %1139 = vmatprep.subr.mxu0 0.0
  %1140 = vmatpush2.msra.mxu0 0.0
  %1141 = vmatprep.mubr.f32.mxu0 0.0
  %1142 = vmatmul.mubr.f32.gmra.mxu0 %v1075
  %v1143 = vpop.f32.mrf.mxu0
  %v1144 = vadd.f32 0.0, %v1143
  %v1145 = vpop.f32.mrf.mxu0
  %1146 = vdwg.mxu0
  %v1147 = vadd.f32 %v1071, %v1144
  %v1148 = vxor.u32 %v1147, 2147483648
  %v1149 = vmul.f32 %v1148, 1.442695
  %v1150 = vpow.pop %v1149
  %v1151 = vadd.f32 %v1150, 1.0
  %v1152 = vrcp.pop %v1151
  %v1153 = vmul.f32 1.0, %v1152
  %v1154 = vtanh.pop %v1147
  %v1155 = vmul.f32 %v1153, %v894
  %1157 = vrot.lane.b32.xlu0 %v1154, 64
  %v1158 = vpop.permute.xlu0 %1157
  %v1160 = vmul.f32 %v1153, %v1158
  %1162 = vrot.lane.b32.xlu0 %v1160, 32
  %v1163 = vpop.permute.xlu0 %1162
  %v1165 = vadd.f32 %v1155, %v1163
  %v1166 = vtanh.pop %v1165
  %1168 = vrot.lane.b32.xlu0 %v1166, 64
  %v1169 = vpop.permute.xlu0 %1168
  %v1171 = vmul.f32 %v1153, %v1169
  %1173 = vrot.lane.b32.xlu0 %v1000, 32
  %v1174 = vpop.permute.xlu0 %1173
  %v1175 = vsel %vm72, %v1174, 0
  %1177 = vmatprep.subr.mxu0 0.0
  %1178 = vmatpush1.msra.mxu0 0.0
  %1179 = vmatprep.subr.mxu0 0.0
  %1180 = vmatpush1.msra.mxu0 0.0
  %1181 = vmatprep.subr.mxu0 0.0
  %1182 = vmatpush1.msra.mxu0 0.0
  %1183 = vmatprep.subr.mxu0 0.0
  %1184 = vmatpush1.msra.mxu0 0.0
  %1185 = vmatprep.subr.mxu0 0.0
  %1186 = vmatpush1.msra.mxu0 0.0
  %1187 = vmatprep.subr.mxu0 0.0
  %1188 = vmatpush1.msra.mxu0 0.0
  %1189 = vmatprep.subr.mxu0 0.0
  %1190 = vmatpush1.msra.mxu0 0.0
  %1191 = vmatprep.subr.mxu0 0.0
  %1192 = vmatpush1.msra.mxu0 0.0
  %1193 = vmatprep.subr.mxu0 0.0
  %1194 = vmatpush1.msra.mxu0 0.0
  %1195 = vmatprep.subr.mxu0 0.0
  %1196 = vmatpush1.msra.mxu0 0.0
  %1197 = vmatprep.subr.mxu0 0.0
  %1198 = vmatpush1.msra.mxu0 0.0
  %1199 = vmatprep.subr.mxu0 0.0
  %1200 = vmatpush1.msra.mxu0 0.0
  %1201 = vmatprep.subr.mxu0 0.0
  %1202 = vmatpush1.msra.mxu0 %v29
  %1203 = vmatprep.subr.mxu0 0.0
  %1204 = vmatpush1.msra.mxu0 %v28
  %1205 = vmatprep.subr.mxu0 0.0
  %1206 = vmatpush1.msra.mxu0 %v27
  %1207 = vmatprep.subr.mxu0 0.0
  %1208 = vmatpush1.msra.mxu0 %v26
  %1209 = vmatprep.subr.mxu0 0.0
  %1210 = vmatpush2.msra.mxu0 0.0
  %1211 = vmatprep.subr.mxu0 0.0
  %1212 = vmatpush2.msra.mxu0 0.0
  %1213 = vmatprep.subr.mxu0 0.0
  %1214 = vmatpush2.msra.mxu0 0.0
  %1215 = vmatprep.subr.mxu0 0.0
  %1216 = vmatpush2.msra.mxu0 0.0
  %1217 = vmatprep.subr.mxu0 0.0
  %1218 = vmatpush2.msra.mxu0 0.0
  %1219 = vmatprep.subr.mxu0 0.0
  %1220 = vmatpush2.msra.mxu0 0.0
  %1221 = vmatprep.subr.mxu0 0.0
  %1222 = vmatpush2.msra.mxu0 0.0
  %1223 = vmatprep.subr.mxu0 0.0
  %1224 = vmatpush2.msra.mxu0 0.0
  %1225 = vmatprep.subr.mxu0 0.0
  %1226 = vmatpush2.msra.mxu0 0.0
  %1227 = vmatprep.subr.mxu0 0.0
  %1228 = vmatpush2.msra.mxu0 0.0
  %1229 = vmatprep.subr.mxu0 0.0
  %1230 = vmatpush2.msra.mxu0 0.0
  %1231 = vmatprep.subr.mxu0 0.0
  %1232 = vmatpush2.msra.mxu0 0.0
  %1233 = vmatprep.subr.mxu0 0.0
  %1234 = vmatpush2.msra.mxu0 0.0
  %1235 = vmatprep.subr.mxu0 0.0
  %1236 = vmatpush2.msra.mxu0 0.0
  %1237 = vmatprep.subr.mxu0 0.0
  %1238 = vmatpush2.msra.mxu0 0.0
  %1239 = vmatprep.subr.mxu0 0.0
  %1240 = vmatpush2.msra.mxu0 0.0
  %1241 = vmatprep.mubr.f32.mxu0 0.0
  %1242 = vmatmul.mubr.f32.gmra.mxu0 %v1175
  %v1243 = vpop.f32.mrf.mxu0
  %v1244 = vadd.f32 0.0, %v1243
  %v1245 = vpop.f32.mrf.mxu0
  %1246 = vdwg.mxu0
  %v1247 = vadd.f32 %v208, %v1244
  %v1248 = vxor.u32 %v1247, 2147483648
  %v1249 = vmul.f32 %v1248, 1.442695
  %v1250 = vpow.pop %v1249
  %v1251 = vadd.f32 %v1250, 1.0
  %v1252 = vrcp.pop %v1251
  %v1253 = vmul.f32 1.0, %v1252
  %v1254 = vtanh.pop %v1247
  %v1255 = vmul.f32 %v1253, %v994
  %1257 = vrot.lane.b32.xlu0 %v1254, 64
  %v1258 = vpop.permute.xlu0 %1257
  %v1260 = vmul.f32 %v1253, %v1258
  %1262 = vrot.lane.b32.xlu0 %v1260, 32
  %v1263 = vpop.permute.xlu0 %1262
  %v1265 = vadd.f32 %v1255, %v1263
  %v1266 = vtanh.pop %v1265
  %1268 = vrot.lane.b32.xlu0 %v1266, 64
  %v1269 = vpop.permute.xlu0 %1268
  %v1271 = vmul.f32 %v1253, %v1269
  %1272 = vmatprep.subr.mxu0 0.0
  %1273 = vmatpush1.msra.mxu0 0.0
  %1274 = vmatprep.subr.mxu0 0.0
  %1275 = vmatpush1.msra.mxu0 0.0
  %1276 = vmatprep.subr.mxu0 0.0
  %1277 = vmatpush1.msra.mxu0 0.0
  %1278 = vmatprep.subr.mxu0 0.0
  %1279 = vmatpush1.msra.mxu0 0.0
  %1280 = vmatprep.subr.mxu0 0.0
  %1281 = vmatpush1.msra.mxu0 0.0
  %1282 = vmatprep.subr.mxu0 0.0
  %1283 = vmatpush1.msra.mxu0 0.0
  %1284 = vmatprep.subr.mxu0 0.0
  %1285 = vmatpush1.msra.mxu0 0.0
  %1286 = vmatprep.subr.mxu0 0.0
  %1287 = vmatpush1.msra.mxu0 0.0
  %1288 = vmatprep.subr.mxu0 0.0
  %1289 = vmatpush1.msra.mxu0 0.0
  %1290 = vmatprep.subr.mxu0 0.0
  %1291 = vmatpush1.msra.mxu0 0.0
  %1292 = vmatprep.subr.mxu0 0.0
  %1293 = vmatpush1.msra.mxu0 0.0
  %1294 = vmatprep.subr.mxu0 0.0
  %1295 = vmatpush1.msra.mxu0 0.0
  %1296 = vmatprep.subr.mxu0 0.0
  %1297 = vmatpush1.msra.mxu0 %v33
  %1298 = vmatprep.subr.mxu0 0.0
  %1299 = vmatpush1.msra.mxu0 %v32
  %1300 = vmatprep.subr.mxu0 0.0
  %1301 = vmatpush1.msra.mxu0 %v31
  %1302 = vmatprep.subr.mxu0 0.0
  %1303 = vmatpush1.msra.mxu0 %v30
  %1304 = vmatprep.subr.mxu0 0.0
  %1305 = vmatpush2.msra.mxu0 0.0
  %1306 = vmatprep.subr.mxu0 0.0
  %1307 = vmatpush2.msra.mxu0 0.0
  %1308 = vmatprep.subr.mxu0 0.0
  %1309 = vmatpush2.msra.mxu0 0.0
  %1310 = vmatprep.subr.mxu0 0.0
  %1311 = vmatpush2.msra.mxu0 0.0
  %1312 = vmatprep.subr.mxu0 0.0
  %1313 = vmatpush2.msra.mxu0 0.0
  %1314 = vmatprep.subr.mxu0 0.0
  %1315 = vmatpush2.msra.mxu0 0.0
  %1316 = vmatprep.subr.mxu0 0.0
  %1317 = vmatpush2.msra.mxu0 0.0
  %1318 = vmatprep.subr.mxu0 0.0
  %1319 = vmatpush2.msra.mxu0 0.0
  %1320 = vmatprep.subr.mxu0 0.0
  %1321 = vmatpush2.msra.mxu0 0.0
  %1322 = vmatprep.subr.mxu0 0.0
  %1323 = vmatpush2.msra.mxu0 0.0
  %1324 = vmatprep.subr.mxu0 0.0
  %1325 = vmatpush2.msra.mxu0 0.0
  %1326 = vmatprep.subr.mxu0 0.0
  %1327 = vmatpush2.msra.mxu0 0.0
  %1328 = vmatprep.subr.mxu0 0.0
  %1329 = vmatpush2.msra.mxu0 0.0
  %1330 = vmatprep.subr.mxu0 0.0
  %1331 = vmatpush2.msra.mxu0 0.0
  %1332 = vmatprep.subr.mxu0 0.0
  %1333 = vmatpush2.msra.mxu0 0.0
  %1334 = vmatprep.subr.mxu0 0.0
  %1335 = vmatpush2.msra.mxu0 0.0
  %1336 = vmatprep.mubr.f32.mxu0 0.0
  %1337 = vmatmul.mubr.f32.gmra.mxu0 %v1175
  %v1338 = vpop.f32.mrf.mxu0
  %v1339 = vadd.f32 0.0, %v1338
  %v1340 = vpop.f32.mrf.mxu0
  %1341 = vdwg.mxu0
  %v1342 = vadd.f32 %v43, %v1339
  %1344 = vrot.lane.b32.xlu0 %v1171, 32
  %v1345 = vpop.permute.xlu0 %1344
  %v1346 = vsel %vm72, %v1345, 0
  %1348 = vmatprep.subr.mxu0 0.0
  %1349 = vmatpush1.msra.mxu0 0.0
  %1350 = vmatprep.subr.mxu0 0.0
  %1351 = vmatpush1.msra.mxu0 0.0
  %1352 = vmatprep.subr.mxu0 0.0
  %1353 = vmatpush1.msra.mxu0 0.0
  %1354 = vmatprep.subr.mxu0 0.0
  %1355 = vmatpush1.msra.mxu0 0.0
  %1356 = vmatprep.subr.mxu0 0.0
  %1357 = vmatpush1.msra.mxu0 0.0
  %1358 = vmatprep.subr.mxu0 0.0
  %1359 = vmatpush1.msra.mxu0 0.0
  %1360 = vmatprep.subr.mxu0 0.0
  %1361 = vmatpush1.msra.mxu0 0.0
  %1362 = vmatprep.subr.mxu0 0.0
  %1363 = vmatpush1.msra.mxu0 0.0
  %1364 = vmatprep.subr.mxu0 0.0
  %1365 = vmatpush1.msra.mxu0 0.0
  %1366 = vmatprep.subr.mxu0 0.0
  %1367 = vmatpush1.msra.mxu0 0.0
  %1368 = vmatprep.subr.mxu0 0.0
  %1369 = vmatpush1.msra.mxu0 0.0
  %1370 = vmatprep.subr.mxu0 0.0
  %1371 = vmatpush1.msra.mxu0 0.0
  %1372 = vmatprep.subr.mxu0 0.0
  %1373 = vmatpush1.msra.mxu0 %v37
  %1374 = vmatprep.subr.mxu0 0.0
  %1375 = vmatpush1.msra.mxu0 %v36
  %1376 = vmatprep.subr.mxu0 0.0
  %1377 = vmatpush1.msra.mxu0 %v35
  %1378 = vmatprep.subr.mxu0 0.0
  %1379 = vmatpush1.msra.mxu0 %v34
  %1380 = vmatprep.subr.mxu0 0.0
  %1381 = vmatpush2.msra.mxu0 0.0
  %1382 = vmatprep.subr.mxu0 0.0
  %1383 = vmatpush2.msra.mxu0 0.0
  %1384 = vmatprep.subr.mxu0 0.0
  %1385 = vmatpush2.msra.mxu0 0.0
  %1386 = vmatprep.subr.mxu0 0.0
  %1387 = vmatpush2.msra.mxu0 0.0
  %1388 = vmatprep.subr.mxu0 0.0
  %1389 = vmatpush2.msra.mxu0 0.0
  %1390 = vmatprep.subr.mxu0 0.0
  %1391 = vmatpush2.msra.mxu0 0.0
  %1392 = vmatprep.subr.mxu0 0.0
  %1393 = vmatpush2.msra.mxu0 0.0
  %1394 = vmatprep.subr.mxu0 0.0
  %1395 = vmatpush2.msra.mxu0 0.0
  %1396 = vmatprep.subr.mxu0 0.0
  %1397 = vmatpush2.msra.mxu0 0.0
  %1398 = vmatprep.subr.mxu0 0.0
  %1399 = vmatpush2.msra.mxu0 0.0
  %1400 = vmatprep.subr.mxu0 0.0
  %1401 = vmatpush2.msra.mxu0 0.0
  %1402 = vmatprep.subr.mxu0 0.0
  %1403 = vmatpush2.msra.mxu0 0.0
  %1404 = vmatprep.subr.mxu0 0.0
  %1405 = vmatpush2.msra.mxu0 0.0
  %1406 = vmatprep.subr.mxu0 0.0
  %1407 = vmatpush2.msra.mxu0 0.0
  %1408 = vmatprep.subr.mxu0 0.0
  %1409 = vmatpush2.msra.mxu0 0.0
  %1410 = vmatprep.subr.mxu0 0.0
  %1411 = vmatpush2.msra.mxu0 0.0
  %1412 = vmatprep.mubr.f32.mxu0 0.0
  %1413 = vmatmul.mubr.f32.gmra.mxu0 %v1346
  %v1414 = vpop.f32.mrf.mxu0
  %v1415 = vadd.f32 0.0, %v1414
  %v1416 = vpop.f32.mrf.mxu0
  %1417 = vdwg.mxu0
  %v1418 = vadd.f32 %v1342, %v1415
  %v1419 = vxor.u32 %v1418, 2147483648
  %v1420 = vmul.f32 %v1419, 1.442695
  %v1421 = vpow.pop %v1420
  %v1422 = vadd.f32 %v1421, 1.0
  %v1423 = vrcp.pop %v1422
  %v1424 = vmul.f32 1.0, %v1423
  %v1425 = vtanh.pop %v1418
  %v1426 = vmul.f32 %v1424, %v1165
  %1428 = vrot.lane.b32.xlu0 %v1425, 64
  %v1429 = vpop.permute.xlu0 %1428
  %v1431 = vmul.f32 %v1424, %v1429
  %1433 = vrot.lane.b32.xlu0 %v1431, 32
  %v1434 = vpop.permute.xlu0 %1433
  %v1436 = vadd.f32 %v1426, %v1434
  %v1437 = vtanh.pop %v1436
  %1439 = vrot.lane.b32.xlu0 %v1437, 64
  %v1440 = vpop.permute.xlu0 %1439
  %v1442 = vmul.f32 %v1424, %v1440
  %1444 = vrot.lane.b32.xlu0 %v1271, 32
  %v1445 = vpop.permute.xlu0 %1444
  %v1446 = vsel %vm72, %v1445, 0
  %1448 = vmatprep.subr.mxu0 0.0
  %1449 = vmatpush1.msra.mxu0 0.0
  %1450 = vmatprep.subr.mxu0 0.0
  %1451 = vmatpush1.msra.mxu0 0.0
  %1452 = vmatprep.subr.mxu0 0.0
  %1453 = vmatpush1.msra.mxu0 0.0
  %1454 = vmatprep.subr.mxu0 0.0
  %1455 = vmatpush1.msra.mxu0 0.0
  %1456 = vmatprep.subr.mxu0 0.0
  %1457 = vmatpush1.msra.mxu0 0.0
  %1458 = vmatprep.subr.mxu0 0.0
  %1459 = vmatpush1.msra.mxu0 0.0
  %1460 = vmatprep.subr.mxu0 0.0
  %1461 = vmatpush1.msra.mxu0 0.0
  %1462 = vmatprep.subr.mxu0 0.0
  %1463 = vmatpush1.msra.mxu0 0.0
  %1464 = vmatprep.subr.mxu0 0.0
  %1465 = vmatpush1.msra.mxu0 0.0
  %1466 = vmatprep.subr.mxu0 0.0
  %1467 = vmatpush1.msra.mxu0 0.0
  %1468 = vmatprep.subr.mxu0 0.0
  %1469 = vmatpush1.msra.mxu0 0.0
  %1470 = vmatprep.subr.mxu0 0.0
  %1471 = vmatpush1.msra.mxu0 0.0
  %1472 = vmatprep.subr.mxu0 0.0
  %1473 = vmatpush1.msra.mxu0 %v29
  %1474 = vmatprep.subr.mxu0 0.0
  %1475 = vmatpush1.msra.mxu0 %v28
  %1476 = vmatprep.subr.mxu0 0.0
  %1477 = vmatpush1.msra.mxu0 %v27
  %1478 = vmatprep.subr.mxu0 0.0
  %1479 = vmatpush1.msra.mxu0 %v26
  %1480 = vmatprep.subr.mxu0 0.0
  %1481 = vmatpush2.msra.mxu0 0.0
  %1482 = vmatprep.subr.mxu0 0.0
  %1483 = vmatpush2.msra.mxu0 0.0
  %1484 = vmatprep.subr.mxu0 0.0
  %1485 = vmatpush2.msra.mxu0 0.0
  %1486 = vmatprep.subr.mxu0 0.0
  %1487 = vmatpush2.msra.mxu0 0.0
  %1488 = vmatprep.subr.mxu0 0.0
  %1489 = vmatpush2.msra.mxu0 0.0
  %1490 = vmatprep.subr.mxu0 0.0
  %1491 = vmatpush2.msra.mxu0 0.0
  %1492 = vmatprep.subr.mxu0 0.0
  %1493 = vmatpush2.msra.mxu0 0.0
  %1494 = vmatprep.subr.mxu0 0.0
  %1495 = vmatpush2.msra.mxu0 0.0
  %1496 = vmatprep.subr.mxu0 0.0
  %1497 = vmatpush2.msra.mxu0 0.0
  %1498 = vmatprep.subr.mxu0 0.0
  %1499 = vmatpush2.msra.mxu0 0.0
  %1500 = vmatprep.subr.mxu0 0.0
  %1501 = vmatpush2.msra.mxu0 0.0
  %1502 = vmatprep.subr.mxu0 0.0
  %1503 = vmatpush2.msra.mxu0 0.0
  %1504 = vmatprep.subr.mxu0 0.0
  %1505 = vmatpush2.msra.mxu0 0.0
  %1506 = vmatprep.subr.mxu0 0.0
  %1507 = vmatpush2.msra.mxu0 0.0
  %1508 = vmatprep.subr.mxu0 0.0
  %1509 = vmatpush2.msra.mxu0 0.0
  %1510 = vmatprep.subr.mxu0 0.0
  %1511 = vmatpush2.msra.mxu0 0.0
  %1512 = vmatprep.mubr.f32.mxu0 0.0
  %1513 = vmatmul.mubr.f32.gmra.mxu0 %v1446
  %v1514 = vpop.f32.mrf.mxu0
  %v1515 = vadd.f32 0.0, %v1514
  %v1516 = vpop.f32.mrf.mxu0
  %1517 = vdwg.mxu0
  %v1518 = vadd.f32 %v213, %v1515
  %v1519 = vxor.u32 %v1518, 2147483648
  %v1520 = vmul.f32 %v1519, 1.442695
  %v1521 = vpow.pop %v1520
  %v1522 = vadd.f32 %v1521, 1.0
  %v1523 = vrcp.pop %v1522
  %v1524 = vmul.f32 1.0, %v1523
  %v1525 = vtanh.pop %v1518
  %v1526 = vmul.f32 %v1524, %v1265
  %1528 = vrot.lane.b32.xlu0 %v1525, 64
  %v1529 = vpop.permute.xlu0 %1528
  %v1531 = vmul.f32 %v1524, %v1529
  %1533 = vrot.lane.b32.xlu0 %v1531, 32
  %v1534 = vpop.permute.xlu0 %1533
  %v1536 = vadd.f32 %v1526, %v1534
  %v1537 = vtanh.pop %v1536
  %1539 = vrot.lane.b32.xlu0 %v1537, 64
  %v1540 = vpop.permute.xlu0 %1539
  %v1542 = vmul.f32 %v1524, %v1540
  %1543 = vmatprep.subr.mxu0 0.0
  %1544 = vmatpush1.msra.mxu0 0.0
  %1545 = vmatprep.subr.mxu0 0.0
  %1546 = vmatpush1.msra.mxu0 0.0
  %1547 = vmatprep.subr.mxu0 0.0
  %1548 = vmatpush1.msra.mxu0 0.0
  %1549 = vmatprep.subr.mxu0 0.0
  %1550 = vmatpush1.msra.mxu0 0.0
  %1551 = vmatprep.subr.mxu0 0.0
  %1552 = vmatpush1.msra.mxu0 0.0
  %1553 = vmatprep.subr.mxu0 0.0
  %1554 = vmatpush1.msra.mxu0 0.0
  %1555 = vmatprep.subr.mxu0 0.0
  %1556 = vmatpush1.msra.mxu0 0.0
  %1557 = vmatprep.subr.mxu0 0.0
  %1558 = vmatpush1.msra.mxu0 0.0
  %1559 = vmatprep.subr.mxu0 0.0
  %1560 = vmatpush1.msra.mxu0 0.0
  %1561 = vmatprep.subr.mxu0 0.0
  %1562 = vmatpush1.msra.mxu0 0.0
  %1563 = vmatprep.subr.mxu0 0.0
  %1564 = vmatpush1.msra.mxu0 0.0
  %1565 = vmatprep.subr.mxu0 0.0
  %1566 = vmatpush1.msra.mxu0 0.0
  %1567 = vmatprep.subr.mxu0 0.0
  %1568 = vmatpush1.msra.mxu0 %v33
  %1569 = vmatprep.subr.mxu0 0.0
  %1570 = vmatpush1.msra.mxu0 %v32
  %1571 = vmatprep.subr.mxu0 0.0
  %1572 = vmatpush1.msra.mxu0 %v31
  %1573 = vmatprep.subr.mxu0 0.0
  %1574 = vmatpush1.msra.mxu0 %v30
  %1575 = vmatprep.subr.mxu0 0.0
  %1576 = vmatpush2.msra.mxu0 0.0
  %1577 = vmatprep.subr.mxu0 0.0
  %1578 = vmatpush2.msra.mxu0 0.0
  %1579 = vmatprep.subr.mxu0 0.0
  %1580 = vmatpush2.msra.mxu0 0.0
  %1581 = vmatprep.subr.mxu0 0.0
  %1582 = vmatpush2.msra.mxu0 0.0
  %1583 = vmatprep.subr.mxu0 0.0
  %1584 = vmatpush2.msra.mxu0 0.0
  %1585 = vmatprep.subr.mxu0 0.0
  %1586 = vmatpush2.msra.mxu0 0.0
  %1587 = vmatprep.subr.mxu0 0.0
  %1588 = vmatpush2.msra.mxu0 0.0
  %1589 = vmatprep.subr.mxu0 0.0
  %1590 = vmatpush2.msra.mxu0 0.0
  %1591 = vmatprep.subr.mxu0 0.0
  %1592 = vmatpush2.msra.mxu0 0.0
  %1593 = vmatprep.subr.mxu0 0.0
  %1594 = vmatpush2.msra.mxu0 0.0
  %1595 = vmatprep.subr.mxu0 0.0
  %1596 = vmatpush2.msra.mxu0 0.0
  %1597 = vmatprep.subr.mxu0 0.0
  %1598 = vmatpush2.msra.mxu0 0.0
  %1599 = vmatprep.subr.mxu0 0.0
  %1600 = vmatpush2.msra.mxu0 0.0
  %1601 = vmatprep.subr.mxu0 0.0
  %1602 = vmatpush2.msra.mxu0 0.0
  %1603 = vmatprep.subr.mxu0 0.0
  %1604 = vmatpush2.msra.mxu0 0.0
  %1605 = vmatprep.subr.mxu0 0.0
  %1606 = vmatpush2.msra.mxu0 0.0
  %1607 = vmatprep.mubr.f32.mxu0 0.0
  %1608 = vmatmul.mubr.f32.gmra.mxu0 %v1446
  %v1609 = vpop.f32.mrf.mxu0
  %v1610 = vadd.f32 0.0, %v1609
  %v1611 = vpop.f32.mrf.mxu0
  %1612 = vdwg.mxu0
  %v1613 = vadd.f32 %v43, %v1610
  %1615 = vrot.lane.b32.xlu0 %v1442, 32
  %v1616 = vpop.permute.xlu0 %1615
  %v1617 = vsel %vm72, %v1616, 0
  %1619 = vmatprep.subr.mxu0 0.0
  %1620 = vmatpush1.msra.mxu0 0.0
  %1621 = vmatprep.subr.mxu0 0.0
  %1622 = vmatpush1.msra.mxu0 0.0
  %1623 = vmatprep.subr.mxu0 0.0
  %1624 = vmatpush1.msra.mxu0 0.0
  %1625 = vmatprep.subr.mxu0 0.0
  %1626 = vmatpush1.msra.mxu0 0.0
  %1627 = vmatprep.subr.mxu0 0.0
  %1628 = vmatpush1.msra.mxu0 0.0
  %1629 = vmatprep.subr.mxu0 0.0
  %1630 = vmatpush1.msra.mxu0 0.0
  %1631 = vmatprep.subr.mxu0 0.0
  %1632 = vmatpush1.msra.mxu0 0.0
  %1633 = vmatprep.subr.mxu0 0.0
  %1634 = vmatpush1.msra.mxu0 0.0
  %1635 = vmatprep.subr.mxu0 0.0
  %1636 = vmatpush1.msra.mxu0 0.0
  %1637 = vmatprep.subr.mxu0 0.0
  %1638 = vmatpush1.msra.mxu0 0.0
  %1639 = vmatprep.subr.mxu0 0.0
  %1640 = vmatpush1.msra.mxu0 0.0
  %1641 = vmatprep.subr.mxu0 0.0
  %1642 = vmatpush1.msra.mxu0 0.0
  %1643 = vmatprep.subr.mxu0 0.0
  %1644 = vmatpush1.msra.mxu0 %v37
  %1645 = vmatprep.subr.mxu0 0.0
  %1646 = vmatpush1.msra.mxu0 %v36
  %1647 = vmatprep.subr.mxu0 0.0
  %1648 = vmatpush1.msra.mxu0 %v35
  %1649 = vmatprep.subr.mxu0 0.0
  %1650 = vmatpush1.msra.mxu0 %v34
  %1651 = vmatprep.subr.mxu0 0.0
  %1652 = vmatpush2.msra.mxu0 0.0
  %1653 = vmatprep.subr.mxu0 0.0
  %1654 = vmatpush2.msra.mxu0 0.0
  %1655 = vmatprep.subr.mxu0 0.0
  %1656 = vmatpush2.msra.mxu0 0.0
  %1657 = vmatprep.subr.mxu0 0.0
  %1658 = vmatpush2.msra.mxu0 0.0
  %1659 = vmatprep.subr.mxu0 0.0
  %1660 = vmatpush2.msra.mxu0 0.0
  %1661 = vmatprep.subr.mxu0 0.0
  %1662 = vmatpush2.msra.mxu0 0.0
  %1663 = vmatprep.subr.mxu0 0.0
  %1664 = vmatpush2.msra.mxu0 0.0
  %1665 = vmatprep.subr.mxu0 0.0
  %1666 = vmatpush2.msra.mxu0 0.0
  %1667 = vmatprep.subr.mxu0 0.0
  %1668 = vmatpush2.msra.mxu0 0.0
  %1669 = vmatprep.subr.mxu0 0.0
  %1670 = vmatpush2.msra.mxu0 0.0
  %1671 = vmatprep.subr.mxu0 0.0
  %1672 = vmatpush2.msra.mxu0 0.0
  %1673 = vmatprep.subr.mxu0 0.0
  %1674 = vmatpush2.msra.mxu0 0.0
  %1675 = vmatprep.subr.mxu0 0.0
  %1676 = vmatpush2.msra.mxu0 0.0
  %1677 = vmatprep.subr.mxu0 0.0
  %1678 = vmatpush2.msra.mxu0 0.0
  %1679 = vmatprep.subr.mxu0 0.0
  %1680 = vmatpush2.msra.mxu0 0.0
  %1681 = vmatprep.subr.mxu0 0.0
  %1682 = vmatpush2.msra.mxu0 0.0
  %1683 = vmatprep.mubr.f32.mxu0 0.0
  %1684 = vmatmul.mubr.f32.gmra.mxu0 %v1617
  %v1685 = vpop.f32.mrf.mxu0
  %v1686 = vadd.f32 0.0, %v1685
  %v1687 = vpop.f32.mrf.mxu0
  %1688 = vdwg.mxu0
  %v1689 = vadd.f32 %v1613, %v1686
  %v1690 = vxor.u32 %v1689, 2147483648
  %v1691 = vmul.f32 %v1690, 1.442695
  %v1692 = vpow.pop %v1691
  %v1693 = vadd.f32 %v1692, 1.0
  %v1694 = vrcp.pop %v1693
  %v1695 = vmul.f32 1.0, %v1694
  %v1696 = vtanh.pop %v1689
  %v1697 = vmul.f32 %v1695, %v1436
  %1699 = vrot.lane.b32.xlu0 %v1696, 64
  %v1700 = vpop.permute.xlu0 %1699
  %v1702 = vmul.f32 %v1695, %v1700
  %1704 = vrot.lane.b32.xlu0 %v1702, 32
  %v1705 = vpop.permute.xlu0 %1704
  %v1707 = vadd.f32 %v1697, %v1705
  %v1708 = vtanh.pop %v1707
  %1710 = vrot.lane.b32.xlu0 %v1708, 64
  %v1711 = vpop.permute.xlu0 %1710
  %v1713 = vmul.f32 %v1695, %v1711
  %1715 = vrot.lane.b32.xlu0 %v1542, 32
  %v1716 = vpop.permute.xlu0 %1715
  %v1717 = vsel %vm72, %v1716, 0
  %1719 = vmatprep.subr.mxu0 0.0
  %1720 = vmatpush1.msra.mxu0 0.0
  %1721 = vmatprep.subr.mxu0 0.0
  %1722 = vmatpush1.msra.mxu0 0.0
  %1723 = vmatprep.subr.mxu0 0.0
  %1724 = vmatpush1.msra.mxu0 0.0
  %1725 = vmatprep.subr.mxu0 0.0
  %1726 = vmatpush1.msra.mxu0 0.0
  %1727 = vmatprep.subr.mxu0 0.0
  %1728 = vmatpush1.msra.mxu0 0.0
  %1729 = vmatprep.subr.mxu0 0.0
  %1730 = vmatpush1.msra.mxu0 0.0
  %1731 = vmatprep.subr.mxu0 0.0
  %1732 = vmatpush1.msra.mxu0 0.0
  %1733 = vmatprep.subr.mxu0 0.0
  %1734 = vmatpush1.msra.mxu0 0.0
  %1735 = vmatprep.subr.mxu0 0.0
  %1736 = vmatpush1.msra.mxu0 0.0
  %1737 = vmatprep.subr.mxu0 0.0
  %1738 = vmatpush1.msra.mxu0 0.0
  %1739 = vmatprep.subr.mxu0 0.0
  %1740 = vmatpush1.msra.mxu0 0.0
  %1741 = vmatprep.subr.mxu0 0.0
  %1742 = vmatpush1.msra.mxu0 0.0
  %1743 = vmatprep.subr.mxu0 0.0
  %1744 = vmatpush1.msra.mxu0 %v29
  %1745 = vmatprep.subr.mxu0 0.0
  %1746 = vmatpush1.msra.mxu0 %v28
  %1747 = vmatprep.subr.mxu0 0.0
  %1748 = vmatpush1.msra.mxu0 %v27
  %1749 = vmatprep.subr.mxu0 0.0
  %1750 = vmatpush1.msra.mxu0 %v26
  %1751 = vmatprep.subr.mxu0 0.0
  %1752 = vmatpush2.msra.mxu0 0.0
  %1753 = vmatprep.subr.mxu0 0.0
  %1754 = vmatpush2.msra.mxu0 0.0
  %1755 = vmatprep.subr.mxu0 0.0
  %1756 = vmatpush2.msra.mxu0 0.0
  %1757 = vmatprep.subr.mxu0 0.0
  %1758 = vmatpush2.msra.mxu0 0.0
  %1759 = vmatprep.subr.mxu0 0.0
  %1760 = vmatpush2.msra.mxu0 0.0
  %1761 = vmatprep.subr.mxu0 0.0
  %1762 = vmatpush2.msra.mxu0 0.0
  %1763 = vmatprep.subr.mxu0 0.0
  %1764 = vmatpush2.msra.mxu0 0.0
  %1765 = vmatprep.subr.mxu0 0.0
  %1766 = vmatpush2.msra.mxu0 0.0
  %1767 = vmatprep.subr.mxu0 0.0
  %1768 = vmatpush2.msra.mxu0 0.0
  %1769 = vmatprep.subr.mxu0 0.0
  %1770 = vmatpush2.msra.mxu0 0.0
  %1771 = vmatprep.subr.mxu0 0.0
  %1772 = vmatpush2.msra.mxu0 0.0
  %1773 = vmatprep.subr.mxu0 0.0
  %1774 = vmatpush2.msra.mxu0 0.0
  %1775 = vmatprep.subr.mxu0 0.0
  %1776 = vmatpush2.msra.mxu0 0.0
  %1777 = vmatprep.subr.mxu0 0.0
  %1778 = vmatpush2.msra.mxu0 0.0
  %1779 = vmatprep.subr.mxu0 0.0
  %1780 = vmatpush2.msra.mxu0 0.0
  %1781 = vmatprep.subr.mxu0 0.0
  %1782 = vmatpush2.msra.mxu0 0.0
  %1783 = vmatprep.mubr.f32.mxu0 0.0
  %1784 = vmatmul.mubr.f32.gmra.mxu0 %v1717
  %v1785 = vpop.f32.mrf.mxu0
  %v1786 = vadd.f32 0.0, %v1785
  %v1787 = vpop.f32.mrf.mxu0
  %1788 = vdwg.mxu0
  %v1789 = vadd.f32 %v218, %v1786
  %v1790 = vxor.u32 %v1789, 2147483648
  %v1791 = vmul.f32 %v1790, 1.442695
  %v1792 = vpow.pop %v1791
  %v1793 = vadd.f32 %v1792, 1.0
  %v1794 = vrcp.pop %v1793
  %v1795 = vmul.f32 1.0, %v1794
  %v1796 = vtanh.pop %v1789
  %v1797 = vmul.f32 %v1795, %v1536
  %1799 = vrot.lane.b32.xlu0 %v1796, 64
  %v1800 = vpop.permute.xlu0 %1799
  %v1802 = vmul.f32 %v1795, %v1800
  %1804 = vrot.lane.b32.xlu0 %v1802, 32
  %v1805 = vpop.permute.xlu0 %1804
  %v1807 = vadd.f32 %v1797, %v1805
  %v1808 = vtanh.pop %v1807
  %1810 = vrot.lane.b32.xlu0 %v1808, 64
  %v1811 = vpop.permute.xlu0 %1810
  %v1813 = vmul.f32 %v1795, %v1811
  %1814 = vmatprep.subr.mxu0 0.0
  %1815 = vmatpush1.msra.mxu0 0.0
  %1816 = vmatprep.subr.mxu0 0.0
  %1817 = vmatpush1.msra.mxu0 0.0
  %1818 = vmatprep.subr.mxu0 0.0
  %1819 = vmatpush1.msra.mxu0 0.0
  %1820 = vmatprep.subr.mxu0 0.0
  %1821 = vmatpush1.msra.mxu0 0.0
  %1822 = vmatprep.subr.mxu0 0.0
  %1823 = vmatpush1.msra.mxu0 0.0
  %1824 = vmatprep.subr.mxu0 0.0
  %1825 = vmatpush1.msra.mxu0 0.0
  %1826 = vmatprep.subr.mxu0 0.0
  %1827 = vmatpush1.msra.mxu0 0.0
  %1828 = vmatprep.subr.mxu0 0.0
  %1829 = vmatpush1.msra.mxu0 0.0
  %1830 = vmatprep.subr.mxu0 0.0
  %1831 = vmatpush1.msra.mxu0 0.0
  %1832 = vmatprep.subr.mxu0 0.0
  %1833 = vmatpush1.msra.mxu0 0.0
  %1834 = vmatprep.subr.mxu0 0.0
  %1835 = vmatpush1.msra.mxu0 0.0
  %1836 = vmatprep.subr.mxu0 0.0
  %1837 = vmatpush1.msra.mxu0 0.0
  %1838 = vmatprep.subr.mxu0 0.0
  %1839 = vmatpush1.msra.mxu0 %v33
  %1840 = vmatprep.subr.mxu0 0.0
  %1841 = vmatpush1.msra.mxu0 %v32
  %1842 = vmatprep.subr.mxu0 0.0
  %1843 = vmatpush1.msra.mxu0 %v31
  %1844 = vmatprep.subr.mxu0 0.0
  %1845 = vmatpush1.msra.mxu0 %v30
  %1846 = vmatprep.subr.mxu0 0.0
  %1847 = vmatpush2.msra.mxu0 0.0
  %1848 = vmatprep.subr.mxu0 0.0
  %1849 = vmatpush2.msra.mxu0 0.0
  %1850 = vmatprep.subr.mxu0 0.0
  %1851 = vmatpush2.msra.mxu0 0.0
  %1852 = vmatprep.subr.mxu0 0.0
  %1853 = vmatpush2.msra.mxu0 0.0
  %1854 = vmatprep.subr.mxu0 0.0
  %1855 = vmatpush2.msra.mxu0 0.0
  %1856 = vmatprep.subr.mxu0 0.0
  %1857 = vmatpush2.msra.mxu0 0.0
  %1858 = vmatprep.subr.mxu0 0.0
  %1859 = vmatpush2.msra.mxu0 0.0
  %1860 = vmatprep.subr.mxu0 0.0
  %1861 = vmatpush2.msra.mxu0 0.0
  %1862 = vmatprep.subr.mxu0 0.0
  %1863 = vmatpush2.msra.mxu0 0.0
  %1864 = vmatprep.subr.mxu0 0.0
  %1865 = vmatpush2.msra.mxu0 0.0
  %1866 = vmatprep.subr.mxu0 0.0
  %1867 = vmatpush2.msra.mxu0 0.0
  %1868 = vmatprep.subr.mxu0 0.0
  %1869 = vmatpush2.msra.mxu0 0.0
  %1870 = vmatprep.subr.mxu0 0.0
  %1871 = vmatpush2.msra.mxu0 0.0
  %1872 = vmatprep.subr.mxu0 0.0
  %1873 = vmatpush2.msra.mxu0 0.0
  %1874 = vmatprep.subr.mxu0 0.0
  %1875 = vmatpush2.msra.mxu0 0.0
  %1876 = vmatprep.subr.mxu0 0.0
  %1877 = vmatpush2.msra.mxu0 0.0
  %1878 = vmatprep.mubr.f32.mxu0 0.0
  %1879 = vmatmul.mubr.f32.gmra.mxu0 %v1717
  %v1880 = vpop.f32.mrf.mxu0
  %v1881 = vadd.f32 0.0, %v1880
  %v1882 = vpop.f32.mrf.mxu0
  %1883 = vdwg.mxu0
  %v1884 = vadd.f32 %v43, %v1881
  %1886 = vrot.lane.b32.xlu0 %v1713, 32
  %v1887 = vpop.permute.xlu0 %1886
  %v1888 = vsel %vm72, %v1887, 0
  %1890 = vmatprep.subr.mxu0 0.0
  %1891 = vmatpush1.msra.mxu0 0.0
  %1892 = vmatprep.subr.mxu0 0.0
  %1893 = vmatpush1.msra.mxu0 0.0
  %1894 = vmatprep.subr.mxu0 0.0
  %1895 = vmatpush1.msra.mxu0 0.0
  %1896 = vmatprep.subr.mxu0 0.0
  %1897 = vmatpush1.msra.mxu0 0.0
  %1898 = vmatprep.subr.mxu0 0.0
  %1899 = vmatpush1.msra.mxu0 0.0
  %1900 = vmatprep.subr.mxu0 0.0
  %1901 = vmatpush1.msra.mxu0 0.0
  %1902 = vmatprep.subr.mxu0 0.0
  %1903 = vmatpush1.msra.mxu0 0.0
  %1904 = vmatprep.subr.mxu0 0.0
  %1905 = vmatpush1.msra.mxu0 0.0
  %1906 = vmatprep.subr.mxu0 0.0
  %1907 = vmatpush1.msra.mxu0 0.0
  %1908 = vmatprep.subr.mxu0 0.0
  %1909 = vmatpush1.msra.mxu0 0.0
  %1910 = vmatprep.subr.mxu0 0.0
  %1911 = vmatpush1.msra.mxu0 0.0
  %1912 = vmatprep.subr.mxu0 0.0
  %1913 = vmatpush1.msra.mxu0 0.0
  %1914 = vmatprep.subr.mxu0 0.0
  %1915 = vmatpush1.msra.mxu0 %v37
  %1916 = vmatprep.subr.mxu0 0.0
  %1917 = vmatpush1.msra.mxu0 %v36
  %1918 = vmatprep.subr.mxu0 0.0
  %1919 = vmatpush1.msra.mxu0 %v35
  %1920 = vmatprep.subr.mxu0 0.0
  %1921 = vmatpush1.msra.mxu0 %v34
  %1922 = vmatprep.subr.mxu0 0.0
  %1923 = vmatpush2.msra.mxu0 0.0
  %1924 = vmatprep.subr.mxu0 0.0
  %1925 = vmatpush2.msra.mxu0 0.0
  %1926 = vmatprep.subr.mxu0 0.0
  %1927 = vmatpush2.msra.mxu0 0.0
  %1928 = vmatprep.subr.mxu0 0.0
  %1929 = vmatpush2.msra.mxu0 0.0
  %1930 = vmatprep.subr.mxu0 0.0
  %1931 = vmatpush2.msra.mxu0 0.0
  %1932 = vmatprep.subr.mxu0 0.0
  %1933 = vmatpush2.msra.mxu0 0.0
  %1934 = vmatprep.subr.mxu0 0.0
  %1935 = vmatpush2.msra.mxu0 0.0
  %1936 = vmatprep.subr.mxu0 0.0
  %1937 = vmatpush2.msra.mxu0 0.0
  %1938 = vmatprep.subr.mxu0 0.0
  %1939 = vmatpush2.msra.mxu0 0.0
  %1940 = vmatprep.subr.mxu0 0.0
  %1941 = vmatpush2.msra.mxu0 0.0
  %1942 = vmatprep.subr.mxu0 0.0
  %1943 = vmatpush2.msra.mxu0 0.0
  %1944 = vmatprep.subr.mxu0 0.0
  %1945 = vmatpush2.msra.mxu0 0.0
  %1946 = vmatprep.subr.mxu0 0.0
  %1947 = vmatpush2.msra.mxu0 0.0
  %1948 = vmatprep.subr.mxu0 0.0
  %1949 = vmatpush2.msra.mxu0 0.0
  %1950 = vmatprep.subr.mxu0 0.0
  %1951 = vmatpush2.msra.mxu0 0.0
  %1952 = vmatprep.subr.mxu0 0.0
  %1953 = vmatpush2.msra.mxu0 0.0
  %1954 = vmatprep.mubr.f32.mxu0 0.0
  %1955 = vmatmul.mubr.f32.gmra.mxu0 %v1888
  %v1956 = vpop.f32.mrf.mxu0
  %v1957 = vadd.f32 0.0, %v1956
  %v1958 = vpop.f32.mrf.mxu0
  %1959 = vdwg.mxu0
  %v1960 = vadd.f32 %v1884, %v1957
  %v1961 = vxor.u32 %v1960, 2147483648
  %v1962 = vmul.f32 %v1961, 1.442695
  %v1963 = vpow.pop %v1962
  %v1964 = vadd.f32 %v1963, 1.0
  %v1965 = vrcp.pop %v1964
  %v1966 = vmul.f32 1.0, %v1965
  %v1967 = vtanh.pop %v1960
  %v1968 = vmul.f32 %v1966, %v1707
  %1970 = vrot.lane.b32.xlu0 %v1967, 64
  %v1971 = vpop.permute.xlu0 %1970
  %v1973 = vmul.f32 %v1966, %v1971
  %1975 = vrot.lane.b32.xlu0 %v1973, 32
  %v1976 = vpop.permute.xlu0 %1975
  %v1978 = vadd.f32 %v1968, %v1976
  %v1979 = vtanh.pop %v1978
  %1981 = vrot.lane.b32.xlu0 %v1979, 64
  %v1982 = vpop.permute.xlu0 %1981
  %v1984 = vmul.f32 %v1966, %v1982
  %1986 = vrot.lane.b32.xlu0 %v1813, 32
  %v1987 = vpop.permute.xlu0 %1986
  %v1988 = vsel %vm72, %v1987, 0
  %1990 = vmatprep.subr.mxu0 0.0
  %1991 = vmatpush1.msra.mxu0 0.0
  %1992 = vmatprep.subr.mxu0 0.0
  %1993 = vmatpush1.msra.mxu0 0.0
  %1994 = vmatprep.subr.mxu0 0.0
  %1995 = vmatpush1.msra.mxu0 0.0
  %1996 = vmatprep.subr.mxu0 0.0
  %1997 = vmatpush1.msra.mxu0 0.0
  %1998 = vmatprep.subr.mxu0 0.0
  %1999 = vmatpush1.msra.mxu0 0.0
  %2000 = vmatprep.subr.mxu0 0.0
  %2001 = vmatpush1.msra.mxu0 0.0
  %2002 = vmatprep.subr.mxu0 0.0
  %2003 = vmatpush1.msra.mxu0 0.0
  %2004 = vmatprep.subr.mxu0 0.0
  %2005 = vmatpush1.msra.mxu0 0.0
  %2006 = vmatprep.subr.mxu0 0.0
  %2007 = vmatpush1.msra.mxu0 0.0
  %2008 = vmatprep.subr.mxu0 0.0
  %2009 = vmatpush1.msra.mxu0 0.0
  %2010 = vmatprep.subr.mxu0 0.0
  %2011 = vmatpush1.msra.mxu0 0.0
  %2012 = vmatprep.subr.mxu0 0.0
  %2013 = vmatpush1.msra.mxu0 0.0
  %2014 = vmatprep.subr.mxu0 0.0
  %2015 = vmatpush1.msra.mxu0 %v29
  %2016 = vmatprep.subr.mxu0 0.0
  %2017 = vmatpush1.msra.mxu0 %v28
  %2018 = vmatprep.subr.mxu0 0.0
  %2019 = vmatpush1.msra.mxu0 %v27
  %2020 = vmatprep.subr.mxu0 0.0
  %2021 = vmatpush1.msra.mxu0 %v26
  %2022 = vmatprep.subr.mxu0 0.0
  %2023 = vmatpush2.msra.mxu0 0.0
  %2024 = vmatprep.subr.mxu0 0.0
  %2025 = vmatpush2.msra.mxu0 0.0
  %2026 = vmatprep.subr.mxu0 0.0
  %2027 = vmatpush2.msra.mxu0 0.0
  %2028 = vmatprep.subr.mxu0 0.0
  %2029 = vmatpush2.msra.mxu0 0.0
  %2030 = vmatprep.subr.mxu0 0.0
  %2031 = vmatpush2.msra.mxu0 0.0
  %2032 = vmatprep.subr.mxu0 0.0
  %2033 = vmatpush2.msra.mxu0 0.0
  %2034 = vmatprep.subr.mxu0 0.0
  %2035 = vmatpush2.msra.mxu0 0.0
  %2036 = vmatprep.subr.mxu0 0.0
  %2037 = vmatpush2.msra.mxu0 0.0
  %2038 = vmatprep.subr.mxu0 0.0
  %2039 = vmatpush2.msra.mxu0 0.0
  %2040 = vmatprep.subr.mxu0 0.0
  %2041 = vmatpush2.msra.mxu0 0.0
  %2042 = vmatprep.subr.mxu0 0.0
  %2043 = vmatpush2.msra.mxu0 0.0
  %2044 = vmatprep.subr.mxu0 0.0
  %2045 = vmatpush2.msra.mxu0 0.0
  %2046 = vmatprep.subr.mxu0 0.0
  %2047 = vmatpush2.msra.mxu0 0.0
  %2048 = vmatprep.subr.mxu0 0.0
  %2049 = vmatpush2.msra.mxu0 0.0
  %2050 = vmatprep.subr.mxu0 0.0
  %2051 = vmatpush2.msra.mxu0 0.0
  %2052 = vmatprep.subr.mxu0 0.0
  %2053 = vmatpush2.msra.mxu0 0.0
  %2054 = vmatprep.mubr.f32.mxu0 0.0
  %2055 = vmatmul.mubr.f32.gmra.mxu0 %v1988
  %v2056 = vpop.f32.mrf.mxu0
  %v2057 = vadd.f32 0.0, %v2056
  %v2058 = vpop.f32.mrf.mxu0
  %2059 = vdwg.mxu0
  %v2060 = vadd.f32 %v223, %v2057
  %v2061 = vxor.u32 %v2060, 2147483648
  %v2062 = vmul.f32 %v2061, 1.442695
  %v2063 = vpow.pop %v2062
  %v2064 = vadd.f32 %v2063, 1.0
  %v2065 = vrcp.pop %v2064
  %v2066 = vmul.f32 1.0, %v2065
  %v2067 = vtanh.pop %v2060
  %v2068 = vmul.f32 %v2066, %v1807
  %2070 = vrot.lane.b32.xlu0 %v2067, 64
  %v2071 = vpop.permute.xlu0 %2070
  %v2073 = vmul.f32 %v2066, %v2071
  %2075 = vrot.lane.b32.xlu0 %v2073, 32
  %v2076 = vpop.permute.xlu0 %2075
  %v2078 = vadd.f32 %v2068, %v2076
  %v2079 = vtanh.pop %v2078
  %2081 = vrot.lane.b32.xlu0 %v2079, 64
  %v2082 = vpop.permute.xlu0 %2081
  %v2084 = vmul.f32 %v2066, %v2082
  %2085 = vmatprep.subr.mxu0 0.0
  %2086 = vmatpush1.msra.mxu0 0.0
  %2087 = vmatprep.subr.mxu0 0.0
  %2088 = vmatpush1.msra.mxu0 0.0
  %2089 = vmatprep.subr.mxu0 0.0
  %2090 = vmatpush1.msra.mxu0 0.0
  %2091 = vmatprep.subr.mxu0 0.0
  %2092 = vmatpush1.msra.mxu0 0.0
  %2093 = vmatprep.subr.mxu0 0.0
  %2094 = vmatpush1.msra.mxu0 0.0
  %2095 = vmatprep.subr.mxu0 0.0
  %2096 = vmatpush1.msra.mxu0 0.0
  %2097 = vmatprep.subr.mxu0 0.0
  %2098 = vmatpush1.msra.mxu0 0.0
  %2099 = vmatprep.subr.mxu0 0.0
  %2100 = vmatpush1.msra.mxu0 0.0
  %2101 = vmatprep.subr.mxu0 0.0
  %2102 = vmatpush1.msra.mxu0 0.0
  %2103 = vmatprep.subr.mxu0 0.0
  %2104 = vmatpush1.msra.mxu0 0.0
  %2105 = vmatprep.subr.mxu0 0.0
  %2106 = vmatpush1.msra.mxu0 0.0
  %2107 = vmatprep.subr.mxu0 0.0
  %2108 = vmatpush1.msra.mxu0 0.0
  %2109 = vmatprep.subr.mxu0 0.0
  %2110 = vmatpush1.msra.mxu0 %v33
  %2111 = vmatprep.subr.mxu0 0.0
  %2112 = vmatpush1.msra.mxu0 %v32
  %2113 = vmatprep.subr.mxu0 0.0
  %2114 = vmatpush1.msra.mxu0 %v31
  %2115 = vmatprep.subr.mxu0 0.0
  %2116 = vmatpush1.msra.mxu0 %v30
  %2117 = vmatprep.subr.mxu0 0.0
  %2118 = vmatpush2.msra.mxu0 0.0
  %2119 = vmatprep.subr.mxu0 0.0
  %2120 = vmatpush2.msra.mxu0 0.0
  %2121 = vmatprep.subr.mxu0 0.0
  %2122 = vmatpush2.msra.mxu0 0.0
  %2123 = vmatprep.subr.mxu0 0.0
  %2124 = vmatpush2.msra.mxu0 0.0
  %2125 = vmatprep.subr.mxu0 0.0
  %2126 = vmatpush2.msra.mxu0 0.0
  %2127 = vmatprep.subr.mxu0 0.0
  %2128 = vmatpush2.msra.mxu0 0.0
  %2129 = vmatprep.subr.mxu0 0.0
  %2130 = vmatpush2.msra.mxu0 0.0
  %2131 = vmatprep.subr.mxu0 0.0
  %2132 = vmatpush2.msra.mxu0 0.0
  %2133 = vmatprep.subr.mxu0 0.0
  %2134 = vmatpush2.msra.mxu0 0.0
  %2135 = vmatprep.subr.mxu0 0.0
  %2136 = vmatpush2.msra.mxu0 0.0
  %2137 = vmatprep.subr.mxu0 0.0
  %2138 = vmatpush2.msra.mxu0 0.0
  %2139 = vmatprep.subr.mxu0 0.0
  %2140 = vmatpush2.msra.mxu0 0.0
  %2141 = vmatprep.subr.mxu0 0.0
  %2142 = vmatpush2.msra.mxu0 0.0
  %2143 = vmatprep.subr.mxu0 0.0
  %2144 = vmatpush2.msra.mxu0 0.0
  %2145 = vmatprep.subr.mxu0 0.0
  %2146 = vmatpush2.msra.mxu0 0.0
  %2147 = vmatprep.subr.mxu0 0.0
  %2148 = vmatpush2.msra.mxu0 0.0
  %2149 = vmatprep.mubr.f32.mxu0 0.0
  %2150 = vmatmul.mubr.f32.gmra.mxu0 %v1988
  %v2151 = vpop.f32.mrf.mxu0
  %v2152 = vadd.f32 0.0, %v2151
  %v2153 = vpop.f32.mrf.mxu0
  %2154 = vdwg.mxu0
  %v2155 = vadd.f32 %v43, %v2152
  %2157 = vrot.lane.b32.xlu0 %v1984, 32
  %v2158 = vpop.permute.xlu0 %2157
  %v2159 = vsel %vm72, %v2158, 0
  %2161 = vmatprep.subr.mxu0 0.0
  %2162 = vmatpush1.msra.mxu0 0.0
  %2163 = vmatprep.subr.mxu0 0.0
  %2164 = vmatpush1.msra.mxu0 0.0
  %2165 = vmatprep.subr.mxu0 0.0
  %2166 = vmatpush1.msra.mxu0 0.0
  %2167 = vmatprep.subr.mxu0 0.0
  %2168 = vmatpush1.msra.mxu0 0.0
  %2169 = vmatprep.subr.mxu0 0.0
  %2170 = vmatpush1.msra.mxu0 0.0
  %2171 = vmatprep.subr.mxu0 0.0
  %2172 = vmatpush1.msra.mxu0 0.0
  %2173 = vmatprep.subr.mxu0 0.0
  %2174 = vmatpush1.msra.mxu0 0.0
  %2175 = vmatprep.subr.mxu0 0.0
  %2176 = vmatpush1.msra.mxu0 0.0
  %2177 = vmatprep.subr.mxu0 0.0
  %2178 = vmatpush1.msra.mxu0 0.0
  %2179 = vmatprep.subr.mxu0 0.0
  %2180 = vmatpush1.msra.mxu0 0.0
  %2181 = vmatprep.subr.mxu0 0.0
  %2182 = vmatpush1.msra.mxu0 0.0
  %2183 = vmatprep.subr.mxu0 0.0
  %2184 = vmatpush1.msra.mxu0 0.0
  %2185 = vmatprep.subr.mxu0 0.0
  %2186 = vmatpush1.msra.mxu0 %v37
  %2187 = vmatprep.subr.mxu0 0.0
  %2188 = vmatpush1.msra.mxu0 %v36
  %2189 = vmatprep.subr.mxu0 0.0
  %2190 = vmatpush1.msra.mxu0 %v35
  %2191 = vmatprep.subr.mxu0 0.0
  %2192 = vmatpush1.msra.mxu0 %v34
  %2193 = vmatprep.subr.mxu0 0.0
  %2194 = vmatpush2.msra.mxu0 0.0
  %2195 = vmatprep.subr.mxu0 0.0
  %2196 = vmatpush2.msra.mxu0 0.0
  %2197 = vmatprep.subr.mxu0 0.0
  %2198 = vmatpush2.msra.mxu0 0.0
  %2199 = vmatprep.subr.mxu0 0.0
  %2200 = vmatpush2.msra.mxu0 0.0
  %2201 = vmatprep.subr.mxu0 0.0
  %2202 = vmatpush2.msra.mxu0 0.0
  %2203 = vmatprep.subr.mxu0 0.0
  %2204 = vmatpush2.msra.mxu0 0.0
  %2205 = vmatprep.subr.mxu0 0.0
  %2206 = vmatpush2.msra.mxu0 0.0
  %2207 = vmatprep.subr.mxu0 0.0
  %2208 = vmatpush2.msra.mxu0 0.0
  %2209 = vmatprep.subr.mxu0 0.0
  %2210 = vmatpush2.msra.mxu0 0.0
  %2211 = vmatprep.subr.mxu0 0.0
  %2212 = vmatpush2.msra.mxu0 0.0
  %2213 = vmatprep.subr.mxu0 0.0
  %2214 = vmatpush2.msra.mxu0 0.0
  %2215 = vmatprep.subr.mxu0 0.0
  %2216 = vmatpush2.msra.mxu0 0.0
  %2217 = vmatprep.subr.mxu0 0.0
  %2218 = vmatpush2.msra.mxu0 0.0
  %2219 = vmatprep.subr.mxu0 0.0
  %2220 = vmatpush2.msra.mxu0 0.0
  %2221 = vmatprep.subr.mxu0 0.0
  %2222 = vmatpush2.msra.mxu0 0.0
  %2223 = vmatprep.subr.mxu0 0.0
  %2224 = vmatpush2.msra.mxu0 0.0
  %2225 = vmatprep.mubr.f32.mxu0 0.0
  %2226 = vmatmul.mubr.f32.gmra.mxu0 %v2159
  %v2227 = vpop.f32.mrf.mxu0
  %v2228 = vadd.f32 0.0, %v2227
  %v2229 = vpop.f32.mrf.mxu0
  %2230 = vdwg.mxu0
  %v2231 = vadd.f32 %v2155, %v2228
  %v2232 = vxor.u32 %v2231, 2147483648
  %v2233 = vmul.f32 %v2232, 1.442695
  %v2234 = vpow.pop %v2233
  %v2235 = vadd.f32 %v2234, 1.0
  %v2236 = vrcp.pop %v2235
  %v2237 = vmul.f32 1.0, %v2236
  %v2238 = vtanh.pop %v2231
  %v2239 = vmul.f32 %v2237, %v1978
  %2241 = vrot.lane.b32.xlu0 %v2238, 64
  %v2242 = vpop.permute.xlu0 %2241
  %v2244 = vmul.f32 %v2237, %v2242
  %2246 = vrot.lane.b32.xlu0 %v2244, 32
  %v2247 = vpop.permute.xlu0 %2246
  %v2249 = vadd.f32 %v2239, %v2247
  %v2250 = vtanh.pop %v2249
  %2252 = vrot.lane.b32.xlu0 %v2250, 64
  %v2253 = vpop.permute.xlu0 %2252
  %v2255 = vmul.f32 %v2237, %v2253
  %2257 = vrot.lane.b32.xlu0 %v2084, 32
  %v2258 = vpop.permute.xlu0 %2257
  %v2259 = vsel %vm72, %v2258, 0
  %2261 = vmatprep.subr.mxu0 0.0
  %2262 = vmatpush1.msra.mxu0 0.0
  %2263 = vmatprep.subr.mxu0 0.0
  %2264 = vmatpush1.msra.mxu0 0.0
  %2265 = vmatprep.subr.mxu0 0.0
  %2266 = vmatpush1.msra.mxu0 0.0
  %2267 = vmatprep.subr.mxu0 0.0
  %2268 = vmatpush1.msra.mxu0 0.0
  %2269 = vmatprep.subr.mxu0 0.0
  %2270 = vmatpush1.msra.mxu0 0.0
  %2271 = vmatprep.subr.mxu0 0.0
  %2272 = vmatpush1.msra.mxu0 0.0
  %2273 = vmatprep.subr.mxu0 0.0
  %2274 = vmatpush1.msra.mxu0 0.0
  %2275 = vmatprep.subr.mxu0 0.0
  %2276 = vmatpush1.msra.mxu0 0.0
  %2277 = vmatprep.subr.mxu0 0.0
  %2278 = vmatpush1.msra.mxu0 0.0
  %2279 = vmatprep.subr.mxu0 0.0
  %2280 = vmatpush1.msra.mxu0 0.0
  %2281 = vmatprep.subr.mxu0 0.0
  %2282 = vmatpush1.msra.mxu0 0.0
  %2283 = vmatprep.subr.mxu0 0.0
  %2284 = vmatpush1.msra.mxu0 0.0
  %2285 = vmatprep.subr.mxu0 0.0
  %2286 = vmatpush1.msra.mxu0 %v29
  %2287 = vmatprep.subr.mxu0 0.0
  %2288 = vmatpush1.msra.mxu0 %v28
  %2289 = vmatprep.subr.mxu0 0.0
  %2290 = vmatpush1.msra.mxu0 %v27
  %2291 = vmatprep.subr.mxu0 0.0
  %2292 = vmatpush1.msra.mxu0 %v26
  %2293 = vmatprep.subr.mxu0 0.0
  %2294 = vmatpush2.msra.mxu0 0.0
  %2295 = vmatprep.subr.mxu0 0.0
  %2296 = vmatpush2.msra.mxu0 0.0
  %2297 = vmatprep.subr.mxu0 0.0
  %2298 = vmatpush2.msra.mxu0 0.0
  %2299 = vmatprep.subr.mxu0 0.0
  %2300 = vmatpush2.msra.mxu0 0.0
  %2301 = vmatprep.subr.mxu0 0.0
  %2302 = vmatpush2.msra.mxu0 0.0
  %2303 = vmatprep.subr.mxu0 0.0
  %2304 = vmatpush2.msra.mxu0 0.0
  %2305 = vmatprep.subr.mxu0 0.0
  %2306 = vmatpush2.msra.mxu0 0.0
  %2307 = vmatprep.subr.mxu0 0.0
  %2308 = vmatpush2.msra.mxu0 0.0
  %2309 = vmatprep.subr.mxu0 0.0
  %2310 = vmatpush2.msra.mxu0 0.0
  %2311 = vmatprep.subr.mxu0 0.0
  %2312 = vmatpush2.msra.mxu0 0.0
  %2313 = vmatprep.subr.mxu0 0.0
  %2314 = vmatpush2.msra.mxu0 0.0
  %2315 = vmatprep.subr.mxu0 0.0
  %2316 = vmatpush2.msra.mxu0 0.0
  %2317 = vmatprep.subr.mxu0 0.0
  %2318 = vmatpush2.msra.mxu0 0.0
  %2319 = vmatprep.subr.mxu0 0.0
  %2320 = vmatpush2.msra.mxu0 0.0
  %2321 = vmatprep.subr.mxu0 0.0
  %2322 = vmatpush2.msra.mxu0 0.0
  %2323 = vmatprep.subr.mxu0 0.0
  %2324 = vmatpush2.msra.mxu0 0.0
  %2325 = vmatprep.mubr.f32.mxu0 0.0
  %2326 = vmatmul.mubr.f32.gmra.mxu0 %v2259
  %v2327 = vpop.f32.mrf.mxu0
  %v2328 = vadd.f32 0.0, %v2327
  %v2329 = vpop.f32.mrf.mxu0
  %2330 = vdwg.mxu0
  %v2331 = vadd.f32 %v228, %v2328
  %v2332 = vxor.u32 %v2331, 2147483648
  %v2333 = vmul.f32 %v2332, 1.442695
  %v2334 = vpow.pop %v2333
  %v2335 = vadd.f32 %v2334, 1.0
  %v2336 = vrcp.pop %v2335
  %v2337 = vmul.f32 1.0, %v2336
  %v2338 = vtanh.pop %v2331
  %v2339 = vmul.f32 %v2337, %v2078
  %2341 = vrot.lane.b32.xlu0 %v2338, 64
  %v2342 = vpop.permute.xlu0 %2341
  %v2344 = vmul.f32 %v2337, %v2342
  %2346 = vrot.lane.b32.xlu0 %v2344, 32
  %v2347 = vpop.permute.xlu0 %2346
  %v2349 = vadd.f32 %v2339, %v2347
  %v2350 = vtanh.pop %v2349
  %2352 = vrot.lane.b32.xlu0 %v2350, 64
  %v2353 = vpop.permute.xlu0 %2352
  %v2355 = vmul.f32 %v2337, %v2353
  %2356 = vmatprep.subr.mxu0 0.0
  %2357 = vmatpush1.msra.mxu0 0.0
  %2358 = vmatprep.subr.mxu0 0.0
  %2359 = vmatpush1.msra.mxu0 0.0
  %2360 = vmatprep.subr.mxu0 0.0
  %2361 = vmatpush1.msra.mxu0 0.0
  %2362 = vmatprep.subr.mxu0 0.0
  %2363 = vmatpush1.msra.mxu0 0.0
  %2364 = vmatprep.subr.mxu0 0.0
  %2365 = vmatpush1.msra.mxu0 0.0
  %2366 = vmatprep.subr.mxu0 0.0
  %2367 = vmatpush1.msra.mxu0 0.0
  %2368 = vmatprep.subr.mxu0 0.0
  %2369 = vmatpush1.msra.mxu0 0.0
  %2370 = vmatprep.subr.mxu0 0.0
  %2371 = vmatpush1.msra.mxu0 0.0
  %2372 = vmatprep.subr.mxu0 0.0
  %2373 = vmatpush1.msra.mxu0 0.0
  %2374 = vmatprep.subr.mxu0 0.0
  %2375 = vmatpush1.msra.mxu0 0.0
  %2376 = vmatprep.subr.mxu0 0.0
  %2377 = vmatpush1.msra.mxu0 0.0
  %2378 = vmatprep.subr.mxu0 0.0
  %2379 = vmatpush1.msra.mxu0 0.0
  %2380 = vmatprep.subr.mxu0 0.0
  %2381 = vmatpush1.msra.mxu0 %v33
  %2382 = vmatprep.subr.mxu0 0.0
  %2383 = vmatpush1.msra.mxu0 %v32
  %2384 = vmatprep.subr.mxu0 0.0
  %2385 = vmatpush1.msra.mxu0 %v31
  %2386 = vmatprep.subr.mxu0 0.0
  %2387 = vmatpush1.msra.mxu0 %v30
  %2388 = vmatprep.subr.mxu0 0.0
  %2389 = vmatpush2.msra.mxu0 0.0
  %2390 = vmatprep.subr.mxu0 0.0
  %2391 = vmatpush2.msra.mxu0 0.0
  %2392 = vmatprep.subr.mxu0 0.0
  %2393 = vmatpush2.msra.mxu0 0.0
  %2394 = vmatprep.subr.mxu0 0.0
  %2395 = vmatpush2.msra.mxu0 0.0
  %2396 = vmatprep.subr.mxu0 0.0
  %2397 = vmatpush2.msra.mxu0 0.0
  %2398 = vmatprep.subr.mxu0 0.0
  %2399 = vmatpush2.msra.mxu0 0.0
  %2400 = vmatprep.subr.mxu0 0.0
  %2401 = vmatpush2.msra.mxu0 0.0
  %2402 = vmatprep.subr.mxu0 0.0
  %2403 = vmatpush2.msra.mxu0 0.0
  %2404 = vmatprep.subr.mxu0 0.0
  %2405 = vmatpush2.msra.mxu0 0.0
  %2406 = vmatprep.subr.mxu0 0.0
  %2407 = vmatpush2.msra.mxu0 0.0
  %2408 = vmatprep.subr.mxu0 0.0
  %2409 = vmatpush2.msra.mxu0 0.0
  %2410 = vmatprep.subr.mxu0 0.0
  %2411 = vmatpush2.msra.mxu0 0.0
  %2412 = vmatprep.subr.mxu0 0.0
  %2413 = vmatpush2.msra.mxu0 0.0
  %2414 = vmatprep.subr.mxu0 0.0
  %2415 = vmatpush2.msra.mxu0 0.0
  %2416 = vmatprep.subr.mxu0 0.0
  %2417 = vmatpush2.msra.mxu0 0.0
  %2418 = vmatprep.subr.mxu0 0.0
  %2419 = vmatpush2.msra.mxu0 0.0
  %2420 = vmatprep.mubr.f32.mxu0 0.0
  %2421 = vmatmul.mubr.f32.gmra.mxu0 %v2259
  %v2422 = vpop.f32.mrf.mxu0
  %v2423 = vadd.f32 0.0, %v2422
  %v2424 = vpop.f32.mrf.mxu0
  %2425 = vdwg.mxu0
  %v2426 = vadd.f32 %v43, %v2423
  %2428 = vrot.lane.b32.xlu0 %v2255, 32
  %v2429 = vpop.permute.xlu0 %2428
  %v2430 = vsel %vm72, %v2429, 0
  %2432 = vmatprep.subr.mxu0 0.0
  %2433 = vmatpush1.msra.mxu0 0.0
  %2434 = vmatprep.subr.mxu0 0.0
  %2435 = vmatpush1.msra.mxu0 0.0
  %2436 = vmatprep.subr.mxu0 0.0
  %2437 = vmatpush1.msra.mxu0 0.0
  %2438 = vmatprep.subr.mxu0 0.0
  %2439 = vmatpush1.msra.mxu0 0.0
  %2440 = vmatprep.subr.mxu0 0.0
  %2441 = vmatpush1.msra.mxu0 0.0
  %2442 = vmatprep.subr.mxu0 0.0
  %2443 = vmatpush1.msra.mxu0 0.0
  %2444 = vmatprep.subr.mxu0 0.0
  %2445 = vmatpush1.msra.mxu0 0.0
  %2446 = vmatprep.subr.mxu0 0.0
  %2447 = vmatpush1.msra.mxu0 0.0
  %2448 = vmatprep.subr.mxu0 0.0
  %2449 = vmatpush1.msra.mxu0 0.0
  %2450 = vmatprep.subr.mxu0 0.0
  %2451 = vmatpush1.msra.mxu0 0.0
  %2452 = vmatprep.subr.mxu0 0.0
  %2453 = vmatpush1.msra.mxu0 0.0
  %2454 = vmatprep.subr.mxu0 0.0
  %2455 = vmatpush1.msra.mxu0 0.0
  %2456 = vmatprep.subr.mxu0 0.0
  %2457 = vmatpush1.msra.mxu0 %v37
  %2458 = vmatprep.subr.mxu0 0.0
  %2459 = vmatpush1.msra.mxu0 %v36
  %2460 = vmatprep.subr.mxu0 0.0
  %2461 = vmatpush1.msra.mxu0 %v35
  %2462 = vmatprep.subr.mxu0 0.0
  %2463 = vmatpush1.msra.mxu0 %v34
  %2464 = vmatprep.subr.mxu0 0.0
  %2465 = vmatpush2.msra.mxu0 0.0
  %2466 = vmatprep.subr.mxu0 0.0
  %2467 = vmatpush2.msra.mxu0 0.0
  %2468 = vmatprep.subr.mxu0 0.0
  %2469 = vmatpush2.msra.mxu0 0.0
  %2470 = vmatprep.subr.mxu0 0.0
  %2471 = vmatpush2.msra.mxu0 0.0
  %2472 = vmatprep.subr.mxu0 0.0
  %2473 = vmatpush2.msra.mxu0 0.0
  %2474 = vmatprep.subr.mxu0 0.0
  %2475 = vmatpush2.msra.mxu0 0.0
  %2476 = vmatprep.subr.mxu0 0.0
  %2477 = vmatpush2.msra.mxu0 0.0
  %2478 = vmatprep.subr.mxu0 0.0
  %2479 = vmatpush2.msra.mxu0 0.0
  %2480 = vmatprep.subr.mxu0 0.0
  %2481 = vmatpush2.msra.mxu0 0.0
  %2482 = vmatprep.subr.mxu0 0.0
  %2483 = vmatpush2.msra.mxu0 0.0
  %2484 = vmatprep.subr.mxu0 0.0
  %2485 = vmatpush2.msra.mxu0 0.0
  %2486 = vmatprep.subr.mxu0 0.0
  %2487 = vmatpush2.msra.mxu0 0.0
  %2488 = vmatprep.subr.mxu0 0.0
  %2489 = vmatpush2.msra.mxu0 0.0
  %2490 = vmatprep.subr.mxu0 0.0
  %2491 = vmatpush2.msra.mxu0 0.0
  %2492 = vmatprep.subr.mxu0 0.0
  %2493 = vmatpush2.msra.mxu0 0.0
  %2494 = vmatprep.subr.mxu0 0.0
  %2495 = vmatpush2.msra.mxu0 0.0
  %2496 = vmatprep.mubr.f32.mxu0 0.0
  %2497 = vmatmul.mubr.f32.gmra.mxu0 %v2430
  %v2498 = vpop.f32.mrf.mxu0
  %v2499 = vadd.f32 0.0, %v2498
  %v2500 = vpop.f32.mrf.mxu0
  %2501 = vdwg.mxu0
  %v2502 = vadd.f32 %v2426, %v2499
  %v2503 = vxor.u32 %v2502, 2147483648
  %v2504 = vmul.f32 %v2503, 1.442695
  %v2505 = vpow.pop %v2504
  %v2506 = vadd.f32 %v2505, 1.0
  %v2507 = vrcp.pop %v2506
  %v2508 = vmul.f32 1.0, %v2507
  %v2509 = vtanh.pop %v2502
  %v2510 = vmul.f32 %v2508, %v2249
  %2512 = vrot.lane.b32.xlu0 %v2509, 64
  %v2513 = vpop.permute.xlu0 %2512
  %v2515 = vmul.f32 %v2508, %v2513
  %2517 = vrot.lane.b32.xlu0 %v2515, 32
  %v2518 = vpop.permute.xlu0 %2517
  %v2520 = vadd.f32 %v2510, %v2518
  %v2521 = vtanh.pop %v2520
  %2523 = vrot.lane.b32.xlu0 %v2521, 64
  %v2524 = vpop.permute.xlu0 %2523
  %v2526 = vmul.f32 %v2508, %v2524
  %2528 = vrot.lane.b32.xlu0 %v2355, 32
  %v2529 = vpop.permute.xlu0 %2528
  %v2530 = vsel %vm72, %v2529, 0
  %2532 = vmatprep.subr.mxu0 0.0
  %2533 = vmatpush1.msra.mxu0 0.0
  %2534 = vmatprep.subr.mxu0 0.0
  %2535 = vmatpush1.msra.mxu0 0.0
  %2536 = vmatprep.subr.mxu0 0.0
  %2537 = vmatpush1.msra.mxu0 0.0
  %2538 = vmatprep.subr.mxu0 0.0
  %2539 = vmatpush1.msra.mxu0 0.0
  %2540 = vmatprep.subr.mxu0 0.0
  %2541 = vmatpush1.msra.mxu0 0.0
  %2542 = vmatprep.subr.mxu0 0.0
  %2543 = vmatpush1.msra.mxu0 0.0
  %2544 = vmatprep.subr.mxu0 0.0
  %2545 = vmatpush1.msra.mxu0 0.0
  %2546 = vmatprep.subr.mxu0 0.0
  %2547 = vmatpush1.msra.mxu0 0.0
  %2548 = vmatprep.subr.mxu0 0.0
  %2549 = vmatpush1.msra.mxu0 0.0
  %2550 = vmatprep.subr.mxu0 0.0
  %2551 = vmatpush1.msra.mxu0 0.0
  %2552 = vmatprep.subr.mxu0 0.0
  %2553 = vmatpush1.msra.mxu0 0.0
  %2554 = vmatprep.subr.mxu0 0.0
  %2555 = vmatpush1.msra.mxu0 0.0
  %2556 = vmatprep.subr.mxu0 0.0
  %2557 = vmatpush1.msra.mxu0 %v29
  %2558 = vmatprep.subr.mxu0 0.0
  %2559 = vmatpush1.msra.mxu0 %v28
  %2560 = vmatprep.subr.mxu0 0.0
  %2561 = vmatpush1.msra.mxu0 %v27
  %2562 = vmatprep.subr.mxu0 0.0
  %2563 = vmatpush1.msra.mxu0 %v26
  %2564 = vmatprep.subr.mxu0 0.0
  %2565 = vmatpush2.msra.mxu0 0.0
  %2566 = vmatprep.subr.mxu0 0.0
  %2567 = vmatpush2.msra.mxu0 0.0
  %2568 = vmatprep.subr.mxu0 0.0
  %2569 = vmatpush2.msra.mxu0 0.0
  %2570 = vmatprep.subr.mxu0 0.0
  %2571 = vmatpush2.msra.mxu0 0.0
  %2572 = vmatprep.subr.mxu0 0.0
  %2573 = vmatpush2.msra.mxu0 0.0
  %2574 = vmatprep.subr.mxu0 0.0
  %2575 = vmatpush2.msra.mxu0 0.0
  %2576 = vmatprep.subr.mxu0 0.0
  %2577 = vmatpush2.msra.mxu0 0.0
  %2578 = vmatprep.subr.mxu0 0.0
  %2579 = vmatpush2.msra.mxu0 0.0
  %2580 = vmatprep.subr.mxu0 0.0
  %2581 = vmatpush2.msra.mxu0 0.0
  %2582 = vmatprep.subr.mxu0 0.0
  %2583 = vmatpush2.msra.mxu0 0.0
  %2584 = vmatprep.subr.mxu0 0.0
  %2585 = vmatpush2.msra.mxu0 0.0
  %2586 = vmatprep.subr.mxu0 0.0
  %2587 = vmatpush2.msra.mxu0 0.0
  %2588 = vmatprep.subr.mxu0 0.0
  %2589 = vmatpush2.msra.mxu0 0.0
  %2590 = vmatprep.subr.mxu0 0.0
  %2591 = vmatpush2.msra.mxu0 0.0
  %2592 = vmatprep.subr.mxu0 0.0
  %2593 = vmatpush2.msra.mxu0 0.0
  %2594 = vmatprep.subr.mxu0 0.0
  %2595 = vmatpush2.msra.mxu0 0.0
  %2596 = vmatprep.mubr.f32.mxu0 0.0
  %2597 = vmatmul.mubr.f32.gmra.mxu0 %v2530
  %v2598 = vpop.f32.mrf.mxu0
  %v2599 = vadd.f32 0.0, %v2598
  %v2600 = vpop.f32.mrf.mxu0
  %2601 = vdwg.mxu0
  %v2602 = vadd.f32 %v233, %v2599
  %v2603 = vxor.u32 %v2602, 2147483648
  %v2604 = vmul.f32 %v2603, 1.442695
  %v2605 = vpow.pop %v2604
  %v2606 = vadd.f32 %v2605, 1.0
  %v2607 = vrcp.pop %v2606
  %v2608 = vmul.f32 1.0, %v2607
  %v2609 = vtanh.pop %v2602
  %v2610 = vmul.f32 %v2608, %v2349
  %2612 = vrot.lane.b32.xlu0 %v2609, 64
  %v2613 = vpop.permute.xlu0 %2612
  %v2615 = vmul.f32 %v2608, %v2613
  %2617 = vrot.lane.b32.xlu0 %v2615, 32
  %v2618 = vpop.permute.xlu0 %2617
  %v2620 = vadd.f32 %v2610, %v2618
  %v2621 = vtanh.pop %v2620
  %2623 = vrot.lane.b32.xlu0 %v2621, 64
  %v2624 = vpop.permute.xlu0 %2623
  %v2626 = vmul.f32 %v2608, %v2624
  %2627 = vmatprep.subr.mxu0 0.0
  %2628 = vmatpush1.msra.mxu0 0.0
  %2629 = vmatprep.subr.mxu0 0.0
  %2630 = vmatpush1.msra.mxu0 0.0
  %2631 = vmatprep.subr.mxu0 0.0
  %2632 = vmatpush1.msra.mxu0 0.0
  %2633 = vmatprep.subr.mxu0 0.0
  %2634 = vmatpush1.msra.mxu0 0.0
  %2635 = vmatprep.subr.mxu0 0.0
  %2636 = vmatpush1.msra.mxu0 0.0
  %2637 = vmatprep.subr.mxu0 0.0
  %2638 = vmatpush1.msra.mxu0 0.0
  %2639 = vmatprep.subr.mxu0 0.0
  %2640 = vmatpush1.msra.mxu0 0.0
  %2641 = vmatprep.subr.mxu0 0.0
  %2642 = vmatpush1.msra.mxu0 0.0
  %2643 = vmatprep.subr.mxu0 0.0
  %2644 = vmatpush1.msra.mxu0 0.0
  %2645 = vmatprep.subr.mxu0 0.0
  %2646 = vmatpush1.msra.mxu0 0.0
  %2647 = vmatprep.subr.mxu0 0.0
  %2648 = vmatpush1.msra.mxu0 0.0
  %2649 = vmatprep.subr.mxu0 0.0
  %2650 = vmatpush1.msra.mxu0 0.0
  %2651 = vmatprep.subr.mxu0 0.0
  %2652 = vmatpush1.msra.mxu0 %v33
  %2653 = vmatprep.subr.mxu0 0.0
  %2654 = vmatpush1.msra.mxu0 %v32
  %2655 = vmatprep.subr.mxu0 0.0
  %2656 = vmatpush1.msra.mxu0 %v31
  %2657 = vmatprep.subr.mxu0 0.0
  %2658 = vmatpush1.msra.mxu0 %v30
  %2659 = vmatprep.subr.mxu0 0.0
  %2660 = vmatpush2.msra.mxu0 0.0
  %2661 = vmatprep.subr.mxu0 0.0
  %2662 = vmatpush2.msra.mxu0 0.0
  %2663 = vmatprep.subr.mxu0 0.0
  %2664 = vmatpush2.msra.mxu0 0.0
  %2665 = vmatprep.subr.mxu0 0.0
  %2666 = vmatpush2.msra.mxu0 0.0
  %2667 = vmatprep.subr.mxu0 0.0
  %2668 = vmatpush2.msra.mxu0 0.0
  %2669 = vmatprep.subr.mxu0 0.0
  %2670 = vmatpush2.msra.mxu0 0.0
  %2671 = vmatprep.subr.mxu0 0.0
  %2672 = vmatpush2.msra.mxu0 0.0
  %2673 = vmatprep.subr.mxu0 0.0
  %2674 = vmatpush2.msra.mxu0 0.0
  %2675 = vmatprep.subr.mxu0 0.0
  %2676 = vmatpush2.msra.mxu0 0.0
  %2677 = vmatprep.subr.mxu0 0.0
  %2678 = vmatpush2.msra.mxu0 0.0
  %2679 = vmatprep.subr.mxu0 0.0
  %2680 = vmatpush2.msra.mxu0 0.0
  %2681 = vmatprep.subr.mxu0 0.0
  %2682 = vmatpush2.msra.mxu0 0.0
  %2683 = vmatprep.subr.mxu0 0.0
  %2684 = vmatpush2.msra.mxu0 0.0
  %2685 = vmatprep.subr.mxu0 0.0
  %2686 = vmatpush2.msra.mxu0 0.0
  %2687 = vmatprep.subr.mxu0 0.0
  %2688 = vmatpush2.msra.mxu0 0.0
  %2689 = vmatprep.subr.mxu0 0.0
  %2690 = vmatpush2.msra.mxu0 0.0
  %2691 = vmatprep.mubr.f32.mxu0 0.0
  %2692 = vmatmul.mubr.f32.gmra.mxu0 %v2530
  %v2693 = vpop.f32.mrf.mxu0
  %v2694 = vadd.f32 0.0, %v2693
  %v2695 = vpop.f32.mrf.mxu0
  %2696 = vdwg.mxu0
  %v2697 = vadd.f32 %v43, %v2694
  %2699 = vrot.lane.b32.xlu0 %v2526, 32
  %v2700 = vpop.permute.xlu0 %2699
  %v2701 = vsel %vm72, %v2700, 0
  %2703 = vmatprep.subr.mxu0 0.0
  %2704 = vmatpush1.msra.mxu0 0.0
  %2705 = vmatprep.subr.mxu0 0.0
  %2706 = vmatpush1.msra.mxu0 0.0
  %2707 = vmatprep.subr.mxu0 0.0
  %2708 = vmatpush1.msra.mxu0 0.0
  %2709 = vmatprep.subr.mxu0 0.0
  %2710 = vmatpush1.msra.mxu0 0.0
  %2711 = vmatprep.subr.mxu0 0.0
  %2712 = vmatpush1.msra.mxu0 0.0
  %2713 = vmatprep.subr.mxu0 0.0
  %2714 = vmatpush1.msra.mxu0 0.0
  %2715 = vmatprep.subr.mxu0 0.0
  %2716 = vmatpush1.msra.mxu0 0.0
  %2717 = vmatprep.subr.mxu0 0.0
  %2718 = vmatpush1.msra.mxu0 0.0
  %2719 = vmatprep.subr.mxu0 0.0
  %2720 = vmatpush1.msra.mxu0 0.0
  %2721 = vmatprep.subr.mxu0 0.0
  %2722 = vmatpush1.msra.mxu0 0.0
  %2723 = vmatprep.subr.mxu0 0.0
  %2724 = vmatpush1.msra.mxu0 0.0
  %2725 = vmatprep.subr.mxu0 0.0
  %2726 = vmatpush1.msra.mxu0 0.0
  %2727 = vmatprep.subr.mxu0 0.0
  %2728 = vmatpush1.msra.mxu0 %v37
  %2729 = vmatprep.subr.mxu0 0.0
  %2730 = vmatpush1.msra.mxu0 %v36
  %2731 = vmatprep.subr.mxu0 0.0
  %2732 = vmatpush1.msra.mxu0 %v35
  %2733 = vmatprep.subr.mxu0 0.0
  %2734 = vmatpush1.msra.mxu0 %v34
  %2735 = vmatprep.subr.mxu0 0.0
  %2736 = vmatpush2.msra.mxu0 0.0
  %2737 = vmatprep.subr.mxu0 0.0
  %2738 = vmatpush2.msra.mxu0 0.0
  %2739 = vmatprep.subr.mxu0 0.0
  %2740 = vmatpush2.msra.mxu0 0.0
  %2741 = vmatprep.subr.mxu0 0.0
  %2742 = vmatpush2.msra.mxu0 0.0
  %2743 = vmatprep.subr.mxu0 0.0
  %2744 = vmatpush2.msra.mxu0 0.0
  %2745 = vmatprep.subr.mxu0 0.0
  %2746 = vmatpush2.msra.mxu0 0.0
  %2747 = vmatprep.subr.mxu0 0.0
  %2748 = vmatpush2.msra.mxu0 0.0
  %2749 = vmatprep.subr.mxu0 0.0
  %2750 = vmatpush2.msra.mxu0 0.0
  %2751 = vmatprep.subr.mxu0 0.0
  %2752 = vmatpush2.msra.mxu0 0.0
  %2753 = vmatprep.subr.mxu0 0.0
  %2754 = vmatpush2.msra.mxu0 0.0
  %2755 = vmatprep.subr.mxu0 0.0
  %2756 = vmatpush2.msra.mxu0 0.0
  %2757 = vmatprep.subr.mxu0 0.0
  %2758 = vmatpush2.msra.mxu0 0.0
  %2759 = vmatprep.subr.mxu0 0.0
  %2760 = vmatpush2.msra.mxu0 0.0
  %2761 = vmatprep.subr.mxu0 0.0
  %2762 = vmatpush2.msra.mxu0 0.0
  %2763 = vmatprep.subr.mxu0 0.0
  %2764 = vmatpush2.msra.mxu0 0.0
  %2765 = vmatprep.subr.mxu0 0.0
  %2766 = vmatpush2.msra.mxu0 0.0
  %2767 = vmatprep.mubr.f32.mxu0 0.0
  %2768 = vmatmul.mubr.f32.gmra.mxu0 %v2701
  %v2769 = vpop.f32.mrf.mxu0
  %v2770 = vadd.f32 0.0, %v2769
  %v2771 = vpop.f32.mrf.mxu0
  %2772 = vdwg.mxu0
  %v2773 = vadd.f32 %v2697, %v2770
  %v2774 = vxor.u32 %v2773, 2147483648
  %v2775 = vmul.f32 %v2774, 1.442695
  %v2776 = vpow.pop %v2775
  %v2777 = vadd.f32 %v2776, 1.0
  %v2778 = vrcp.pop %v2777
  %v2779 = vmul.f32 1.0, %v2778
  %v2780 = vtanh.pop %v2773
  %v2781 = vmul.f32 %v2779, %v2520
  %2783 = vrot.lane.b32.xlu0 %v2780, 64
  %v2784 = vpop.permute.xlu0 %2783
  %v2786 = vmul.f32 %v2779, %v2784
  %2788 = vrot.lane.b32.xlu0 %v2786, 32
  %v2789 = vpop.permute.xlu0 %2788
  %v2791 = vadd.f32 %v2781, %v2789
  %v2792 = vtanh.pop %v2791
  %2794 = vrot.lane.b32.xlu0 %v2792, 64
  %v2795 = vpop.permute.xlu0 %2794
  %v2797 = vmul.f32 %v2779, %v2795
  %2799 = vrot.lane.b32.xlu0 %v2626, 32
  %v2800 = vpop.permute.xlu0 %2799
  %v2801 = vsel %vm72, %v2800, 0
  %2803 = vmatprep.subr.mxu0 0.0
  %2804 = vmatpush1.msra.mxu0 0.0
  %2805 = vmatprep.subr.mxu0 0.0
  %2806 = vmatpush1.msra.mxu0 0.0
  %2807 = vmatprep.subr.mxu0 0.0
  %2808 = vmatpush1.msra.mxu0 0.0
  %2809 = vmatprep.subr.mxu0 0.0
  %2810 = vmatpush1.msra.mxu0 0.0
  %2811 = vmatprep.subr.mxu0 0.0
  %2812 = vmatpush1.msra.mxu0 0.0
  %2813 = vmatprep.subr.mxu0 0.0
  %2814 = vmatpush1.msra.mxu0 0.0
  %2815 = vmatprep.subr.mxu0 0.0
  %2816 = vmatpush1.msra.mxu0 0.0
  %2817 = vmatprep.subr.mxu0 0.0
  %2818 = vmatpush1.msra.mxu0 0.0
  %2819 = vmatprep.subr.mxu0 0.0
  %2820 = vmatpush1.msra.mxu0 0.0
  %2821 = vmatprep.subr.mxu0 0.0
  %2822 = vmatpush1.msra.mxu0 0.0
  %2823 = vmatprep.subr.mxu0 0.0
  %2824 = vmatpush1.msra.mxu0 0.0
  %2825 = vmatprep.subr.mxu0 0.0
  %2826 = vmatpush1.msra.mxu0 0.0
  %2827 = vmatprep.subr.mxu0 0.0
  %2828 = vmatpush1.msra.mxu0 %v29
  %2829 = vmatprep.subr.mxu0 0.0
  %2830 = vmatpush1.msra.mxu0 %v28
  %2831 = vmatprep.subr.mxu0 0.0
  %2832 = vmatpush1.msra.mxu0 %v27
  %2833 = vmatprep.subr.mxu0 0.0
  %2834 = vmatpush1.msra.mxu0 %v26
  %2835 = vmatprep.subr.mxu0 0.0
  %2836 = vmatpush2.msra.mxu0 0.0
  %2837 = vmatprep.subr.mxu0 0.0
  %2838 = vmatpush2.msra.mxu0 0.0
  %2839 = vmatprep.subr.mxu0 0.0
  %2840 = vmatpush2.msra.mxu0 0.0
  %2841 = vmatprep.subr.mxu0 0.0
  %2842 = vmatpush2.msra.mxu0 0.0
  %2843 = vmatprep.subr.mxu0 0.0
  %2844 = vmatpush2.msra.mxu0 0.0
  %2845 = vmatprep.subr.mxu0 0.0
  %2846 = vmatpush2.msra.mxu0 0.0
  %2847 = vmatprep.subr.mxu0 0.0
  %2848 = vmatpush2.msra.mxu0 0.0
  %2849 = vmatprep.subr.mxu0 0.0
  %2850 = vmatpush2.msra.mxu0 0.0
  %2851 = vmatprep.subr.mxu0 0.0
  %2852 = vmatpush2.msra.mxu0 0.0
  %2853 = vmatprep.subr.mxu0 0.0
  %2854 = vmatpush2.msra.mxu0 0.0
  %2855 = vmatprep.subr.mxu0 0.0
  %2856 = vmatpush2.msra.mxu0 0.0
  %2857 = vmatprep.subr.mxu0 0.0
  %2858 = vmatpush2.msra.mxu0 0.0
  %2859 = vmatprep.subr.mxu0 0.0
  %2860 = vmatpush2.msra.mxu0 0.0
  %2861 = vmatprep.subr.mxu0 0.0
  %2862 = vmatpush2.msra.mxu0 0.0
  %2863 = vmatprep.subr.mxu0 0.0
  %2864 = vmatpush2.msra.mxu0 0.0
  %2865 = vmatprep.subr.mxu0 0.0
  %2866 = vmatpush2.msra.mxu0 0.0
  %2867 = vmatprep.mubr.f32.mxu0 0.0
  %2868 = vmatmul.mubr.f32.gmra.mxu0 %v2801
  %v2869 = vpop.f32.mrf.mxu0
  %v2870 = vadd.f32 0.0, %v2869
  %v2871 = vpop.f32.mrf.mxu0
  %2872 = vdwg.mxu0
  %v2873 = vadd.f32 %v238, %v2870
  %v2874 = vxor.u32 %v2873, 2147483648
  %v2875 = vmul.f32 %v2874, 1.442695
  %v2876 = vpow.pop %v2875
  %v2877 = vadd.f32 %v2876, 1.0
  %v2878 = vrcp.pop %v2877
  %v2879 = vmul.f32 1.0, %v2878
  %v2880 = vtanh.pop %v2873
  %v2881 = vmul.f32 %v2879, %v2620
  %2883 = vrot.lane.b32.xlu0 %v2880, 64
  %v2884 = vpop.permute.xlu0 %2883
  %v2886 = vmul.f32 %v2879, %v2884
  %2888 = vrot.lane.b32.xlu0 %v2886, 32
  %v2889 = vpop.permute.xlu0 %2888
  %v2891 = vadd.f32 %v2881, %v2889
  %v2892 = vtanh.pop %v2891
  %2894 = vrot.lane.b32.xlu0 %v2892, 64
  %v2895 = vpop.permute.xlu0 %2894
  %v2897 = vmul.f32 %v2879, %v2895
  %2898 = vmatprep.subr.mxu0 0.0
  %2899 = vmatpush1.msra.mxu0 0.0
  %2900 = vmatprep.subr.mxu0 0.0
  %2901 = vmatpush1.msra.mxu0 0.0
  %2902 = vmatprep.subr.mxu0 0.0
  %2903 = vmatpush1.msra.mxu0 0.0
  %2904 = vmatprep.subr.mxu0 0.0
  %2905 = vmatpush1.msra.mxu0 0.0
  %2906 = vmatprep.subr.mxu0 0.0
  %2907 = vmatpush1.msra.mxu0 0.0
  %2908 = vmatprep.subr.mxu0 0.0
  %2909 = vmatpush1.msra.mxu0 0.0
  %2910 = vmatprep.subr.mxu0 0.0
  %2911 = vmatpush1.msra.mxu0 0.0
  %2912 = vmatprep.subr.mxu0 0.0
  %2913 = vmatpush1.msra.mxu0 0.0
  %2914 = vmatprep.subr.mxu0 0.0
  %2915 = vmatpush1.msra.mxu0 0.0
  %2916 = vmatprep.subr.mxu0 0.0
  %2917 = vmatpush1.msra.mxu0 0.0
  %2918 = vmatprep.subr.mxu0 0.0
  %2919 = vmatpush1.msra.mxu0 0.0
  %2920 = vmatprep.subr.mxu0 0.0
  %2921 = vmatpush1.msra.mxu0 0.0
  %2922 = vmatprep.subr.mxu0 0.0
  %2923 = vmatpush1.msra.mxu0 %v33
  %2924 = vmatprep.subr.mxu0 0.0
  %2925 = vmatpush1.msra.mxu0 %v32
  %2926 = vmatprep.subr.mxu0 0.0
  %2927 = vmatpush1.msra.mxu0 %v31
  %2928 = vmatprep.subr.mxu0 0.0
  %2929 = vmatpush1.msra.mxu0 %v30
  %2930 = vmatprep.subr.mxu0 0.0
  %2931 = vmatpush2.msra.mxu0 0.0
  %2932 = vmatprep.subr.mxu0 0.0
  %2933 = vmatpush2.msra.mxu0 0.0
  %2934 = vmatprep.subr.mxu0 0.0
  %2935 = vmatpush2.msra.mxu0 0.0
  %2936 = vmatprep.subr.mxu0 0.0
  %2937 = vmatpush2.msra.mxu0 0.0
  %2938 = vmatprep.subr.mxu0 0.0
  %2939 = vmatpush2.msra.mxu0 0.0
  %2940 = vmatprep.subr.mxu0 0.0
  %2941 = vmatpush2.msra.mxu0 0.0
  %2942 = vmatprep.subr.mxu0 0.0
  %2943 = vmatpush2.msra.mxu0 0.0
  %2944 = vmatprep.subr.mxu0 0.0
  %2945 = vmatpush2.msra.mxu0 0.0
  %2946 = vmatprep.subr.mxu0 0.0
  %2947 = vmatpush2.msra.mxu0 0.0
  %2948 = vmatprep.subr.mxu0 0.0
  %2949 = vmatpush2.msra.mxu0 0.0
  %2950 = vmatprep.subr.mxu0 0.0
  %2951 = vmatpush2.msra.mxu0 0.0
  %2952 = vmatprep.subr.mxu0 0.0
  %2953 = vmatpush2.msra.mxu0 0.0
  %2954 = vmatprep.subr.mxu0 0.0
  %2955 = vmatpush2.msra.mxu0 0.0
  %2956 = vmatprep.subr.mxu0 0.0
  %2957 = vmatpush2.msra.mxu0 0.0
  %2958 = vmatprep.subr.mxu0 0.0
  %2959 = vmatpush2.msra.mxu0 0.0
  %2960 = vmatprep.subr.mxu0 0.0
  %2961 = vmatpush2.msra.mxu0 0.0
  %2962 = vmatprep.mubr.f32.mxu0 0.0
  %2963 = vmatmul.mubr.f32.gmra.mxu0 %v2801
  %v2964 = vpop.f32.mrf.mxu0
  %v2965 = vadd.f32 0.0, %v2964
  %v2966 = vpop.f32.mrf.mxu0
  %2967 = vdwg.mxu0
  %v2968 = vadd.f32 %v43, %v2965
  %2970 = vrot.lane.b32.xlu0 %v2797, 32
  %v2971 = vpop.permute.xlu0 %2970
  %v2972 = vsel %vm72, %v2971, 0
  %2974 = vmatprep.subr.mxu0 0.0
  %2975 = vmatpush1.msra.mxu0 0.0
  %2976 = vmatprep.subr.mxu0 0.0
  %2977 = vmatpush1.msra.mxu0 0.0
  %2978 = vmatprep.subr.mxu0 0.0
  %2979 = vmatpush1.msra.mxu0 0.0
  %2980 = vmatprep.subr.mxu0 0.0
  %2981 = vmatpush1.msra.mxu0 0.0
  %2982 = vmatprep.subr.mxu0 0.0
  %2983 = vmatpush1.msra.mxu0 0.0
  %2984 = vmatprep.subr.mxu0 0.0
  %2985 = vmatpush1.msra.mxu0 0.0
  %2986 = vmatprep.subr.mxu0 0.0
  %2987 = vmatpush1.msra.mxu0 0.0
  %2988 = vmatprep.subr.mxu0 0.0
  %2989 = vmatpush1.msra.mxu0 0.0
  %2990 = vmatprep.subr.mxu0 0.0
  %2991 = vmatpush1.msra.mxu0 0.0
  %2992 = vmatprep.subr.mxu0 0.0
  %2993 = vmatpush1.msra.mxu0 0.0
  %2994 = vmatprep.subr.mxu0 0.0
  %2995 = vmatpush1.msra.mxu0 0.0
  %2996 = vmatprep.subr.mxu0 0.0
  %2997 = vmatpush1.msra.mxu0 0.0
  %2998 = vmatprep.subr.mxu0 0.0
  %2999 = vmatpush1.msra.mxu0 %v37
  %3000 = vmatprep.subr.mxu0 0.0
  %3001 = vmatpush1.msra.mxu0 %v36
  %3002 = vmatprep.subr.mxu0 0.0
  %3003 = vmatpush1.msra.mxu0 %v35
  %3004 = vmatprep.subr.mxu0 0.0
  %3005 = vmatpush1.msra.mxu0 %v34
  %3006 = vmatprep.subr.mxu0 0.0
  %3007 = vmatpush2.msra.mxu0 0.0
  %3008 = vmatprep.subr.mxu0 0.0
  %3009 = vmatpush2.msra.mxu0 0.0
  %3010 = vmatprep.subr.mxu0 0.0
  %3011 = vmatpush2.msra.mxu0 0.0
  %3012 = vmatprep.subr.mxu0 0.0
  %3013 = vmatpush2.msra.mxu0 0.0
  %3014 = vmatprep.subr.mxu0 0.0
  %3015 = vmatpush2.msra.mxu0 0.0
  %3016 = vmatprep.subr.mxu0 0.0
  %3017 = vmatpush2.msra.mxu0 0.0
  %3018 = vmatprep.subr.mxu0 0.0
  %3019 = vmatpush2.msra.mxu0 0.0
  %3020 = vmatprep.subr.mxu0 0.0
  %3021 = vmatpush2.msra.mxu0 0.0
  %3022 = vmatprep.subr.mxu0 0.0
  %3023 = vmatpush2.msra.mxu0 0.0
  %3024 = vmatprep.subr.mxu0 0.0
  %3025 = vmatpush2.msra.mxu0 0.0
  %3026 = vmatprep.subr.mxu0 0.0
  %3027 = vmatpush2.msra.mxu0 0.0
  %3028 = vmatprep.subr.mxu0 0.0
  %3029 = vmatpush2.msra.mxu0 0.0
  %3030 = vmatprep.subr.mxu0 0.0
  %3031 = vmatpush2.msra.mxu0 0.0
  %3032 = vmatprep.subr.mxu0 0.0
  %3033 = vmatpush2.msra.mxu0 0.0
  %3034 = vmatprep.subr.mxu0 0.0
  %3035 = vmatpush2.msra.mxu0 0.0
  %3036 = vmatprep.subr.mxu0 0.0
  %3037 = vmatpush2.msra.mxu0 0.0
  %3038 = vmatprep.mubr.f32.mxu0 0.0
  %3039 = vmatmul.mubr.f32.gmra.mxu0 %v2972
  %v3040 = vpop.f32.mrf.mxu0
  %v3041 = vadd.f32 0.0, %v3040
  %v3042 = vpop.f32.mrf.mxu0
  %3043 = vdwg.mxu0
  %v3044 = vadd.f32 %v2968, %v3041
  %v3045 = vxor.u32 %v3044, 2147483648
  %v3046 = vmul.f32 %v3045, 1.442695
  %v3047 = vpow.pop %v3046
  %v3048 = vadd.f32 %v3047, 1.0
  %v3049 = vrcp.pop %v3048
  %v3050 = vmul.f32 1.0, %v3049
  %v3051 = vtanh.pop %v3044
  %v3052 = vmul.f32 %v3050, %v2791
  %3054 = vrot.lane.b32.xlu0 %v3051, 64
  %v3055 = vpop.permute.xlu0 %3054
  %v3057 = vmul.f32 %v3050, %v3055
  %3059 = vrot.lane.b32.xlu0 %v3057, 32
  %v3060 = vpop.permute.xlu0 %3059
  %v3062 = vadd.f32 %v3052, %v3060
  %v3063 = vtanh.pop %v3062
  %3065 = vrot.lane.b32.xlu0 %v3063, 64
  %v3066 = vpop.permute.xlu0 %3065
  %v3068 = vmul.f32 %v3050, %v3066
  %3070 = vrot.lane.b32.xlu0 %v2897, 32
  %v3071 = vpop.permute.xlu0 %3070
  %v3072 = vsel %vm72, %v3071, 0
  %3074 = vmatprep.subr.mxu0 0.0
  %3075 = vmatpush1.msra.mxu0 0.0
  %3076 = vmatprep.subr.mxu0 0.0
  %3077 = vmatpush1.msra.mxu0 0.0
  %3078 = vmatprep.subr.mxu0 0.0
  %3079 = vmatpush1.msra.mxu0 0.0
  %3080 = vmatprep.subr.mxu0 0.0
  %3081 = vmatpush1.msra.mxu0 0.0
  %3082 = vmatprep.subr.mxu0 0.0
  %3083 = vmatpush1.msra.mxu0 0.0
  %3084 = vmatprep.subr.mxu0 0.0
  %3085 = vmatpush1.msra.mxu0 0.0
  %3086 = vmatprep.subr.mxu0 0.0
  %3087 = vmatpush1.msra.mxu0 0.0
  %3088 = vmatprep.subr.mxu0 0.0
  %3089 = vmatpush1.msra.mxu0 0.0
  %3090 = vmatprep.subr.mxu0 0.0
  %3091 = vmatpush1.msra.mxu0 0.0
  %3092 = vmatprep.subr.mxu0 0.0
  %3093 = vmatpush1.msra.mxu0 0.0
  %3094 = vmatprep.subr.mxu0 0.0
  %3095 = vmatpush1.msra.mxu0 0.0
  %3096 = vmatprep.subr.mxu0 0.0
  %3097 = vmatpush1.msra.mxu0 0.0
  %3098 = vmatprep.subr.mxu0 0.0
  %3099 = vmatpush1.msra.mxu0 %v29
  %3100 = vmatprep.subr.mxu0 0.0
  %3101 = vmatpush1.msra.mxu0 %v28
  %3102 = vmatprep.subr.mxu0 0.0
  %3103 = vmatpush1.msra.mxu0 %v27
  %3104 = vmatprep.subr.mxu0 0.0
  %3105 = vmatpush1.msra.mxu0 %v26
  %3106 = vmatprep.subr.mxu0 0.0
  %3107 = vmatpush2.msra.mxu0 0.0
  %3108 = vmatprep.subr.mxu0 0.0
  %3109 = vmatpush2.msra.mxu0 0.0
  %3110 = vmatprep.subr.mxu0 0.0
  %3111 = vmatpush2.msra.mxu0 0.0
  %3112 = vmatprep.subr.mxu0 0.0
  %3113 = vmatpush2.msra.mxu0 0.0
  %3114 = vmatprep.subr.mxu0 0.0
  %3115 = vmatpush2.msra.mxu0 0.0
  %3116 = vmatprep.subr.mxu0 0.0
  %3117 = vmatpush2.msra.mxu0 0.0
  %3118 = vmatprep.subr.mxu0 0.0
  %3119 = vmatpush2.msra.mxu0 0.0
  %3120 = vmatprep.subr.mxu0 0.0
  %3121 = vmatpush2.msra.mxu0 0.0
  %3122 = vmatprep.subr.mxu0 0.0
  %3123 = vmatpush2.msra.mxu0 0.0
  %3124 = vmatprep.subr.mxu0 0.0
  %3125 = vmatpush2.msra.mxu0 0.0
  %3126 = vmatprep.subr.mxu0 0.0
  %3127 = vmatpush2.msra.mxu0 0.0
  %3128 = vmatprep.subr.mxu0 0.0
  %3129 = vmatpush2.msra.mxu0 0.0
  %3130 = vmatprep.subr.mxu0 0.0
  %3131 = vmatpush2.msra.mxu0 0.0
  %3132 = vmatprep.subr.mxu0 0.0
  %3133 = vmatpush2.msra.mxu0 0.0
  %3134 = vmatprep.subr.mxu0 0.0
  %3135 = vmatpush2.msra.mxu0 0.0
  %3136 = vmatprep.subr.mxu0 0.0
  %3137 = vmatpush2.msra.mxu0 0.0
  %3138 = vmatprep.mubr.f32.mxu0 0.0
  %3139 = vmatmul.mubr.f32.gmra.mxu0 %v3072
  %v3140 = vpop.f32.mrf.mxu0
  %v3141 = vadd.f32 0.0, %v3140
  %v3142 = vpop.f32.mrf.mxu0
  %3143 = vdwg.mxu0
  %v3144 = vadd.f32 %v243, %v3141
  %v3145 = vxor.u32 %v3144, 2147483648
  %v3146 = vmul.f32 %v3145, 1.442695
  %v3147 = vpow.pop %v3146
  %v3148 = vadd.f32 %v3147, 1.0
  %v3149 = vrcp.pop %v3148
  %v3150 = vmul.f32 1.0, %v3149
  %v3151 = vtanh.pop %v3144
  %v3152 = vmul.f32 %v3150, %v2891
  %3154 = vrot.lane.b32.xlu0 %v3151, 64
  %v3155 = vpop.permute.xlu0 %3154
  %v3157 = vmul.f32 %v3150, %v3155
  %3159 = vrot.lane.b32.xlu0 %v3157, 32
  %v3160 = vpop.permute.xlu0 %3159
  %v3162 = vadd.f32 %v3152, %v3160
  %v3163 = vtanh.pop %v3162
  %3165 = vrot.lane.b32.xlu0 %v3163, 64
  %v3166 = vpop.permute.xlu0 %3165
  %v3168 = vmul.f32 %v3150, %v3166
  %3169 = vmatprep.subr.mxu0 0.0
  %3170 = vmatpush1.msra.mxu0 0.0
  %3171 = vmatprep.subr.mxu0 0.0
  %3172 = vmatpush1.msra.mxu0 0.0
  %3173 = vmatprep.subr.mxu0 0.0
  %3174 = vmatpush1.msra.mxu0 0.0
  %3175 = vmatprep.subr.mxu0 0.0
  %3176 = vmatpush1.msra.mxu0 0.0
  %3177 = vmatprep.subr.mxu0 0.0
  %3178 = vmatpush1.msra.mxu0 0.0
  %3179 = vmatprep.subr.mxu0 0.0
  %3180 = vmatpush1.msra.mxu0 0.0
  %3181 = vmatprep.subr.mxu0 0.0
  %3182 = vmatpush1.msra.mxu0 0.0
  %3183 = vmatprep.subr.mxu0 0.0
  %3184 = vmatpush1.msra.mxu0 0.0
  %3185 = vmatprep.subr.mxu0 0.0
  %3186 = vmatpush1.msra.mxu0 0.0
  %3187 = vmatprep.subr.mxu0 0.0
  %3188 = vmatpush1.msra.mxu0 0.0
  %3189 = vmatprep.subr.mxu0 0.0
  %3190 = vmatpush1.msra.mxu0 0.0
  %3191 = vmatprep.subr.mxu0 0.0
  %3192 = vmatpush1.msra.mxu0 0.0
  %3193 = vmatprep.subr.mxu0 0.0
  %3194 = vmatpush1.msra.mxu0 %v33
  %3195 = vmatprep.subr.mxu0 0.0
  %3196 = vmatpush1.msra.mxu0 %v32
  %3197 = vmatprep.subr.mxu0 0.0
  %3198 = vmatpush1.msra.mxu0 %v31
  %3199 = vmatprep.subr.mxu0 0.0
  %3200 = vmatpush1.msra.mxu0 %v30
  %3201 = vmatprep.subr.mxu0 0.0
  %3202 = vmatpush2.msra.mxu0 0.0
  %3203 = vmatprep.subr.mxu0 0.0
  %3204 = vmatpush2.msra.mxu0 0.0
  %3205 = vmatprep.subr.mxu0 0.0
  %3206 = vmatpush2.msra.mxu0 0.0
  %3207 = vmatprep.subr.mxu0 0.0
  %3208 = vmatpush2.msra.mxu0 0.0
  %3209 = vmatprep.subr.mxu0 0.0
  %3210 = vmatpush2.msra.mxu0 0.0
  %3211 = vmatprep.subr.mxu0 0.0
  %3212 = vmatpush2.msra.mxu0 0.0
  %3213 = vmatprep.subr.mxu0 0.0
  %3214 = vmatpush2.msra.mxu0 0.0
  %3215 = vmatprep.subr.mxu0 0.0
  %3216 = vmatpush2.msra.mxu0 0.0
  %3217 = vmatprep.subr.mxu0 0.0
  %3218 = vmatpush2.msra.mxu0 0.0
  %3219 = vmatprep.subr.mxu0 0.0
  %3220 = vmatpush2.msra.mxu0 0.0
  %3221 = vmatprep.subr.mxu0 0.0
  %3222 = vmatpush2.msra.mxu0 0.0
  %3223 = vmatprep.subr.mxu0 0.0
  %3224 = vmatpush2.msra.mxu0 0.0
  %3225 = vmatprep.subr.mxu0 0.0
  %3226 = vmatpush2.msra.mxu0 0.0
  %3227 = vmatprep.subr.mxu0 0.0
  %3228 = vmatpush2.msra.mxu0 0.0
  %3229 = vmatprep.subr.mxu0 0.0
  %3230 = vmatpush2.msra.mxu0 0.0
  %3231 = vmatprep.subr.mxu0 0.0
  %3232 = vmatpush2.msra.mxu0 0.0
  %3233 = vmatprep.mubr.f32.mxu0 0.0
  %3234 = vmatmul.mubr.f32.gmra.mxu0 %v3072
  %v3235 = vpop.f32.mrf.mxu0
  %v3236 = vadd.f32 0.0, %v3235
  %v3237 = vpop.f32.mrf.mxu0
  %3238 = vdwg.mxu0
  %v3239 = vadd.f32 %v43, %v3236
  %3241 = vrot.lane.b32.xlu0 %v3068, 32
  %v3242 = vpop.permute.xlu0 %3241
  %v3243 = vsel %vm72, %v3242, 0
  %3245 = vmatprep.subr.mxu0 0.0
  %3246 = vmatpush1.msra.mxu0 0.0
  %3247 = vmatprep.subr.mxu0 0.0
  %3248 = vmatpush1.msra.mxu0 0.0
  %3249 = vmatprep.subr.mxu0 0.0
  %3250 = vmatpush1.msra.mxu0 0.0
  %3251 = vmatprep.subr.mxu0 0.0
  %3252 = vmatpush1.msra.mxu0 0.0
  %3253 = vmatprep.subr.mxu0 0.0
  %3254 = vmatpush1.msra.mxu0 0.0
  %3255 = vmatprep.subr.mxu0 0.0
  %3256 = vmatpush1.msra.mxu0 0.0
  %3257 = vmatprep.subr.mxu0 0.0
  %3258 = vmatpush1.msra.mxu0 0.0
  %3259 = vmatprep.subr.mxu0 0.0
  %3260 = vmatpush1.msra.mxu0 0.0
  %3261 = vmatprep.subr.mxu0 0.0
  %3262 = vmatpush1.msra.mxu0 0.0
  %3263 = vmatprep.subr.mxu0 0.0
  %3264 = vmatpush1.msra.mxu0 0.0
  %3265 = vmatprep.subr.mxu0 0.0
  %3266 = vmatpush1.msra.mxu0 0.0
  %3267 = vmatprep.subr.mxu0 0.0
  %3268 = vmatpush1.msra.mxu0 0.0
  %3269 = vmatprep.subr.mxu0 0.0
  %3270 = vmatpush1.msra.mxu0 %v37
  %3271 = vmatprep.subr.mxu0 0.0
  %3272 = vmatpush1.msra.mxu0 %v36
  %3273 = vmatprep.subr.mxu0 0.0
  %3274 = vmatpush1.msra.mxu0 %v35
  %3275 = vmatprep.subr.mxu0 0.0
  %3276 = vmatpush1.msra.mxu0 %v34
  %3277 = vmatprep.subr.mxu0 0.0
  %3278 = vmatpush2.msra.mxu0 0.0
  %3279 = vmatprep.subr.mxu0 0.0
  %3280 = vmatpush2.msra.mxu0 0.0
  %3281 = vmatprep.subr.mxu0 0.0
  %3282 = vmatpush2.msra.mxu0 0.0
  %3283 = vmatprep.subr.mxu0 0.0
  %3284 = vmatpush2.msra.mxu0 0.0
  %3285 = vmatprep.subr.mxu0 0.0
  %3286 = vmatpush2.msra.mxu0 0.0
  %3287 = vmatprep.subr.mxu0 0.0
  %3288 = vmatpush2.msra.mxu0 0.0
  %3289 = vmatprep.subr.mxu0 0.0
  %3290 = vmatpush2.msra.mxu0 0.0
  %3291 = vmatprep.subr.mxu0 0.0
  %3292 = vmatpush2.msra.mxu0 0.0
  %3293 = vmatprep.subr.mxu0 0.0
  %3294 = vmatpush2.msra.mxu0 0.0
  %3295 = vmatprep.subr.mxu0 0.0
  %3296 = vmatpush2.msra.mxu0 0.0
  %3297 = vmatprep.subr.mxu0 0.0
  %3298 = vmatpush2.msra.mxu0 0.0
  %3299 = vmatprep.subr.mxu0 0.0
  %3300 = vmatpush2.msra.mxu0 0.0
  %3301 = vmatprep.subr.mxu0 0.0
  %3302 = vmatpush2.msra.mxu0 0.0
  %3303 = vmatprep.subr.mxu0 0.0
  %3304 = vmatpush2.msra.mxu0 0.0
  %3305 = vmatprep.subr.mxu0 0.0
  %3306 = vmatpush2.msra.mxu0 0.0
  %3307 = vmatprep.subr.mxu0 0.0
  %3308 = vmatpush2.msra.mxu0 0.0
  %3309 = vmatprep.mubr.f32.mxu0 0.0
  %3310 = vmatmul.mubr.f32.gmra.mxu0 %v3243
  %v3311 = vpop.f32.mrf.mxu0
  %v3312 = vadd.f32 0.0, %v3311
  %v3313 = vpop.f32.mrf.mxu0
  %3314 = vdwg.mxu0
  %v3315 = vadd.f32 %v3239, %v3312
  %v3316 = vxor.u32 %v3315, 2147483648
  %v3317 = vmul.f32 %v3316, 1.442695
  %v3318 = vpow.pop %v3317
  %v3319 = vadd.f32 %v3318, 1.0
  %v3320 = vrcp.pop %v3319
  %v3321 = vmul.f32 1.0, %v3320
  %v3322 = vtanh.pop %v3315
  %v3323 = vmul.f32 %v3321, %v3062
  %3325 = vrot.lane.b32.xlu0 %v3322, 64
  %v3326 = vpop.permute.xlu0 %3325
  %v3328 = vmul.f32 %v3321, %v3326
  %3330 = vrot.lane.b32.xlu0 %v3328, 32
  %v3331 = vpop.permute.xlu0 %3330
  %v3333 = vadd.f32 %v3323, %v3331
  %v3334 = vtanh.pop %v3333
  %3336 = vrot.lane.b32.xlu0 %v3334, 64
  %v3337 = vpop.permute.xlu0 %3336
  %v3339 = vmul.f32 %v3321, %v3337
  %3341 = vrot.lane.b32.xlu0 %v3168, 32
  %v3342 = vpop.permute.xlu0 %3341
  %v3343 = vsel %vm72, %v3342, 0
  %3345 = vmatprep.subr.mxu0 0.0
  %3346 = vmatpush1.msra.mxu0 0.0
  %3347 = vmatprep.subr.mxu0 0.0
  %3348 = vmatpush1.msra.mxu0 0.0
  %3349 = vmatprep.subr.mxu0 0.0
  %3350 = vmatpush1.msra.mxu0 0.0
  %3351 = vmatprep.subr.mxu0 0.0
  %3352 = vmatpush1.msra.mxu0 0.0
  %3353 = vmatprep.subr.mxu0 0.0
  %3354 = vmatpush1.msra.mxu0 0.0
  %3355 = vmatprep.subr.mxu0 0.0
  %3356 = vmatpush1.msra.mxu0 0.0
  %3357 = vmatprep.subr.mxu0 0.0
  %3358 = vmatpush1.msra.mxu0 0.0
  %3359 = vmatprep.subr.mxu0 0.0
  %3360 = vmatpush1.msra.mxu0 0.0
  %3361 = vmatprep.subr.mxu0 0.0
  %3362 = vmatpush1.msra.mxu0 0.0
  %3363 = vmatprep.subr.mxu0 0.0
  %3364 = vmatpush1.msra.mxu0 0.0
  %3365 = vmatprep.subr.mxu0 0.0
  %3366 = vmatpush1.msra.mxu0 0.0
  %3367 = vmatprep.subr.mxu0 0.0
  %3368 = vmatpush1.msra.mxu0 0.0
  %3369 = vmatprep.subr.mxu0 0.0
  %3370 = vmatpush1.msra.mxu0 %v29
  %3371 = vmatprep.subr.mxu0 0.0
  %3372 = vmatpush1.msra.mxu0 %v28
  %3373 = vmatprep.subr.mxu0 0.0
  %3374 = vmatpush1.msra.mxu0 %v27
  %3375 = vmatprep.subr.mxu0 0.0
  %3376 = vmatpush1.msra.mxu0 %v26
  %3377 = vmatprep.subr.mxu0 0.0
  %3378 = vmatpush2.msra.mxu0 0.0
  %3379 = vmatprep.subr.mxu0 0.0
  %3380 = vmatpush2.msra.mxu0 0.0
  %3381 = vmatprep.subr.mxu0 0.0
  %3382 = vmatpush2.msra.mxu0 0.0
  %3383 = vmatprep.subr.mxu0 0.0
  %3384 = vmatpush2.msra.mxu0 0.0
  %3385 = vmatprep.subr.mxu0 0.0
  %3386 = vmatpush2.msra.mxu0 0.0
  %3387 = vmatprep.subr.mxu0 0.0
  %3388 = vmatpush2.msra.mxu0 0.0
  %3389 = vmatprep.subr.mxu0 0.0
  %3390 = vmatpush2.msra.mxu0 0.0
  %3391 = vmatprep.subr.mxu0 0.0
  %3392 = vmatpush2.msra.mxu0 0.0
  %3393 = vmatprep.subr.mxu0 0.0
  %3394 = vmatpush2.msra.mxu0 0.0
  %3395 = vmatprep.subr.mxu0 0.0
  %3396 = vmatpush2.msra.mxu0 0.0
  %3397 = vmatprep.subr.mxu0 0.0
  %3398 = vmatpush2.msra.mxu0 0.0
  %3399 = vmatprep.subr.mxu0 0.0
  %3400 = vmatpush2.msra.mxu0 0.0
  %3401 = vmatprep.subr.mxu0 0.0
  %3402 = vmatpush2.msra.mxu0 0.0
  %3403 = vmatprep.subr.mxu0 0.0
  %3404 = vmatpush2.msra.mxu0 0.0
  %3405 = vmatprep.subr.mxu0 0.0
  %3406 = vmatpush2.msra.mxu0 0.0
  %3407 = vmatprep.subr.mxu0 0.0
  %3408 = vmatpush2.msra.mxu0 0.0
  %3409 = vmatprep.mubr.f32.mxu0 0.0
  %3410 = vmatmul.mubr.f32.gmra.mxu0 %v3343
  %v3411 = vpop.f32.mrf.mxu0
  %v3412 = vadd.f32 0.0, %v3411
  %v3413 = vpop.f32.mrf.mxu0
  %3414 = vdwg.mxu0
  %v3415 = vadd.f32 %v248, %v3412
  %v3416 = vxor.u32 %v3415, 2147483648
  %v3417 = vmul.f32 %v3416, 1.442695
  %v3418 = vpow.pop %v3417
  %v3419 = vadd.f32 %v3418, 1.0
  %v3420 = vrcp.pop %v3419
  %v3421 = vmul.f32 1.0, %v3420
  %v3422 = vtanh.pop %v3415
  %v3423 = vmul.f32 %v3421, %v3162
  %3425 = vrot.lane.b32.xlu0 %v3422, 64
  %v3426 = vpop.permute.xlu0 %3425
  %v3428 = vmul.f32 %v3421, %v3426
  %3430 = vrot.lane.b32.xlu0 %v3428, 32
  %v3431 = vpop.permute.xlu0 %3430
  %v3433 = vadd.f32 %v3423, %v3431
  %v3434 = vtanh.pop %v3433
  %3436 = vrot.lane.b32.xlu0 %v3434, 64
  %v3437 = vpop.permute.xlu0 %3436
  %v3439 = vmul.f32 %v3421, %v3437
  %3440 = vmatprep.subr.mxu0 0.0
  %3441 = vmatpush1.msra.mxu0 0.0
  %3442 = vmatprep.subr.mxu0 0.0
  %3443 = vmatpush1.msra.mxu0 0.0
  %3444 = vmatprep.subr.mxu0 0.0
  %3445 = vmatpush1.msra.mxu0 0.0
  %3446 = vmatprep.subr.mxu0 0.0
  %3447 = vmatpush1.msra.mxu0 0.0
  %3448 = vmatprep.subr.mxu0 0.0
  %3449 = vmatpush1.msra.mxu0 0.0
  %3450 = vmatprep.subr.mxu0 0.0
  %3451 = vmatpush1.msra.mxu0 0.0
  %3452 = vmatprep.subr.mxu0 0.0
  %3453 = vmatpush1.msra.mxu0 0.0
  %3454 = vmatprep.subr.mxu0 0.0
  %3455 = vmatpush1.msra.mxu0 0.0
  %3456 = vmatprep.subr.mxu0 0.0
  %3457 = vmatpush1.msra.mxu0 0.0
  %3458 = vmatprep.subr.mxu0 0.0
  %3459 = vmatpush1.msra.mxu0 0.0
  %3460 = vmatprep.subr.mxu0 0.0
  %3461 = vmatpush1.msra.mxu0 0.0
  %3462 = vmatprep.subr.mxu0 0.0
  %3463 = vmatpush1.msra.mxu0 0.0
  %3464 = vmatprep.subr.mxu0 0.0
  %3465 = vmatpush1.msra.mxu0 %v33
  %3466 = vmatprep.subr.mxu0 0.0
  %3467 = vmatpush1.msra.mxu0 %v32
  %3468 = vmatprep.subr.mxu0 0.0
  %3469 = vmatpush1.msra.mxu0 %v31
  %3470 = vmatprep.subr.mxu0 0.0
  %3471 = vmatpush1.msra.mxu0 %v30
  %3472 = vmatprep.subr.mxu0 0.0
  %3473 = vmatpush2.msra.mxu0 0.0
  %3474 = vmatprep.subr.mxu0 0.0
  %3475 = vmatpush2.msra.mxu0 0.0
  %3476 = vmatprep.subr.mxu0 0.0
  %3477 = vmatpush2.msra.mxu0 0.0
  %3478 = vmatprep.subr.mxu0 0.0
  %3479 = vmatpush2.msra.mxu0 0.0
  %3480 = vmatprep.subr.mxu0 0.0
  %3481 = vmatpush2.msra.mxu0 0.0
  %3482 = vmatprep.subr.mxu0 0.0
  %3483 = vmatpush2.msra.mxu0 0.0
  %3484 = vmatprep.subr.mxu0 0.0
  %3485 = vmatpush2.msra.mxu0 0.0
  %3486 = vmatprep.subr.mxu0 0.0
  %3487 = vmatpush2.msra.mxu0 0.0
  %3488 = vmatprep.subr.mxu0 0.0
  %3489 = vmatpush2.msra.mxu0 0.0
  %3490 = vmatprep.subr.mxu0 0.0
  %3491 = vmatpush2.msra.mxu0 0.0
  %3492 = vmatprep.subr.mxu0 0.0
  %3493 = vmatpush2.msra.mxu0 0.0
  %3494 = vmatprep.subr.mxu0 0.0
  %3495 = vmatpush2.msra.mxu0 0.0
  %3496 = vmatprep.subr.mxu0 0.0
  %3497 = vmatpush2.msra.mxu0 0.0
  %3498 = vmatprep.subr.mxu0 0.0
  %3499 = vmatpush2.msra.mxu0 0.0
  %3500 = vmatprep.subr.mxu0 0.0
  %3501 = vmatpush2.msra.mxu0 0.0
  %3502 = vmatprep.subr.mxu0 0.0
  %3503 = vmatpush2.msra.mxu0 0.0
  %3504 = vmatprep.mubr.f32.mxu0 0.0
  %3505 = vmatmul.mubr.f32.gmra.mxu0 %v3343
  %v3506 = vpop.f32.mrf.mxu0
  %v3507 = vadd.f32 0.0, %v3506
  %v3508 = vpop.f32.mrf.mxu0
  %3509 = vdwg.mxu0
  %v3510 = vadd.f32 %v43, %v3507
  %3512 = vrot.lane.b32.xlu0 %v3339, 32
  %v3513 = vpop.permute.xlu0 %3512
  %v3514 = vsel %vm72, %v3513, 0
  %3516 = vmatprep.subr.mxu0 0.0
  %3517 = vmatpush1.msra.mxu0 0.0
  %3518 = vmatprep.subr.mxu0 0.0
  %3519 = vmatpush1.msra.mxu0 0.0
  %3520 = vmatprep.subr.mxu0 0.0
  %3521 = vmatpush1.msra.mxu0 0.0
  %3522 = vmatprep.subr.mxu0 0.0
  %3523 = vmatpush1.msra.mxu0 0.0
  %3524 = vmatprep.subr.mxu0 0.0
  %3525 = vmatpush1.msra.mxu0 0.0
  %3526 = vmatprep.subr.mxu0 0.0
  %3527 = vmatpush1.msra.mxu0 0.0
  %3528 = vmatprep.subr.mxu0 0.0
  %3529 = vmatpush1.msra.mxu0 0.0
  %3530 = vmatprep.subr.mxu0 0.0
  %3531 = vmatpush1.msra.mxu0 0.0
  %3532 = vmatprep.subr.mxu0 0.0
  %3533 = vmatpush1.msra.mxu0 0.0
  %3534 = vmatprep.subr.mxu0 0.0
  %3535 = vmatpush1.msra.mxu0 0.0
  %3536 = vmatprep.subr.mxu0 0.0
  %3537 = vmatpush1.msra.mxu0 0.0
  %3538 = vmatprep.subr.mxu0 0.0
  %3539 = vmatpush1.msra.mxu0 0.0
  %3540 = vmatprep.subr.mxu0 0.0
  %3541 = vmatpush1.msra.mxu0 %v37
  %3542 = vmatprep.subr.mxu0 0.0
  %3543 = vmatpush1.msra.mxu0 %v36
  %3544 = vmatprep.subr.mxu0 0.0
  %3545 = vmatpush1.msra.mxu0 %v35
  %3546 = vmatprep.subr.mxu0 0.0
  %3547 = vmatpush1.msra.mxu0 %v34
  %3548 = vmatprep.subr.mxu0 0.0
  %3549 = vmatpush2.msra.mxu0 0.0
  %3550 = vmatprep.subr.mxu0 0.0
  %3551 = vmatpush2.msra.mxu0 0.0
  %3552 = vmatprep.subr.mxu0 0.0
  %3553 = vmatpush2.msra.mxu0 0.0
  %3554 = vmatprep.subr.mxu0 0.0
  %3555 = vmatpush2.msra.mxu0 0.0
  %3556 = vmatprep.subr.mxu0 0.0
  %3557 = vmatpush2.msra.mxu0 0.0
  %3558 = vmatprep.subr.mxu0 0.0
  %3559 = vmatpush2.msra.mxu0 0.0
  %3560 = vmatprep.subr.mxu0 0.0
  %3561 = vmatpush2.msra.mxu0 0.0
  %3562 = vmatprep.subr.mxu0 0.0
  %3563 = vmatpush2.msra.mxu0 0.0
  %3564 = vmatprep.subr.mxu0 0.0
  %3565 = vmatpush2.msra.mxu0 0.0
  %3566 = vmatprep.subr.mxu0 0.0
  %3567 = vmatpush2.msra.mxu0 0.0
  %3568 = vmatprep.subr.mxu0 0.0
  %3569 = vmatpush2.msra.mxu0 0.0
  %3570 = vmatprep.subr.mxu0 0.0
  %3571 = vmatpush2.msra.mxu0 0.0
  %3572 = vmatprep.subr.mxu0 0.0
  %3573 = vmatpush2.msra.mxu0 0.0
  %3574 = vmatprep.subr.mxu0 0.0
  %3575 = vmatpush2.msra.mxu0 0.0
  %3576 = vmatprep.subr.mxu0 0.0
  %3577 = vmatpush2.msra.mxu0 0.0
  %3578 = vmatprep.subr.mxu0 0.0
  %3579 = vmatpush2.msra.mxu0 0.0
  %3580 = vmatprep.mubr.f32.mxu0 0.0
  %3581 = vmatmul.mubr.f32.gmra.mxu0 %v3514
  %v3582 = vpop.f32.mrf.mxu0
  %v3583 = vadd.f32 0.0, %v3582
  %v3584 = vpop.f32.mrf.mxu0
  %3585 = vdwg.mxu0
  %v3586 = vadd.f32 %v3510, %v3583
  %v3587 = vxor.u32 %v3586, 2147483648
  %v3588 = vmul.f32 %v3587, 1.442695
  %v3589 = vpow.pop %v3588
  %v3590 = vadd.f32 %v3589, 1.0
  %v3591 = vrcp.pop %v3590
  %v3592 = vmul.f32 1.0, %v3591
  %v3593 = vtanh.pop %v3586
  %v3594 = vmul.f32 %v3592, %v3333
  %3596 = vrot.lane.b32.xlu0 %v3593, 64
  %v3597 = vpop.permute.xlu0 %3596
  %v3599 = vmul.f32 %v3592, %v3597
  %3601 = vrot.lane.b32.xlu0 %v3599, 32
  %v3602 = vpop.permute.xlu0 %3601
  %v3604 = vadd.f32 %v3594, %v3602
  %v3605 = vtanh.pop %v3604
  %3607 = vrot.lane.b32.xlu0 %v3605, 64
  %v3608 = vpop.permute.xlu0 %3607
  %v3610 = vmul.f32 %v3592, %v3608
  %3612 = vrot.lane.b32.xlu0 %v3439, 32
  %v3613 = vpop.permute.xlu0 %3612
  %v3614 = vsel %vm72, %v3613, 0
  %3616 = vmatprep.subr.mxu0 0.0
  %3617 = vmatpush1.msra.mxu0 0.0
  %3618 = vmatprep.subr.mxu0 0.0
  %3619 = vmatpush1.msra.mxu0 0.0
  %3620 = vmatprep.subr.mxu0 0.0
  %3621 = vmatpush1.msra.mxu0 0.0
  %3622 = vmatprep.subr.mxu0 0.0
  %3623 = vmatpush1.msra.mxu0 0.0
  %3624 = vmatprep.subr.mxu0 0.0
  %3625 = vmatpush1.msra.mxu0 0.0
  %3626 = vmatprep.subr.mxu0 0.0
  %3627 = vmatpush1.msra.mxu0 0.0
  %3628 = vmatprep.subr.mxu0 0.0
  %3629 = vmatpush1.msra.mxu0 0.0
  %3630 = vmatprep.subr.mxu0 0.0
  %3631 = vmatpush1.msra.mxu0 0.0
  %3632 = vmatprep.subr.mxu0 0.0
  %3633 = vmatpush1.msra.mxu0 0.0
  %3634 = vmatprep.subr.mxu0 0.0
  %3635 = vmatpush1.msra.mxu0 0.0
  %3636 = vmatprep.subr.mxu0 0.0
  %3637 = vmatpush1.msra.mxu0 0.0
  %3638 = vmatprep.subr.mxu0 0.0
  %3639 = vmatpush1.msra.mxu0 0.0
  %3640 = vmatprep.subr.mxu0 0.0
  %3641 = vmatpush1.msra.mxu0 %v29
  %3642 = vmatprep.subr.mxu0 0.0
  %3643 = vmatpush1.msra.mxu0 %v28
  %3644 = vmatprep.subr.mxu0 0.0
  %3645 = vmatpush1.msra.mxu0 %v27
  %3646 = vmatprep.subr.mxu0 0.0
  %3647 = vmatpush1.msra.mxu0 %v26
  %3648 = vmatprep.subr.mxu0 0.0
  %3649 = vmatpush2.msra.mxu0 0.0
  %3650 = vmatprep.subr.mxu0 0.0
  %3651 = vmatpush2.msra.mxu0 0.0
  %3652 = vmatprep.subr.mxu0 0.0
  %3653 = vmatpush2.msra.mxu0 0.0
  %3654 = vmatprep.subr.mxu0 0.0
  %3655 = vmatpush2.msra.mxu0 0.0
  %3656 = vmatprep.subr.mxu0 0.0
  %3657 = vmatpush2.msra.mxu0 0.0
  %3658 = vmatprep.subr.mxu0 0.0
  %3659 = vmatpush2.msra.mxu0 0.0
  %3660 = vmatprep.subr.mxu0 0.0
  %3661 = vmatpush2.msra.mxu0 0.0
  %3662 = vmatprep.subr.mxu0 0.0
  %3663 = vmatpush2.msra.mxu0 0.0
  %3664 = vmatprep.subr.mxu0 0.0
  %3665 = vmatpush2.msra.mxu0 0.0
  %3666 = vmatprep.subr.mxu0 0.0
  %3667 = vmatpush2.msra.mxu0 0.0
  %3668 = vmatprep.subr.mxu0 0.0
  %3669 = vmatpush2.msra.mxu0 0.0
  %3670 = vmatprep.subr.mxu0 0.0
  %3671 = vmatpush2.msra.mxu0 0.0
  %3672 = vmatprep.subr.mxu0 0.0
  %3673 = vmatpush2.msra.mxu0 0.0
  %3674 = vmatprep.subr.mxu0 0.0
  %3675 = vmatpush2.msra.mxu0 0.0
  %3676 = vmatprep.subr.mxu0 0.0
  %3677 = vmatpush2.msra.mxu0 0.0
  %3678 = vmatprep.subr.mxu0 0.0
  %3679 = vmatpush2.msra.mxu0 0.0
  %3680 = vmatprep.mubr.f32.mxu0 0.0
  %3681 = vmatmul.mubr.f32.gmra.mxu0 %v3614
  %v3682 = vpop.f32.mrf.mxu0
  %v3683 = vadd.f32 0.0, %v3682
  %v3684 = vpop.f32.mrf.mxu0
  %3685 = vdwg.mxu0
  %v3686 = vadd.f32 %v253, %v3683
  %v3687 = vxor.u32 %v3686, 2147483648
  %v3688 = vmul.f32 %v3687, 1.442695
  %v3689 = vpow.pop %v3688
  %v3690 = vadd.f32 %v3689, 1.0
  %v3691 = vrcp.pop %v3690
  %v3692 = vmul.f32 1.0, %v3691
  %v3693 = vtanh.pop %v3686
  %v3694 = vmul.f32 %v3692, %v3433
  %3696 = vrot.lane.b32.xlu0 %v3693, 64
  %v3697 = vpop.permute.xlu0 %3696
  %v3699 = vmul.f32 %v3692, %v3697
  %3701 = vrot.lane.b32.xlu0 %v3699, 32
  %v3702 = vpop.permute.xlu0 %3701
  %v3704 = vadd.f32 %v3694, %v3702
  %v3705 = vtanh.pop %v3704
  %3707 = vrot.lane.b32.xlu0 %v3705, 64
  %v3708 = vpop.permute.xlu0 %3707
  %v3710 = vmul.f32 %v3692, %v3708
  %3711 = vmatprep.subr.mxu0 0.0
  %3712 = vmatpush1.msra.mxu0 0.0
  %3713 = vmatprep.subr.mxu0 0.0
  %3714 = vmatpush1.msra.mxu0 0.0
  %3715 = vmatprep.subr.mxu0 0.0
  %3716 = vmatpush1.msra.mxu0 0.0
  %3717 = vmatprep.subr.mxu0 0.0
  %3718 = vmatpush1.msra.mxu0 0.0
  %3719 = vmatprep.subr.mxu0 0.0
  %3720 = vmatpush1.msra.mxu0 0.0
  %3721 = vmatprep.subr.mxu0 0.0
  %3722 = vmatpush1.msra.mxu0 0.0
  %3723 = vmatprep.subr.mxu0 0.0
  %3724 = vmatpush1.msra.mxu0 0.0
  %3725 = vmatprep.subr.mxu0 0.0
  %3726 = vmatpush1.msra.mxu0 0.0
  %3727 = vmatprep.subr.mxu0 0.0
  %3728 = vmatpush1.msra.mxu0 0.0
  %3729 = vmatprep.subr.mxu0 0.0
  %3730 = vmatpush1.msra.mxu0 0.0
  %3731 = vmatprep.subr.mxu0 0.0
  %3732 = vmatpush1.msra.mxu0 0.0
  %3733 = vmatprep.subr.mxu0 0.0
  %3734 = vmatpush1.msra.mxu0 0.0
  %3735 = vmatprep.subr.mxu0 0.0
  %3736 = vmatpush1.msra.mxu0 %v33
  %3737 = vmatprep.subr.mxu0 0.0
  %3738 = vmatpush1.msra.mxu0 %v32
  %3739 = vmatprep.subr.mxu0 0.0
  %3740 = vmatpush1.msra.mxu0 %v31
  %3741 = vmatprep.subr.mxu0 0.0
  %3742 = vmatpush1.msra.mxu0 %v30
  %3743 = vmatprep.subr.mxu0 0.0
  %3744 = vmatpush2.msra.mxu0 0.0
  %3745 = vmatprep.subr.mxu0 0.0
  %3746 = vmatpush2.msra.mxu0 0.0
  %3747 = vmatprep.subr.mxu0 0.0
  %3748 = vmatpush2.msra.mxu0 0.0
  %3749 = vmatprep.subr.mxu0 0.0
  %3750 = vmatpush2.msra.mxu0 0.0
  %3751 = vmatprep.subr.mxu0 0.0
  %3752 = vmatpush2.msra.mxu0 0.0
  %3753 = vmatprep.subr.mxu0 0.0
  %3754 = vmatpush2.msra.mxu0 0.0
  %3755 = vmatprep.subr.mxu0 0.0
  %3756 = vmatpush2.msra.mxu0 0.0
  %3757 = vmatprep.subr.mxu0 0.0
  %3758 = vmatpush2.msra.mxu0 0.0
  %3759 = vmatprep.subr.mxu0 0.0
  %3760 = vmatpush2.msra.mxu0 0.0
  %3761 = vmatprep.subr.mxu0 0.0
  %3762 = vmatpush2.msra.mxu0 0.0
  %3763 = vmatprep.subr.mxu0 0.0
  %3764 = vmatpush2.msra.mxu0 0.0
  %3765 = vmatprep.subr.mxu0 0.0
  %3766 = vmatpush2.msra.mxu0 0.0
  %3767 = vmatprep.subr.mxu0 0.0
  %3768 = vmatpush2.msra.mxu0 0.0
  %3769 = vmatprep.subr.mxu0 0.0
  %3770 = vmatpush2.msra.mxu0 0.0
  %3771 = vmatprep.subr.mxu0 0.0
  %3772 = vmatpush2.msra.mxu0 0.0
  %3773 = vmatprep.subr.mxu0 0.0
  %3774 = vmatpush2.msra.mxu0 0.0
  %3775 = vmatprep.mubr.f32.mxu0 0.0
  %3776 = vmatmul.mubr.f32.gmra.mxu0 %v3614
  %v3777 = vpop.f32.mrf.mxu0
  %v3778 = vadd.f32 0.0, %v3777
  %v3779 = vpop.f32.mrf.mxu0
  %3780 = vdwg.mxu0
  %v3781 = vadd.f32 %v43, %v3778
  %3783 = vrot.lane.b32.xlu0 %v3610, 32
  %v3784 = vpop.permute.xlu0 %3783
  %v3785 = vsel %vm72, %v3784, 0
  %3787 = vmatprep.subr.mxu0 0.0
  %3788 = vmatpush1.msra.mxu0 0.0
  %3789 = vmatprep.subr.mxu0 0.0
  %3790 = vmatpush1.msra.mxu0 0.0
  %3791 = vmatprep.subr.mxu0 0.0
  %3792 = vmatpush1.msra.mxu0 0.0
  %3793 = vmatprep.subr.mxu0 0.0
  %3794 = vmatpush1.msra.mxu0 0.0
  %3795 = vmatprep.subr.mxu0 0.0
  %3796 = vmatpush1.msra.mxu0 0.0
  %3797 = vmatprep.subr.mxu0 0.0
  %3798 = vmatpush1.msra.mxu0 0.0
  %3799 = vmatprep.subr.mxu0 0.0
  %3800 = vmatpush1.msra.mxu0 0.0
  %3801 = vmatprep.subr.mxu0 0.0
  %3802 = vmatpush1.msra.mxu0 0.0
  %3803 = vmatprep.subr.mxu0 0.0
  %3804 = vmatpush1.msra.mxu0 0.0
  %3805 = vmatprep.subr.mxu0 0.0
  %3806 = vmatpush1.msra.mxu0 0.0
  %3807 = vmatprep.subr.mxu0 0.0
  %3808 = vmatpush1.msra.mxu0 0.0
  %3809 = vmatprep.subr.mxu0 0.0
  %3810 = vmatpush1.msra.mxu0 0.0
  %3811 = vmatprep.subr.mxu0 0.0
  %3812 = vmatpush1.msra.mxu0 %v37
  %3813 = vmatprep.subr.mxu0 0.0
  %3814 = vmatpush1.msra.mxu0 %v36
  %3815 = vmatprep.subr.mxu0 0.0
  %3816 = vmatpush1.msra.mxu0 %v35
  %3817 = vmatprep.subr.mxu0 0.0
  %3818 = vmatpush1.msra.mxu0 %v34
  %3819 = vmatprep.subr.mxu0 0.0
  %3820 = vmatpush2.msra.mxu0 0.0
  %3821 = vmatprep.subr.mxu0 0.0
  %3822 = vmatpush2.msra.mxu0 0.0
  %3823 = vmatprep.subr.mxu0 0.0
  %3824 = vmatpush2.msra.mxu0 0.0
  %3825 = vmatprep.subr.mxu0 0.0
  %3826 = vmatpush2.msra.mxu0 0.0
  %3827 = vmatprep.subr.mxu0 0.0
  %3828 = vmatpush2.msra.mxu0 0.0
  %3829 = vmatprep.subr.mxu0 0.0
  %3830 = vmatpush2.msra.mxu0 0.0
  %3831 = vmatprep.subr.mxu0 0.0
  %3832 = vmatpush2.msra.mxu0 0.0
  %3833 = vmatprep.subr.mxu0 0.0
  %3834 = vmatpush2.msra.mxu0 0.0
  %3835 = vmatprep.subr.mxu0 0.0
  %3836 = vmatpush2.msra.mxu0 0.0
  %3837 = vmatprep.subr.mxu0 0.0
  %3838 = vmatpush2.msra.mxu0 0.0
  %3839 = vmatprep.subr.mxu0 0.0
  %3840 = vmatpush2.msra.mxu0 0.0
  %3841 = vmatprep.subr.mxu0 0.0
  %3842 = vmatpush2.msra.mxu0 0.0
  %3843 = vmatprep.subr.mxu0 0.0
  %3844 = vmatpush2.msra.mxu0 0.0
  %3845 = vmatprep.subr.mxu0 0.0
  %3846 = vmatpush2.msra.mxu0 0.0
  %3847 = vmatprep.subr.mxu0 0.0
  %3848 = vmatpush2.msra.mxu0 0.0
  %3849 = vmatprep.subr.mxu0 0.0
  %3850 = vmatpush2.msra.mxu0 0.0
  %3851 = vmatprep.mubr.f32.mxu0 0.0
  %3852 = vmatmul.mubr.f32.gmra.mxu0 %v3785
  %v3853 = vpop.f32.mrf.mxu0
  %v3854 = vadd.f32 0.0, %v3853
  %v3855 = vpop.f32.mrf.mxu0
  %3856 = vdwg.mxu0
  %v3857 = vadd.f32 %v3781, %v3854
  %v3858 = vxor.u32 %v3857, 2147483648
  %v3859 = vmul.f32 %v3858, 1.442695
  %v3860 = vpow.pop %v3859
  %v3861 = vadd.f32 %v3860, 1.0
  %v3862 = vrcp.pop %v3861
  %v3863 = vmul.f32 1.0, %v3862
  %v3864 = vtanh.pop %v3857
  %v3865 = vmul.f32 %v3863, %v3604
  %3867 = vrot.lane.b32.xlu0 %v3864, 64
  %v3868 = vpop.permute.xlu0 %3867
  %v3870 = vmul.f32 %v3863, %v3868
  %3872 = vrot.lane.b32.xlu0 %v3870, 32
  %v3873 = vpop.permute.xlu0 %3872
  %v3875 = vadd.f32 %v3865, %v3873
  %v3876 = vtanh.pop %v3875
  %3878 = vrot.lane.b32.xlu0 %v3876, 64
  %v3879 = vpop.permute.xlu0 %3878
  %v3881 = vmul.f32 %v3863, %v3879
  %3883 = vrot.lane.b32.xlu0 %v3710, 32
  %v3884 = vpop.permute.xlu0 %3883
  %v3885 = vsel %vm72, %v3884, 0
  %3887 = vmatprep.subr.mxu0 0.0
  %3888 = vmatpush1.msra.mxu0 0.0
  %3889 = vmatprep.subr.mxu0 0.0
  %3890 = vmatpush1.msra.mxu0 0.0
  %3891 = vmatprep.subr.mxu0 0.0
  %3892 = vmatpush1.msra.mxu0 0.0
  %3893 = vmatprep.subr.mxu0 0.0
  %3894 = vmatpush1.msra.mxu0 0.0
  %3895 = vmatprep.subr.mxu0 0.0
  %3896 = vmatpush1.msra.mxu0 0.0
  %3897 = vmatprep.subr.mxu0 0.0
  %3898 = vmatpush1.msra.mxu0 0.0
  %3899 = vmatprep.subr.mxu0 0.0
  %3900 = vmatpush1.msra.mxu0 0.0
  %3901 = vmatprep.subr.mxu0 0.0
  %3902 = vmatpush1.msra.mxu0 0.0
  %3903 = vmatprep.subr.mxu0 0.0
  %3904 = vmatpush1.msra.mxu0 0.0
  %3905 = vmatprep.subr.mxu0 0.0
  %3906 = vmatpush1.msra.mxu0 0.0
  %3907 = vmatprep.subr.mxu0 0.0
  %3908 = vmatpush1.msra.mxu0 0.0
  %3909 = vmatprep.subr.mxu0 0.0
  %3910 = vmatpush1.msra.mxu0 0.0
  %3911 = vmatprep.subr.mxu0 0.0
  %3912 = vmatpush1.msra.mxu0 %v29
  %3913 = vmatprep.subr.mxu0 0.0
  %3914 = vmatpush1.msra.mxu0 %v28
  %3915 = vmatprep.subr.mxu0 0.0
  %3916 = vmatpush1.msra.mxu0 %v27
  %3917 = vmatprep.subr.mxu0 0.0
  %3918 = vmatpush1.msra.mxu0 %v26
  %3919 = vmatprep.subr.mxu0 0.0
  %3920 = vmatpush2.msra.mxu0 0.0
  %3921 = vmatprep.subr.mxu0 0.0
  %3922 = vmatpush2.msra.mxu0 0.0
  %3923 = vmatprep.subr.mxu0 0.0
  %3924 = vmatpush2.msra.mxu0 0.0
  %3925 = vmatprep.subr.mxu0 0.0
  %3926 = vmatpush2.msra.mxu0 0.0
  %3927 = vmatprep.subr.mxu0 0.0
  %3928 = vmatpush2.msra.mxu0 0.0
  %3929 = vmatprep.subr.mxu0 0.0
  %3930 = vmatpush2.msra.mxu0 0.0
  %3931 = vmatprep.subr.mxu0 0.0
  %3932 = vmatpush2.msra.mxu0 0.0
  %3933 = vmatprep.subr.mxu0 0.0
  %3934 = vmatpush2.msra.mxu0 0.0
  %3935 = vmatprep.subr.mxu0 0.0
  %3936 = vmatpush2.msra.mxu0 0.0
  %3937 = vmatprep.subr.mxu0 0.0
  %3938 = vmatpush2.msra.mxu0 0.0
  %3939 = vmatprep.subr.mxu0 0.0
  %3940 = vmatpush2.msra.mxu0 0.0
  %3941 = vmatprep.subr.mxu0 0.0
  %3942 = vmatpush2.msra.mxu0 0.0
  %3943 = vmatprep.subr.mxu0 0.0
  %3944 = vmatpush2.msra.mxu0 0.0
  %3945 = vmatprep.subr.mxu0 0.0
  %3946 = vmatpush2.msra.mxu0 0.0
  %3947 = vmatprep.subr.mxu0 0.0
  %3948 = vmatpush2.msra.mxu0 0.0
  %3949 = vmatprep.subr.mxu0 0.0
  %3950 = vmatpush2.msra.mxu0 0.0
  %3951 = vmatprep.mubr.f32.mxu0 0.0
  %3952 = vmatmul.mubr.f32.gmra.mxu0 %v3885
  %v3953 = vpop.f32.mrf.mxu0
  %v3954 = vadd.f32 0.0, %v3953
  %v3955 = vpop.f32.mrf.mxu0
  %3956 = vdwg.mxu0
  %v3957 = vadd.f32 %v258, %v3954
  %v3958 = vxor.u32 %v3957, 2147483648
  %v3959 = vmul.f32 %v3958, 1.442695
  %v3960 = vpow.pop %v3959
  %v3961 = vadd.f32 %v3960, 1.0
  %v3962 = vrcp.pop %v3961
  %v3963 = vmul.f32 1.0, %v3962
  %v3964 = vtanh.pop %v3957
  %v3965 = vmul.f32 %v3963, %v3704
  %3967 = vrot.lane.b32.xlu0 %v3964, 64
  %v3968 = vpop.permute.xlu0 %3967
  %v3970 = vmul.f32 %v3963, %v3968
  %3972 = vrot.lane.b32.xlu0 %v3970, 32
  %v3973 = vpop.permute.xlu0 %3972
  %v3975 = vadd.f32 %v3965, %v3973
  %v3976 = vtanh.pop %v3975
  %3978 = vrot.lane.b32.xlu0 %v3976, 64
  %v3979 = vpop.permute.xlu0 %3978
  %v3981 = vmul.f32 %v3963, %v3979
  %3982 = vmatprep.subr.mxu0 0.0
  %3983 = vmatpush1.msra.mxu0 0.0
  %3984 = vmatprep.subr.mxu0 0.0
  %3985 = vmatpush1.msra.mxu0 0.0
  %3986 = vmatprep.subr.mxu0 0.0
  %3987 = vmatpush1.msra.mxu0 0.0
  %3988 = vmatprep.subr.mxu0 0.0
  %3989 = vmatpush1.msra.mxu0 0.0
  %3990 = vmatprep.subr.mxu0 0.0
  %3991 = vmatpush1.msra.mxu0 0.0
  %3992 = vmatprep.subr.mxu0 0.0
  %3993 = vmatpush1.msra.mxu0 0.0
  %3994 = vmatprep.subr.mxu0 0.0
  %3995 = vmatpush1.msra.mxu0 0.0
  %3996 = vmatprep.subr.mxu0 0.0
  %3997 = vmatpush1.msra.mxu0 0.0
  %3998 = vmatprep.subr.mxu0 0.0
  %3999 = vmatpush1.msra.mxu0 0.0
  %4000 = vmatprep.subr.mxu0 0.0
  %4001 = vmatpush1.msra.mxu0 0.0
  %4002 = vmatprep.subr.mxu0 0.0
  %4003 = vmatpush1.msra.mxu0 0.0
  %4004 = vmatprep.subr.mxu0 0.0
  %4005 = vmatpush1.msra.mxu0 0.0
  %4006 = vmatprep.subr.mxu0 0.0
  %4007 = vmatpush1.msra.mxu0 %v33
  %4008 = vmatprep.subr.mxu0 0.0
  %4009 = vmatpush1.msra.mxu0 %v32
  %4010 = vmatprep.subr.mxu0 0.0
  %4011 = vmatpush1.msra.mxu0 %v31
  %4012 = vmatprep.subr.mxu0 0.0
  %4013 = vmatpush1.msra.mxu0 %v30
  %4014 = vmatprep.subr.mxu0 0.0
  %4015 = vmatpush2.msra.mxu0 0.0
  %4016 = vmatprep.subr.mxu0 0.0
  %4017 = vmatpush2.msra.mxu0 0.0
  %4018 = vmatprep.subr.mxu0 0.0
  %4019 = vmatpush2.msra.mxu0 0.0
  %4020 = vmatprep.subr.mxu0 0.0
  %4021 = vmatpush2.msra.mxu0 0.0
  %4022 = vmatprep.subr.mxu0 0.0
  %4023 = vmatpush2.msra.mxu0 0.0
  %4024 = vmatprep.subr.mxu0 0.0
  %4025 = vmatpush2.msra.mxu0 0.0
  %4026 = vmatprep.subr.mxu0 0.0
  %4027 = vmatpush2.msra.mxu0 0.0
  %4028 = vmatprep.subr.mxu0 0.0
  %4029 = vmatpush2.msra.mxu0 0.0
  %4030 = vmatprep.subr.mxu0 0.0
  %4031 = vmatpush2.msra.mxu0 0.0
  %4032 = vmatprep.subr.mxu0 0.0
  %4033 = vmatpush2.msra.mxu0 0.0
  %4034 = vmatprep.subr.mxu0 0.0
  %4035 = vmatpush2.msra.mxu0 0.0
  %4036 = vmatprep.subr.mxu0 0.0
  %4037 = vmatpush2.msra.mxu0 0.0
  %4038 = vmatprep.subr.mxu0 0.0
  %4039 = vmatpush2.msra.mxu0 0.0
  %4040 = vmatprep.subr.mxu0 0.0
  %4041 = vmatpush2.msra.mxu0 0.0
  %4042 = vmatprep.subr.mxu0 0.0
  %4043 = vmatpush2.msra.mxu0 0.0
  %4044 = vmatprep.subr.mxu0 0.0
  %4045 = vmatpush2.msra.mxu0 0.0
  %4046 = vmatprep.mubr.f32.mxu0 0.0
  %4047 = vmatmul.mubr.f32.gmra.mxu0 %v3885
  %v4048 = vpop.f32.mrf.mxu0
  %v4049 = vadd.f32 0.0, %v4048
  %v4050 = vpop.f32.mrf.mxu0
  %4051 = vdwg.mxu0
  %v4052 = vadd.f32 %v43, %v4049
  %4054 = vrot.lane.b32.xlu0 %v3881, 32
  %v4055 = vpop.permute.xlu0 %4054
  %v4056 = vsel %vm72, %v4055, 0
  %4058 = vmatprep.subr.mxu0 0.0
  %4059 = vmatpush1.msra.mxu0 0.0
  %4060 = vmatprep.subr.mxu0 0.0
  %4061 = vmatpush1.msra.mxu0 0.0
  %4062 = vmatprep.subr.mxu0 0.0
  %4063 = vmatpush1.msra.mxu0 0.0
  %4064 = vmatprep.subr.mxu0 0.0
  %4065 = vmatpush1.msra.mxu0 0.0
  %4066 = vmatprep.subr.mxu0 0.0
  %4067 = vmatpush1.msra.mxu0 0.0
  %4068 = vmatprep.subr.mxu0 0.0
  %4069 = vmatpush1.msra.mxu0 0.0
  %4070 = vmatprep.subr.mxu0 0.0
  %4071 = vmatpush1.msra.mxu0 0.0
  %4072 = vmatprep.subr.mxu0 0.0
  %4073 = vmatpush1.msra.mxu0 0.0
  %4074 = vmatprep.subr.mxu0 0.0
  %4075 = vmatpush1.msra.mxu0 0.0
  %4076 = vmatprep.subr.mxu0 0.0
  %4077 = vmatpush1.msra.mxu0 0.0
  %4078 = vmatprep.subr.mxu0 0.0
  %4079 = vmatpush1.msra.mxu0 0.0
  %4080 = vmatprep.subr.mxu0 0.0
  %4081 = vmatpush1.msra.mxu0 0.0
  %4082 = vmatprep.subr.mxu0 0.0
  %4083 = vmatpush1.msra.mxu0 %v37
  %4084 = vmatprep.subr.mxu0 0.0
  %4085 = vmatpush1.msra.mxu0 %v36
  %4086 = vmatprep.subr.mxu0 0.0
  %4087 = vmatpush1.msra.mxu0 %v35
  %4088 = vmatprep.subr.mxu0 0.0
  %4089 = vmatpush1.msra.mxu0 %v34
  %4090 = vmatprep.subr.mxu0 0.0
  %4091 = vmatpush2.msra.mxu0 0.0
  %4092 = vmatprep.subr.mxu0 0.0
  %4093 = vmatpush2.msra.mxu0 0.0
  %4094 = vmatprep.subr.mxu0 0.0
  %4095 = vmatpush2.msra.mxu0 0.0
  %4096 = vmatprep.subr.mxu0 0.0
  %4097 = vmatpush2.msra.mxu0 0.0
  %4098 = vmatprep.subr.mxu0 0.0
  %4099 = vmatpush2.msra.mxu0 0.0
  %4100 = vmatprep.subr.mxu0 0.0
  %4101 = vmatpush2.msra.mxu0 0.0
  %4102 = vmatprep.subr.mxu0 0.0
  %4103 = vmatpush2.msra.mxu0 0.0
  %4104 = vmatprep.subr.mxu0 0.0
  %4105 = vmatpush2.msra.mxu0 0.0
  %4106 = vmatprep.subr.mxu0 0.0
  %4107 = vmatpush2.msra.mxu0 0.0
  %4108 = vmatprep.subr.mxu0 0.0
  %4109 = vmatpush2.msra.mxu0 0.0
  %4110 = vmatprep.subr.mxu0 0.0
  %4111 = vmatpush2.msra.mxu0 0.0
  %4112 = vmatprep.subr.mxu0 0.0
  %4113 = vmatpush2.msra.mxu0 0.0
  %4114 = vmatprep.subr.mxu0 0.0
  %4115 = vmatpush2.msra.mxu0 0.0
  %4116 = vmatprep.subr.mxu0 0.0
  %4117 = vmatpush2.msra.mxu0 0.0
  %4118 = vmatprep.subr.mxu0 0.0
  %4119 = vmatpush2.msra.mxu0 0.0
  %4120 = vmatprep.subr.mxu0 0.0
  %4121 = vmatpush2.msra.mxu0 0.0
  %4122 = vmatprep.mubr.f32.mxu0 0.0
  %4123 = vmatmul.mubr.f32.gmra.mxu0 %v4056
  %v4124 = vpop.f32.mrf.mxu0
  %v4125 = vadd.f32 0.0, %v4124
  %v4126 = vpop.f32.mrf.mxu0
  %4127 = vdwg.mxu0
  %v4128 = vadd.f32 %v4052, %v4125
  %v4129 = vxor.u32 %v4128, 2147483648
  %v4130 = vmul.f32 %v4129, 1.442695
  %v4131 = vpow.pop %v4130
  %v4132 = vadd.f32 %v4131, 1.0
  %v4133 = vrcp.pop %v4132
  %v4134 = vmul.f32 1.0, %v4133
  %v4135 = vtanh.pop %v4128
  %v4136 = vmul.f32 %v4134, %v3875
  %4138 = vrot.lane.b32.xlu0 %v4135, 64
  %v4139 = vpop.permute.xlu0 %4138
  %v4141 = vmul.f32 %v4134, %v4139
  %4143 = vrot.lane.b32.xlu0 %v4141, 32
  %v4144 = vpop.permute.xlu0 %4143
  %v4146 = vadd.f32 %v4136, %v4144
  %v4147 = vtanh.pop %v4146
  %4149 = vrot.lane.b32.xlu0 %v4147, 64
  %v4150 = vpop.permute.xlu0 %4149
  %v4152 = vmul.f32 %v4134, %v4150
  %4154 = vrot.lane.b32.xlu0 %v3981, 32
  %v4155 = vpop.permute.xlu0 %4154
  %v4156 = vsel %vm72, %v4155, 0
  %4158 = vmatprep.subr.mxu0 0.0
  %4159 = vmatpush1.msra.mxu0 0.0
  %4160 = vmatprep.subr.mxu0 0.0
  %4161 = vmatpush1.msra.mxu0 0.0
  %4162 = vmatprep.subr.mxu0 0.0
  %4163 = vmatpush1.msra.mxu0 0.0
  %4164 = vmatprep.subr.mxu0 0.0
  %4165 = vmatpush1.msra.mxu0 0.0
  %4166 = vmatprep.subr.mxu0 0.0
  %4167 = vmatpush1.msra.mxu0 0.0
  %4168 = vmatprep.subr.mxu0 0.0
  %4169 = vmatpush1.msra.mxu0 0.0
  %4170 = vmatprep.subr.mxu0 0.0
  %4171 = vmatpush1.msra.mxu0 0.0
  %4172 = vmatprep.subr.mxu0 0.0
  %4173 = vmatpush1.msra.mxu0 0.0
  %4174 = vmatprep.subr.mxu0 0.0
  %4175 = vmatpush1.msra.mxu0 0.0
  %4176 = vmatprep.subr.mxu0 0.0
  %4177 = vmatpush1.msra.mxu0 0.0
  %4178 = vmatprep.subr.mxu0 0.0
  %4179 = vmatpush1.msra.mxu0 0.0
  %4180 = vmatprep.subr.mxu0 0.0
  %4181 = vmatpush1.msra.mxu0 0.0
  %4182 = vmatprep.subr.mxu0 0.0
  %4183 = vmatpush1.msra.mxu0 %v29
  %4184 = vmatprep.subr.mxu0 0.0
  %4185 = vmatpush1.msra.mxu0 %v28
  %4186 = vmatprep.subr.mxu0 0.0
  %4187 = vmatpush1.msra.mxu0 %v27
  %4188 = vmatprep.subr.mxu0 0.0
  %4189 = vmatpush1.msra.mxu0 %v26
  %4190 = vmatprep.subr.mxu0 0.0
  %4191 = vmatpush2.msra.mxu0 0.0
  %4192 = vmatprep.subr.mxu0 0.0
  %4193 = vmatpush2.msra.mxu0 0.0
  %4194 = vmatprep.subr.mxu0 0.0
  %4195 = vmatpush2.msra.mxu0 0.0
  %4196 = vmatprep.subr.mxu0 0.0
  %4197 = vmatpush2.msra.mxu0 0.0
  %4198 = vmatprep.subr.mxu0 0.0
  %4199 = vmatpush2.msra.mxu0 0.0
  %4200 = vmatprep.subr.mxu0 0.0
  %4201 = vmatpush2.msra.mxu0 0.0
  %4202 = vmatprep.subr.mxu0 0.0
  %4203 = vmatpush2.msra.mxu0 0.0
  %4204 = vmatprep.subr.mxu0 0.0
  %4205 = vmatpush2.msra.mxu0 0.0
  %4206 = vmatprep.subr.mxu0 0.0
  %4207 = vmatpush2.msra.mxu0 0.0
  %4208 = vmatprep.subr.mxu0 0.0
  %4209 = vmatpush2.msra.mxu0 0.0
  %4210 = vmatprep.subr.mxu0 0.0
  %4211 = vmatpush2.msra.mxu0 0.0
  %4212 = vmatprep.subr.mxu0 0.0
  %4213 = vmatpush2.msra.mxu0 0.0
  %4214 = vmatprep.subr.mxu0 0.0
  %4215 = vmatpush2.msra.mxu0 0.0
  %4216 = vmatprep.subr.mxu0 0.0
  %4217 = vmatpush2.msra.mxu0 0.0
  %4218 = vmatprep.subr.mxu0 0.0
  %4219 = vmatpush2.msra.mxu0 0.0
  %4220 = vmatprep.subr.mxu0 0.0
  %4221 = vmatpush2.msra.mxu0 0.0
  %4222 = vmatprep.mubr.f32.mxu0 0.0
  %4223 = vmatmul.mubr.f32.gmra.mxu0 %v4156
  %v4224 = vpop.f32.mrf.mxu0
  %v4225 = vadd.f32 0.0, %v4224
  %v4226 = vpop.f32.mrf.mxu0
  %4227 = vdwg.mxu0
  %v4228 = vadd.f32 %v263, %v4225
  %v4229 = vxor.u32 %v4228, 2147483648
  %v4230 = vmul.f32 %v4229, 1.442695
  %v4231 = vpow.pop %v4230
  %v4232 = vadd.f32 %v4231, 1.0
  %v4233 = vrcp.pop %v4232
  %v4234 = vmul.f32 1.0, %v4233
  %v4235 = vtanh.pop %v4228
  %v4236 = vmul.f32 %v4234, %v3975
  %4238 = vrot.lane.b32.xlu0 %v4235, 64
  %v4239 = vpop.permute.xlu0 %4238
  %v4241 = vmul.f32 %v4234, %v4239
  %4243 = vrot.lane.b32.xlu0 %v4241, 32
  %v4244 = vpop.permute.xlu0 %4243
  %v4246 = vadd.f32 %v4236, %v4244
  %v4247 = vtanh.pop %v4246
  %4249 = vrot.lane.b32.xlu0 %v4247, 64
  %v4250 = vpop.permute.xlu0 %4249
  %v4252 = vmul.f32 %v4234, %v4250
  %4253 = vmatprep.subr.mxu0 0.0
  %4254 = vmatpush1.msra.mxu0 0.0
  %4255 = vmatprep.subr.mxu0 0.0
  %4256 = vmatpush1.msra.mxu0 0.0
  %4257 = vmatprep.subr.mxu0 0.0
  %4258 = vmatpush1.msra.mxu0 0.0
  %4259 = vmatprep.subr.mxu0 0.0
  %4260 = vmatpush1.msra.mxu0 0.0
  %4261 = vmatprep.subr.mxu0 0.0
  %4262 = vmatpush1.msra.mxu0 0.0
  %4263 = vmatprep.subr.mxu0 0.0
  %4264 = vmatpush1.msra.mxu0 0.0
  %4265 = vmatprep.subr.mxu0 0.0
  %4266 = vmatpush1.msra.mxu0 0.0
  %4267 = vmatprep.subr.mxu0 0.0
  %4268 = vmatpush1.msra.mxu0 0.0
  %4269 = vmatprep.subr.mxu0 0.0
  %4270 = vmatpush1.msra.mxu0 0.0
  %4271 = vmatprep.subr.mxu0 0.0
  %4272 = vmatpush1.msra.mxu0 0.0
  %4273 = vmatprep.subr.mxu0 0.0
  %4274 = vmatpush1.msra.mxu0 0.0
  %4275 = vmatprep.subr.mxu0 0.0
  %4276 = vmatpush1.msra.mxu0 0.0
  %4277 = vmatprep.subr.mxu0 0.0
  %4278 = vmatpush1.msra.mxu0 %v33
  %4279 = vmatprep.subr.mxu0 0.0
  %4280 = vmatpush1.msra.mxu0 %v32
  %4281 = vmatprep.subr.mxu0 0.0
  %4282 = vmatpush1.msra.mxu0 %v31
  %4283 = vmatprep.subr.mxu0 0.0
  %4284 = vmatpush1.msra.mxu0 %v30
  %4285 = vmatprep.subr.mxu0 0.0
  %4286 = vmatpush2.msra.mxu0 0.0
  %4287 = vmatprep.subr.mxu0 0.0
  %4288 = vmatpush2.msra.mxu0 0.0
  %4289 = vmatprep.subr.mxu0 0.0
  %4290 = vmatpush2.msra.mxu0 0.0
  %4291 = vmatprep.subr.mxu0 0.0
  %4292 = vmatpush2.msra.mxu0 0.0
  %4293 = vmatprep.subr.mxu0 0.0
  %4294 = vmatpush2.msra.mxu0 0.0
  %4295 = vmatprep.subr.mxu0 0.0
  %4296 = vmatpush2.msra.mxu0 0.0
  %4297 = vmatprep.subr.mxu0 0.0
  %4298 = vmatpush2.msra.mxu0 0.0
  %4299 = vmatprep.subr.mxu0 0.0
  %4300 = vmatpush2.msra.mxu0 0.0
  %4301 = vmatprep.subr.mxu0 0.0
  %4302 = vmatpush2.msra.mxu0 0.0
  %4303 = vmatprep.subr.mxu0 0.0
  %4304 = vmatpush2.msra.mxu0 0.0
  %4305 = vmatprep.subr.mxu0 0.0
  %4306 = vmatpush2.msra.mxu0 0.0
  %4307 = vmatprep.subr.mxu0 0.0
  %4308 = vmatpush2.msra.mxu0 0.0
  %4309 = vmatprep.subr.mxu0 0.0
  %4310 = vmatpush2.msra.mxu0 0.0
  %4311 = vmatprep.subr.mxu0 0.0
  %4312 = vmatpush2.msra.mxu0 0.0
  %4313 = vmatprep.subr.mxu0 0.0
  %4314 = vmatpush2.msra.mxu0 0.0
  %4315 = vmatprep.subr.mxu0 0.0
  %4316 = vmatpush2.msra.mxu0 0.0
  %4317 = vmatprep.mubr.f32.mxu0 0.0
  %4318 = vmatmul.mubr.f32.gmra.mxu0 %v4156
  %v4319 = vpop.f32.mrf.mxu0
  %v4320 = vadd.f32 0.0, %v4319
  %v4321 = vpop.f32.mrf.mxu0
  %4322 = vdwg.mxu0
  %v4323 = vadd.f32 %v43, %v4320
  %4325 = vrot.lane.b32.xlu0 %v4152, 32
  %v4326 = vpop.permute.xlu0 %4325
  %v4327 = vsel %vm72, %v4326, 0
  %4329 = vmatprep.subr.mxu0 0.0
  %4330 = vmatpush1.msra.mxu0 0.0
  %4331 = vmatprep.subr.mxu0 0.0
  %4332 = vmatpush1.msra.mxu0 0.0
  %4333 = vmatprep.subr.mxu0 0.0
  %4334 = vmatpush1.msra.mxu0 0.0
  %4335 = vmatprep.subr.mxu0 0.0
  %4336 = vmatpush1.msra.mxu0 0.0
  %4337 = vmatprep.subr.mxu0 0.0
  %4338 = vmatpush1.msra.mxu0 0.0
  %4339 = vmatprep.subr.mxu0 0.0
  %4340 = vmatpush1.msra.mxu0 0.0
  %4341 = vmatprep.subr.mxu0 0.0
  %4342 = vmatpush1.msra.mxu0 0.0
  %4343 = vmatprep.subr.mxu0 0.0
  %4344 = vmatpush1.msra.mxu0 0.0
  %4345 = vmatprep.subr.mxu0 0.0
  %4346 = vmatpush1.msra.mxu0 0.0
  %4347 = vmatprep.subr.mxu0 0.0
  %4348 = vmatpush1.msra.mxu0 0.0
  %4349 = vmatprep.subr.mxu0 0.0
  %4350 = vmatpush1.msra.mxu0 0.0
  %4351 = vmatprep.subr.mxu0 0.0
  %4352 = vmatpush1.msra.mxu0 0.0
  %4353 = vmatprep.subr.mxu0 0.0
  %4354 = vmatpush1.msra.mxu0 %v37
  %4355 = vmatprep.subr.mxu0 0.0
  %4356 = vmatpush1.msra.mxu0 %v36
  %4357 = vmatprep.subr.mxu0 0.0
  %4358 = vmatpush1.msra.mxu0 %v35
  %4359 = vmatprep.subr.mxu0 0.0
  %4360 = vmatpush1.msra.mxu0 %v34
  %4361 = vmatprep.subr.mxu0 0.0
  %4362 = vmatpush2.msra.mxu0 0.0
  %4363 = vmatprep.subr.mxu0 0.0
  %4364 = vmatpush2.msra.mxu0 0.0
  %4365 = vmatprep.subr.mxu0 0.0
  %4366 = vmatpush2.msra.mxu0 0.0
  %4367 = vmatprep.subr.mxu0 0.0
  %4368 = vmatpush2.msra.mxu0 0.0
  %4369 = vmatprep.subr.mxu0 0.0
  %4370 = vmatpush2.msra.mxu0 0.0
  %4371 = vmatprep.subr.mxu0 0.0
  %4372 = vmatpush2.msra.mxu0 0.0
  %4373 = vmatprep.subr.mxu0 0.0
  %4374 = vmatpush2.msra.mxu0 0.0
  %4375 = vmatprep.subr.mxu0 0.0
  %4376 = vmatpush2.msra.mxu0 0.0
  %4377 = vmatprep.subr.mxu0 0.0
  %4378 = vmatpush2.msra.mxu0 0.0
  %4379 = vmatprep.subr.mxu0 0.0
  %4380 = vmatpush2.msra.mxu0 0.0
  %4381 = vmatprep.subr.mxu0 0.0
  %4382 = vmatpush2.msra.mxu0 0.0
  %4383 = vmatprep.subr.mxu0 0.0
  %4384 = vmatpush2.msra.mxu0 0.0
  %4385 = vmatprep.subr.mxu0 0.0
  %4386 = vmatpush2.msra.mxu0 0.0
  %4387 = vmatprep.subr.mxu0 0.0
  %4388 = vmatpush2.msra.mxu0 0.0
  %4389 = vmatprep.subr.mxu0 0.0
  %4390 = vmatpush2.msra.mxu0 0.0
  %4391 = vmatprep.subr.mxu0 0.0
  %4392 = vmatpush2.msra.mxu0 0.0
  %4393 = vmatprep.mubr.f32.mxu0 0.0
  %4394 = vmatmul.mubr.f32.gmra.mxu0 %v4327
  %v4395 = vpop.f32.mrf.mxu0
  %v4396 = vadd.f32 0.0, %v4395
  %v4397 = vpop.f32.mrf.mxu0
  %4398 = vdwg.mxu0
  %v4399 = vadd.f32 %v4323, %v4396
  %v4400 = vxor.u32 %v4399, 2147483648
  %v4401 = vmul.f32 %v4400, 1.442695
  %v4402 = vpow.pop %v4401
  %v4403 = vadd.f32 %v4402, 1.0
  %v4404 = vrcp.pop %v4403
  %v4405 = vmul.f32 1.0, %v4404
  %v4406 = vtanh.pop %v4399
  %v4407 = vmul.f32 %v4405, %v4146
  %4409 = vrot.lane.b32.xlu0 %v4406, 64
  %v4410 = vpop.permute.xlu0 %4409
  %v4412 = vmul.f32 %v4405, %v4410
  %4414 = vrot.lane.b32.xlu0 %v4412, 32
  %v4415 = vpop.permute.xlu0 %4414
  %v4417 = vadd.f32 %v4407, %v4415
  %v4418 = vtanh.pop %v4417
  %4420 = vrot.lane.b32.xlu0 %v4418, 64
  %v4421 = vpop.permute.xlu0 %4420
  %v4423 = vmul.f32 %v4405, %v4421
  %4425 = vrot.lane.b32.xlu0 %v4252, 32
  %v4426 = vpop.permute.xlu0 %4425
  %v4427 = vsel %vm72, %v4426, 0
  %4429 = vmatprep.subr.mxu0 0.0
  %4430 = vmatpush1.msra.mxu0 0.0
  %4431 = vmatprep.subr.mxu0 0.0
  %4432 = vmatpush1.msra.mxu0 0.0
  %4433 = vmatprep.subr.mxu0 0.0
  %4434 = vmatpush1.msra.mxu0 0.0
  %4435 = vmatprep.subr.mxu0 0.0
  %4436 = vmatpush1.msra.mxu0 0.0
  %4437 = vmatprep.subr.mxu0 0.0
  %4438 = vmatpush1.msra.mxu0 0.0
  %4439 = vmatprep.subr.mxu0 0.0
  %4440 = vmatpush1.msra.mxu0 0.0
  %4441 = vmatprep.subr.mxu0 0.0
  %4442 = vmatpush1.msra.mxu0 0.0
  %4443 = vmatprep.subr.mxu0 0.0
  %4444 = vmatpush1.msra.mxu0 0.0
  %4445 = vmatprep.subr.mxu0 0.0
  %4446 = vmatpush1.msra.mxu0 0.0
  %4447 = vmatprep.subr.mxu0 0.0
  %4448 = vmatpush1.msra.mxu0 0.0
  %4449 = vmatprep.subr.mxu0 0.0
  %4450 = vmatpush1.msra.mxu0 0.0
  %4451 = vmatprep.subr.mxu0 0.0
  %4452 = vmatpush1.msra.mxu0 0.0
  %4453 = vmatprep.subr.mxu0 0.0
  %4454 = vmatpush1.msra.mxu0 %v33
  %4455 = vmatprep.subr.mxu0 0.0
  %4456 = vmatpush1.msra.mxu0 %v32
  %4457 = vmatprep.subr.mxu0 0.0
  %4458 = vmatpush1.msra.mxu0 %v31
  %4459 = vmatprep.subr.mxu0 0.0
  %4460 = vmatpush1.msra.mxu0 %v30
  %4461 = vmatprep.subr.mxu0 0.0
  %4462 = vmatpush2.msra.mxu0 0.0
  %4463 = vmatprep.subr.mxu0 0.0
  %4464 = vmatpush2.msra.mxu0 0.0
  %4465 = vmatprep.subr.mxu0 0.0
  %4466 = vmatpush2.msra.mxu0 0.0
  %4467 = vmatprep.subr.mxu0 0.0
  %4468 = vmatpush2.msra.mxu0 0.0
  %4469 = vmatprep.subr.mxu0 0.0
  %4470 = vmatpush2.msra.mxu0 0.0
  %4471 = vmatprep.subr.mxu0 0.0
  %4472 = vmatpush2.msra.mxu0 0.0
  %4473 = vmatprep.subr.mxu0 0.0
  %4474 = vmatpush2.msra.mxu0 0.0
  %4475 = vmatprep.subr.mxu0 0.0
  %4476 = vmatpush2.msra.mxu0 0.0
  %4477 = vmatprep.subr.mxu0 0.0
  %4478 = vmatpush2.msra.mxu0 0.0
  %4479 = vmatprep.subr.mxu0 0.0
  %4480 = vmatpush2.msra.mxu0 0.0
  %4481 = vmatprep.subr.mxu0 0.0
  %4482 = vmatpush2.msra.mxu0 0.0
  %4483 = vmatprep.subr.mxu0 0.0
  %4484 = vmatpush2.msra.mxu0 0.0
  %4485 = vmatprep.subr.mxu0 0.0
  %4486 = vmatpush2.msra.mxu0 0.0
  %4487 = vmatprep.subr.mxu0 0.0
  %4488 = vmatpush2.msra.mxu0 0.0
  %4489 = vmatprep.subr.mxu0 0.0
  %4490 = vmatpush2.msra.mxu0 0.0
  %4491 = vmatprep.subr.mxu0 0.0
  %4492 = vmatpush2.msra.mxu0 0.0
  %4493 = vmatprep.mubr.f32.mxu0 0.0
  %4494 = vmatmul.mubr.f32.gmra.mxu0 %v4427
  %v4495 = vpop.f32.mrf.mxu0
  %v4496 = vadd.f32 0.0, %v4495
  %v4497 = vpop.f32.mrf.mxu0
  %4498 = vdwg.mxu0
  %v4499 = vadd.f32 %v43, %v4496
  %4501 = vrot.lane.b32.xlu0 %v4423, 32
  %v4502 = vpop.permute.xlu0 %4501
  %v4503 = vsel %vm72, %v4502, 0
  %4505 = vmatprep.subr.mxu0 0.0
  %4506 = vmatpush1.msra.mxu0 0.0
  %4507 = vmatprep.subr.mxu0 0.0
  %4508 = vmatpush1.msra.mxu0 0.0
  %4509 = vmatprep.subr.mxu0 0.0
  %4510 = vmatpush1.msra.mxu0 0.0
  %4511 = vmatprep.subr.mxu0 0.0
  %4512 = vmatpush1.msra.mxu0 0.0
  %4513 = vmatprep.subr.mxu0 0.0
  %4514 = vmatpush1.msra.mxu0 0.0
  %4515 = vmatprep.subr.mxu0 0.0
  %4516 = vmatpush1.msra.mxu0 0.0
  %4517 = vmatprep.subr.mxu0 0.0
  %4518 = vmatpush1.msra.mxu0 0.0
  %4519 = vmatprep.subr.mxu0 0.0
  %4520 = vmatpush1.msra.mxu0 0.0
  %4521 = vmatprep.subr.mxu0 0.0
  %4522 = vmatpush1.msra.mxu0 0.0
  %4523 = vmatprep.subr.mxu0 0.0
  %4524 = vmatpush1.msra.mxu0 0.0
  %4525 = vmatprep.subr.mxu0 0.0
  %4526 = vmatpush1.msra.mxu0 0.0
  %4527 = vmatprep.subr.mxu0 0.0
  %4528 = vmatpush1.msra.mxu0 0.0
  %4529 = vmatprep.subr.mxu0 0.0
  %4530 = vmatpush1.msra.mxu0 %v37
  %4531 = vmatprep.subr.mxu0 0.0
  %4532 = vmatpush1.msra.mxu0 %v36
  %4533 = vmatprep.subr.mxu0 0.0
  %4534 = vmatpush1.msra.mxu0 %v35
  %4535 = vmatprep.subr.mxu0 0.0
  %4536 = vmatpush1.msra.mxu0 %v34
  %4537 = vmatprep.subr.mxu0 0.0
  %4538 = vmatpush2.msra.mxu0 0.0
  %4539 = vmatprep.subr.mxu0 0.0
  %4540 = vmatpush2.msra.mxu0 0.0
  %4541 = vmatprep.subr.mxu0 0.0
  %4542 = vmatpush2.msra.mxu0 0.0
  %4543 = vmatprep.subr.mxu0 0.0
  %4544 = vmatpush2.msra.mxu0 0.0
  %4545 = vmatprep.subr.mxu0 0.0
  %4546 = vmatpush2.msra.mxu0 0.0
  %4547 = vmatprep.subr.mxu0 0.0
  %4548 = vmatpush2.msra.mxu0 0.0
  %4549 = vmatprep.subr.mxu0 0.0
  %4550 = vmatpush2.msra.mxu0 0.0
  %4551 = vmatprep.subr.mxu0 0.0
  %4552 = vmatpush2.msra.mxu0 0.0
  %4553 = vmatprep.subr.mxu0 0.0
  %4554 = vmatpush2.msra.mxu0 0.0
  %4555 = vmatprep.subr.mxu0 0.0
  %4556 = vmatpush2.msra.mxu0 0.0
  %4557 = vmatprep.subr.mxu0 0.0
  %4558 = vmatpush2.msra.mxu0 0.0
  %4559 = vmatprep.subr.mxu0 0.0
  %4560 = vmatpush2.msra.mxu0 0.0
  %4561 = vmatprep.subr.mxu0 0.0
  %4562 = vmatpush2.msra.mxu0 0.0
  %4563 = vmatprep.subr.mxu0 0.0
  %4564 = vmatpush2.msra.mxu0 0.0
  %4565 = vmatprep.subr.mxu0 0.0
  %4566 = vmatpush2.msra.mxu0 0.0
  %4567 = vmatprep.subr.mxu0 0.0
  %4568 = vmatpush2.msra.mxu0 0.0
  %4569 = vmatprep.mubr.f32.mxu0 0.0
  %4570 = vmatmul.mubr.f32.gmra.mxu0 %v4503
  %v4571 = vpop.f32.mrf.mxu0
  %v4572 = vadd.f32 0.0, %v4571
  %v4573 = vpop.f32.mrf.mxu0
  %4574 = vdwg.mxu0
  %v4575 = vadd.f32 %v4499, %v4572
  %v4576 = vxor.u32 %v4575, 2147483648
  %v4577 = vmul.f32 %v4576, 1.442695
  %v4578 = vpow.pop %v4577
  %v4579 = vadd.f32 %v4578, 1.0
  %v4580 = vrcp.pop %v4579
  %v4581 = vmul.f32 1.0, %v4580
  %v4582 = vtanh.pop %v4575
  %v4583 = vmul.f32 %v4581, %v4417
  %4585 = vrot.lane.b32.xlu0 %v4582, 64
  %v4586 = vpop.permute.xlu0 %4585
  %v4588 = vmul.f32 %v4581, %v4586
  %4590 = vrot.lane.b32.xlu0 %v4588, 32
  %v4591 = vpop.permute.xlu0 %4590
  %v4593 = vadd.f32 %v4583, %v4591
  %v4594 = vtanh.pop %v4593
  %4596 = vrot.lane.b32.xlu0 %v4594, 64
  %v4597 = vpop.permute.xlu0 %4596
  %v4599 = vmul.f32 %v4581, %v4597
  %4601 = vrot.lane.b32.xlu0 %v900, 64
  %v4602 = vpop.permute.xlu0 %4601
  %4604 = vrot.lane.b32.xlu0 %v1171, 96
  %v4605 = vpop.permute.xlu0 %4604
  %4608 = vrot.lane.b32.xlu0 %v1984, 64
  %v4609 = vpop.permute.xlu0 %4608
  %4611 = vrot.lane.b32.xlu0 %v2255, 96
  %v4612 = vpop.permute.xlu0 %4611
  %4615 = vrot.lane.b32.xlu0 %v3068, 64
  %v4616 = vpop.permute.xlu0 %4615
  %4618 = vrot.lane.b32.xlu0 %v3339, 96
  %v4619 = vpop.permute.xlu0 %4618
  %4622 = vrot.lane.b32.xlu0 %v4152, 64
  %v4623 = vpop.permute.xlu0 %4622
  %4625 = vrot.lane.b32.xlu0 %v4423, 96
  %v4626 = vpop.permute.xlu0 %4625
  %v4628 = vsel %vm72, %v803, %v4602
  %vm4629 = vcmask 523264
  %v4630 = vsel %vm4629, %v4628, %v4605
  %vm4631 = vcmask 785408
  %v4632 = vsel %vm4631, %v4630, %v1442
  %v4633 = vsel %vm72, %v1887, %v4609
  %v4634 = vsel %vm4629, %v4633, %v4612
  %v4635 = vsel %vm4631, %v4634, %v2526
  %v4636 = vsel %vm72, %v2971, %v4616
  %v4637 = vsel %vm4629, %v4636, %v4619
  %v4638 = vsel %vm4631, %v4637, %v3610
  %v4639 = vsel %vm72, %v4055, %v4623
  %v4640 = vsel %vm4629, %v4639, %v4626
  %v4641 = vsel %vm4631, %v4640, %v4599
  %4642 = vst [vmem:[%s7] sm:$0xff] %v4632
  %4643 = vst [vmem:[%s7 + $0x8] sm:$0xff] %v4635
  %4644 = vst [vmem:[%s7 + $0x10] sm:$0xff] %v4638
  %4645 = vst [vmem:[%s7 + $0x18] sm:$0xff] %v4641
  // Predicated region
  $region30: #{recurrent_module_forward.1} parent=0 // pred_check
    _
  $region31: #{recurrent_module_forward.1} parent=0 // pred_check_branch
    %4647 = sbr.rel (0) target = $region33
  $region32: #{recurrent_module_forward.1} parent=0 // pred_region
    _
  $region33: #{recurrent_module_forward.1} parent=0 // pred_fallthru
    _
  // Predicated region
  $region34: #{recurrent_module_forward.1} parent=0 // pred_check
    _
  $region35: #{recurrent_module_forward.1} parent=0 // pred_check_branch
    %4649 = sbr.rel (0) target = $region37
  $region36: #{recurrent_module_forward.1} parent=0 // pred_region
    _
  $region37: #{recurrent_module_forward.1} parent=0 // pred_fallthru
    _

</llo_original>
